<compile_context>
chip_gen: v6e
topology: v6e:2x2x1
jax: 0.10.0
libtpu: 0.0.40
codegen_flags: <defaults>
</compile_context>

<pallas_src>
import functools

import jax
import jax.numpy as jnp
from jax import lax
from jax.experimental import pallas as pl
from jax.experimental.pallas import tpu as pltpu


# ----------------------------------------------------------------------------
# Plain-JAX glue: sampling & grouping (faithful ports of the torch helpers).
# ----------------------------------------------------------------------------
def square_distance(src, dst):
    # src [B,N,C], dst [B,M,C] -> [B,N,M]
    d = -2.0 * jnp.einsum("bnc,bmc->bnm", src, dst)
    d = d + jnp.sum(src**2, -1)[:, :, None]
    d = d + jnp.sum(dst**2, -1)[:, None, :]
    return d


def farthest_point_sample(xyz, npoint, key):
    # TODO(synk): torch uses torch.randint for the FPS seed point; we use a
    # deterministic jax.random key instead (same semantics, fixed seed).
    B, N, _ = xyz.shape
    farthest = jax.random.randint(key, (B,), 0, N, dtype=jnp.int32)
    distance = jnp.full((B, N), 1e10, dtype=xyz.dtype)
    centroids = jnp.zeros((B, npoint), dtype=jnp.int32)

    def body(i, carry):
        centroids, distance, farthest = carry
        centroids = centroids.at[:, i].set(farthest)
        centroid = jnp.take_along_axis(xyz, farthest[:, None, None], axis=1)
        dist = jnp.sum((xyz - centroid) ** 2, -1)
        distance = jnp.minimum(distance, dist)
        farthest = jnp.argmax(distance, -1).astype(jnp.int32)
        return centroids, distance, farthest

    centroids, _, _ = lax.fori_loop(0, npoint, body, (centroids, distance, farthest))
    return centroids


def index_points(points, idx):
    # points [B,N,C], idx [B,...] -> [B,...,C]
    B = points.shape[0]
    C = points.shape[-1]
    flat = idx.reshape(B, -1)
    out = jnp.take_along_axis(points, flat[..., None], axis=1)
    return out.reshape(idx.shape + (C,))


def query_ball_point(radius, nsample, xyz, new_xyz):
    B, N, _ = xyz.shape
    S = new_xyz.shape[1]
    sqrdists = square_distance(new_xyz, xyz)  # [B,S,N]
    group_idx = jnp.broadcast_to(jnp.arange(N, dtype=jnp.int32), (B, S, N))
    group_idx = jnp.where(sqrdists > radius**2, N, group_idx)
    group_idx = jnp.sort(group_idx, axis=-1)[:, :, :nsample]
    group_first = group_idx[:, :, 0:1]
    # the query center itself is always in-radius, so group_first is valid and
    # no out-of-bounds index N survives this replacement.
    group_idx = jnp.where(group_idx == N, group_first, group_idx)
    return group_idx


def sample_and_group(ratio, radius, nsample, xyz, points, key,
                     compute_dtype=jnp.bfloat16):
    """Returns new_xyz (B,S,3) f32, new_points NEIGHBOR-MAJOR (B,NS,S,3+D) bf16,
    identity (B,S,D) bf16."""
    B, N, C = xyz.shape
    S = int(ratio * N)
    fps_idx = farthest_point_sample(xyz, S, key)                # [B,S]
    new_xyz = index_points(xyz, fps_idx)                        # [B,S,3] f32
    points_c = points.astype(compute_dtype)                     # cast once (small)
    identity = index_points(points_c, fps_idx)                  # [B,S,D]  bf16
    idx = query_ball_point(radius, nsample, xyz, new_xyz)       # [B,S,ns]
    # Transpose the (tiny) index tensor, not the gathered data: the gather
    # then emits the neighbor-major layout the kernel wants directly.
    idx_nm = jnp.transpose(idx, (0, 2, 1))                      # [B,ns,S]
    grouped_xyz = index_points(xyz, idx_nm)                     # [B,ns,S,3] f32
    grouped_xyz_norm = (grouped_xyz - new_xyz[:, None, :, :]).astype(compute_dtype)
    grouped_points = index_points(points_c, idx_nm)             # [B,ns,S,D] bf16
    new_points = jnp.concatenate([grouped_xyz_norm, grouped_points], axis=-1)
    return new_xyz, new_points, identity


# ----------------------------------------------------------------------------
# Pallas kernel: per (batch, S-tile):
#   for each neighbor k:  ReLU(gp_k @ w0 + t0) @ w1  ->  running max  (f32 acc)
#   out = ReLU(pooled + identity @ wsk + (t1 + bsk))        (f32 math, bf16 store)
# All matmuls bf16 -> f32 accumulate on the MXU.
# ----------------------------------------------------------------------------
def _sa_kernel(gp_ref, id_ref, w0_ref, t0_ref, w1_ref, wsk_ref, bias_ref,
               out_ref, *, NS):
    TS, Cp = out_ref.shape[1], out_ref.shape[2]
    mid = w0_ref.shape[1]

    w0 = w0_ref[...]                                            # (C0, mid) bf16
    w1 = w1_ref[...]                                            # (mid, Cp) bf16
    # Hoist the bias broadcast out of the (unrolled) neighbor loop — JAX does
    # not CSE broadcast_in_dim, so leaving it inside costs NS broadcasts.
    t0b = jnp.broadcast_to(t0_ref[...], (TS, mid))              # (TS, mid) f32

    def body(k, acc):
        g = gp_ref[0, k]                                        # (TS, C0) bf16
        h = jnp.dot(g, w0, preferred_element_type=jnp.float32)  # (TS, mid) f32
        h = jnp.maximum(h + t0b, 0.0)                           # folded BN bias + ReLU
        y = jnp.dot(h.astype(jnp.bfloat16), w1,
                    preferred_element_type=jnp.float32)         # (TS, Cp) f32
        return jnp.maximum(acc, y)                              # streaming max over NS

    pooled = lax.fori_loop(
        0, NS, body, jnp.full((TS, Cp), -jnp.inf, dtype=jnp.float32), unroll=True)

    skip = jnp.dot(id_ref[0], wsk_ref[...],
                   preferred_element_type=jnp.float32)          # (TS, Cp) f32
    # BN shift of conv[1] and the skip bias commute with the max -> applied
    # once here (bias_ref = t1 + bsk, zero on padded channels).
    out_ref[0] = jnp.maximum(pooled + skip + bias_ref[...], 0.0).astype(out_ref.dtype)


def _pick_tile_s(S, NS, C0, mid, Cp, Cin, budget_bytes=40 << 20):
    """Largest multiple-of-8 S-tile whose per-step VMEM footprint fits the
    budget (budget kept below v7x's 64 MiB physical VMEM)."""
    def step_bytes(ts):
        gp = 2 * NS * ts * C0 * 2          # double-buffered bf16 grouped input
        ident = 2 * ts * Cin * 2           # double-buffered bf16 identity
        out = 2 * ts * Cp * 2              # double-buffered bf16 output
        inter = ts * (mid + 3 * Cp) * 4    # h, y, acc, skip (f32)
        weights = (C0 * mid + (mid + Cin) * Cp) * 2 + (mid + Cp) * 4
        return gp + ident + out + inter + weights

    ts = min(1024, ((S + 7) // 8) * 8)
    ts = max(ts, 8)
    while ts > 8 and step_bytes(ts) > budget_bytes:
        ts -= 8
    return ts


def set_abstraction_forward(position, feature, params, *, stride, radius,
                            nsample, key, out_dtype=jnp.bfloat16):
    B, N, _ = position.shape
    new_xyz, new_points_nm, identity = sample_and_group(
        1.0 / stride, radius, nsample, position, feature, key)
    _, NS, S, C0 = new_points_nm.shape
    Cin = identity.shape[-1]
    mid = params["w0"].shape[1]
    Cout = params["w1"].shape[1]

    LANE = 128
    Cp = ((Cout + LANE - 1) // LANE) * LANE          # lane-dense padded out channels
    padc = Cp - Cout

    # --- fold eval-mode BatchNorm into the weights (exact algebra) ---
    w0f = (params["w0"] * params["s0"]).astype(jnp.bfloat16)                 # (C0, mid)
    t0 = params["t0"].astype(jnp.float32)                                    # (1, mid)
    w1f = jnp.pad(params["w1"] * params["s1"], ((0, 0), (0, padc))).astype(jnp.bfloat16)
    wskp = jnp.pad(params["wsk"], ((0, 0), (0, padc))).astype(jnp.bfloat16)
    biasp = jnp.pad(params["t1"] + params["bsk"], ((0, 0), (0, padc))).astype(jnp.float32)

    # --- S-tiling: second (parallel) grid axis so DMA overlaps MXU work and
    # both v7x TensorCores get work even at B=1. ---
    TS = _pick_tile_s(S, NS, C0, mid, Cp, Cin)
    S_pad = ((S + TS - 1) // TS) * TS
    if S_pad != S:
        new_points_nm = jnp.pad(new_points_nm,
                                ((0, 0), (0, 0), (0, S_pad - S), (0, 0)))
        identity = jnp.pad(identity, ((0, 0), (0, S_pad - S), (0, 0)))

    kernel = functools.partial(_sa_kernel, NS=NS)
    wmap = lambda b, s: (0, 0)   # weights: fetched once, constant block

    # TODO(synk): sweep pipeline_mode=pl.Buffered(3) on the grouped-points spec
    # (and pad C0 up to 128 for lane-dense loads) only if a bundle dump shows
    # exposed DMA / masked-load stalls dominating on v7x.
    out = pl.pallas_call(
        kernel,
        out_shape=jax.ShapeDtypeStruct((B, S_pad, Cp), out_dtype),
        grid_spec=pltpu.PrefetchScalarGridSpec(
            num_scalar_prefetch=0,
            grid=(B, S_pad // TS),
            in_specs=[
                pl.BlockSpec((1, NS, TS, C0), lambda b, s: (b, 0, s, 0)),
                pl.BlockSpec((1, TS, Cin), lambda b, s: (b, s, 0)),
                pl.BlockSpec(w0f.shape, wmap),
                pl.BlockSpec(t0.shape, wmap),
                pl.BlockSpec(w1f.shape, wmap),
                pl.BlockSpec(wskp.shape, wmap),
                pl.BlockSpec(biasp.shape, wmap),
            ],
            out_specs=pl.BlockSpec((1, TS, Cp), lambda b, s: (b, s, 0)),
        ),
        compiler_params=pltpu.CompilerParams(
            dimension_semantics=("parallel", "parallel"),
            vmem_limit_bytes=48 * 1024 * 1024),
    )(new_points_nm, identity, w0f, t0, w1f, wskp, biasp)
    return new_xyz, out[:, :S, :Cout]


# ----------------------------------------------------------------------------
# Deterministic parameter construction (shapes follow SetAbstraction.__init__
# with in_channels, out_channels, layers=2, stride>1, use_res=True,
# norm='bn1d' folded in eval mode).
# ----------------------------------------------------------------------------
def init_params(key, in_channels, out_channels, stride):
    mid = out_channels // 2 if stride > 1 else out_channels
    c0 = in_channels + 3
    eps = 1e-5
    ks = jax.random.split(key, 12)

    def bn_fold(kg, kb, km, kv, c):
        gamma = 1.0 + 0.1 * jax.random.normal(kg, (1, c), jnp.float32)
        beta = 0.1 * jax.random.normal(kb, (1, c), jnp.float32)
        mean = 0.1 * jax.random.normal(km, (1, c), jnp.float32)
        var = 1.0 + 0.1 * jax.random.uniform(kv, (1, c), jnp.float32)
        scale = gamma / jnp.sqrt(var + eps)
        shift = beta - mean * scale
        return scale, shift

    s0, t0 = bn_fold(ks[2], ks[3], ks[4], ks[5], mid)
    s1, t1 = bn_fold(ks[6], ks[7], ks[8], ks[9], out_channels)
    return dict(
        # convs[0]: Linear(c0 -> mid, bias=False) + BN(mid) + ReLU
        w0=0.1 * jax.random.normal(ks[0], (c0, mid), jnp.float32),
        s0=s0, t0=t0,
        # convs[1]: Linear(mid -> out, bias=False) + BN(out), no act (use_res)
        w1=0.1 * jax.random.normal(ks[1], (mid, out_channels), jnp.float32),
        s1=s1, t1=t1,
        # skipconv: Linear(in -> out, bias=True), no norm/act
        wsk=0.1 * jax.random.normal(ks[10], (in_channels, out_channels), jnp.float32),
        bsk=0.1 * jax.random.normal(ks[11], (1, out_channels), jnp.float32),
    )


# Pure-JAX f32 reference of the original (unfolded) module math, on the
# neighbor-major grouped tensor.  Used only to self-check the kernel.
def _reference(new_points_nm, identity, params):
    h = jnp.einsum("bksc,cm->bksm", new_points_nm, params["w0"])
    h = jnp.maximum(h * params["s0"] + params["t0"], 0.0)
    h = jnp.einsum("bksm,mo->bkso", h, params["w1"])
    h = h * params["s1"] + params["t1"]
    h = jnp.max(h, axis=1)                                       # max over nsample
    skip = jnp.einsum("bsc,co->bso", identity, params["wsk"]) + params["bsk"]
    return jnp.maximum(h + skip, 0.0)


if __name__ == "__main__":
    B, N = 2, 64
    in_channels, out_channels = 16, 32
    stride, radius, nsample = 2, 0.3, 16

    root = jax.random.PRNGKey(0)
    k_pos, k_feat, k_params, k_fps = jax.random.split(root, 4)
    position = jax.random.uniform(k_pos, (B, N, 3), jnp.float32)
    feature = jax.random.normal(k_feat, (B, N, in_channels), jnp.float32)
    params = init_params(k_params, in_channels, out_channels, stride)

    new_pos, new_feat = set_abstraction_forward(
        position, feature, params,
        stride=stride, radius=radius, nsample=nsample, key=k_fps)
    jax.block_until_ready(new_feat)

    # self-check: plain-JAX f32 reference of the same forward pass on the same
    # (bf16-gathered, upcast) inputs; kernel uses bf16 matmul inputs and bf16
    # output store with f32 accumulation/epilogue, hence the loose tolerance.
    _, ref_points_nm, ref_identity = sample_and_group(
        1.0 / stride, radius, nsample, position, feature, k_fps)
    ref = _reference(ref_points_nm.astype(jnp.float32),
                     ref_identity.astype(jnp.float32), params)
    assert new_pos.shape == (B, N // stride, 3)
    assert new_feat.shape == (B, N // stride, out_channels)
    assert jnp.allclose(new_feat.astype(jnp.float32), ref, atol=4e-2, rtol=4e-2)

    print("KERNEL_OK")
</pallas_src>

<mosaic_0001>
module attributes {stable_mosaic.version = 11 : i64} {
  func.func @_sa_kernel(%arg0: i32, %arg1: i32, %arg2: memref<1x16x32x19xbf16, #tpu.memory_space<vmem>>, %arg3: memref<1x32x16xbf16, #tpu.memory_space<vmem>>, %arg4: memref<19x16xbf16, #tpu.memory_space<vmem>>, %arg5: memref<1x16xf32, #tpu.memory_space<vmem>>, %arg6: memref<16x128xbf16, #tpu.memory_space<vmem>>, %arg7: memref<16x128xbf16, #tpu.memory_space<vmem>>, %arg8: memref<1x128xf32, #tpu.memory_space<vmem>>, %arg9: memref<1x32x128xbf16, #tpu.memory_space<vmem>>) attributes {dimension_semantics = [#tpu.dimension_semantics<parallel>, #tpu.dimension_semantics<parallel>], iteration_bounds = array<i64: 2, 1>, scalar_prefetch = 0 : i64, scratch_operands = 0 : i64, tpu.core_type = #tpu.core_type<tc>, window_params = [{transform_indices = @transform_0, window_bounds = array<i64: 1, 16, 32, 19>}, {transform_indices = @transform_1, window_bounds = array<i64: 1, 32, 16>}, {pipeline_mode = #tpu.pipeline_mode<synchronous>, transform_indices = @transform_2, window_bounds = array<i64: 19, 16>}, {pipeline_mode = #tpu.pipeline_mode<synchronous>, transform_indices = @transform_3, window_bounds = array<i64: 1, 16>}, {pipeline_mode = #tpu.pipeline_mode<synchronous>, transform_indices = @transform_4, window_bounds = array<i64: 16, 128>}, {pipeline_mode = #tpu.pipeline_mode<synchronous>, transform_indices = @transform_5, window_bounds = array<i64: 16, 128>}, {pipeline_mode = #tpu.pipeline_mode<synchronous>, transform_indices = @transform_6, window_bounds = array<i64: 1, 128>}, {transform_indices = @transform_7, window_bounds = array<i64: 1, 32, 128>}]} {
    %c0 = arith.constant 0 : index
    %c0_0 = arith.constant 0 : index
    %0 = vector.load %arg4[%c0, %c0_0] : memref<19x16xbf16, #tpu.memory_space<vmem>>, vector<19x16xbf16>
    %c0_1 = arith.constant 0 : index
    %c0_2 = arith.constant 0 : index
    %1 = vector.load %arg6[%c0_1, %c0_2] : memref<16x128xbf16, #tpu.memory_space<vmem>>, vector<16x128xbf16>
    %c0_3 = arith.constant 0 : index
    %c0_4 = arith.constant 0 : index
    %2 = vector.load %arg5[%c0_3, %c0_4] : memref<1x16xf32, #tpu.memory_space<vmem>>, vector<1x16xf32>
    %3 = vector.shape_cast %2 : vector<1x16xf32> to vector<1x16xf32>
    %4 = vector.broadcast %3 : vector<1x16xf32> to vector<32x16xf32>
    %cst = arith.constant 0xFF800000 : f32
    %5 = vector.broadcast %cst : f32 to vector<32x128xf32>
    %c0_i32 = arith.constant 0 : i32
    %c0_5 = arith.constant 0 : index
    %6 = arith.index_cast %c0_i32 : i32 to index
    %c0_6 = arith.constant 0 : index
    %c0_7 = arith.constant 0 : index
    %7 = vector.load %arg2[%c0_5, %6, %c0_6, %c0_7] : memref<1x16x32x19xbf16, #tpu.memory_space<vmem>>, vector<1x1x32x19xbf16>
    %8 = vector.shape_cast %7 : vector<1x1x32x19xbf16> to vector<32x19xbf16>
    %cst_8 = arith.constant dense<0.000000e+00> : vector<32x16xf32>
    %9 = tpu.matmul %8, %0, %cst_8 {dimension_numbers = #tpu.dot_dimension_numbers<[1], [0], [0], [1], [0, 0, 1, 1], [], []>} : vector<32x19xbf16>, vector<19x16xbf16>, vector<32x16xf32> -> vector<32x16xf32>
    %10 = arith.addf %9, %4 : vector<32x16xf32>
    %cst_9 = arith.constant 0.000000e+00 : f32
    %11 = vector.broadcast %cst_9 : f32 to vector<32x16xf32>
    %12 = arith.maximumf %10, %11 : vector<32x16xf32>
    %13 = arith.truncf %12 : vector<32x16xf32> to vector<32x16xbf16>
    %cst_10 = arith.constant dense<0.000000e+00> : vector<32x128xf32>
    %14 = tpu.matmul %13, %1, %cst_10 {dimension_numbers = #tpu.dot_dimension_numbers<[1], [0], [0], [1], [0, 0, 1, 1], [], []>} : vector<32x16xbf16>, vector<16x128xbf16>, vector<32x128xf32> -> vector<32x128xf32>
    %15 = arith.maximumf %5, %14 : vector<32x128xf32>
    %c1_i32 = arith.constant 1 : i32
    %c0_11 = arith.constant 0 : index
    %16 = arith.index_cast %c1_i32 : i32 to index
    %c0_12 = arith.constant 0 : index
    %c0_13 = arith.constant 0 : index
    %17 = vector.load %arg2[%c0_11, %16, %c0_12, %c0_13] : memref<1x16x32x19xbf16, #tpu.memory_space<vmem>>, vector<1x1x32x19xbf16>
    %18 = vector.shape_cast %17 : vector<1x1x32x19xbf16> to vector<32x19xbf16>
    %cst_14 = arith.constant dense<0.000000e+00> : vector<32x16xf32>
    %19 = tpu.matmul %18, %0, %cst_14 {dimension_numbers = #tpu.dot_dimension_numbers<[1], [0], [0], [1], [0, 0, 1, 1], [], []>} : vector<32x19xbf16>, vector<19x16xbf16>, vector<32x16xf32> -> vector<32x16xf32>
    %20 = arith.addf %19, %4 : vector<32x16xf32>
    %cst_15 = arith.constant 0.000000e+00 : f32
    %21 = vector.broadcast %cst_15 : f32 to vector<32x16xf32>
    %22 = arith.maximumf %20, %21 : vector<32x16xf32>
    %23 = arith.truncf %22 : vector<32x16xf32> to vector<32x16xbf16>
    %cst_16 = arith.constant dense<0.000000e+00> : vector<32x128xf32>
    %24 = tpu.matmul %23, %1, %cst_16 {dimension_numbers = #tpu.dot_dimension_numbers<[1], [0], [0], [1], [0, 0, 1, 1], [], []>} : vector<32x16xbf16>, vector<16x128xbf16>, vector<32x128xf32> -> vector<32x128xf32>
    %25 = arith.maximumf %15, %24 : vector<32x128xf32>
    %c2_i32 = arith.constant 2 : i32
    %c0_17 = arith.constant 0 : index
    %26 = arith.index_cast %c2_i32 : i32 to index
    %c0_18 = arith.constant 0 : index
    %c0_19 = arith.constant 0 : index
    %27 = vector.load %arg2[%c0_17, %26, %c0_18, %c0_19] : memref<1x16x32x19xbf16, #tpu.memory_space<vmem>>, vector<1x1x32x19xbf16>
    %28 = vector.shape_cast %27 : vector<1x1x32x19xbf16> to vector<32x19xbf16>
    %cst_20 = arith.constant dense<0.000000e+00> : vector<32x16xf32>
    %29 = tpu.matmul %28, %0, %cst_20 {dimension_numbers = #tpu.dot_dimension_numbers<[1], [0], [0], [1], [0, 0, 1, 1], [], []>} : vector<32x19xbf16>, vector<19x16xbf16>, vector<32x16xf32> -> vector<32x16xf32>
    %30 = arith.addf %29, %4 : vector<32x16xf32>
    %cst_21 = arith.constant 0.000000e+00 : f32
    %31 = vector.broadcast %cst_21 : f32 to vector<32x16xf32>
    %32 = arith.maximumf %30, %31 : vector<32x16xf32>
    %33 = arith.truncf %32 : vector<32x16xf32> to vector<32x16xbf16>
    %cst_22 = arith.constant dense<0.000000e+00> : vector<32x128xf32>
    %34 = tpu.matmul %33, %1, %cst_22 {dimension_numbers = #tpu.dot_dimension_numbers<[1], [0], [0], [1], [0, 0, 1, 1], [], []>} : vector<32x16xbf16>, vector<16x128xbf16>, vector<32x128xf32> -> vector<32x128xf32>
    %35 = arith.maximumf %25, %34 : vector<32x128xf32>
    %c3_i32 = arith.constant 3 : i32
    %c0_23 = arith.constant 0 : index
    %36 = arith.index_cast %c3_i32 : i32 to index
    %c0_24 = arith.constant 0 : index
    %c0_25 = arith.constant 0 : index
    %37 = vector.load %arg2[%c0_23, %36, %c0_24, %c0_25] : memref<1x16x32x19xbf16, #tpu.memory_space<vmem>>, vector<1x1x32x19xbf16>
    %38 = vector.shape_cast %37 : vector<1x1x32x19xbf16> to vector<32x19xbf16>
    %cst_26 = arith.constant dense<0.000000e+00> : vector<32x16xf32>
    %39 = tpu.matmul %38, %0, %cst_26 {dimension_numbers = #tpu.dot_dimension_numbers<[1], [0], [0], [1], [0, 0, 1, 1], [], []>} : vector<32x19xbf16>, vector<19x16xbf16>, vector<32x16xf32> -> vector<32x16xf32>
    %40 = arith.addf %39, %4 : vector<32x16xf32>
    %cst_27 = arith.constant 0.000000e+00 : f32
    %41 = vector.broadcast %cst_27 : f32 to vector<32x16xf32>
    %42 = arith.maximumf %40, %41 : vector<32x16xf32>
    %43 = arith.truncf %42 : vector<32x16xf32> to vector<32x16xbf16>
    %cst_28 = arith.constant dense<0.000000e+00> : vector<32x128xf32>
    %44 = tpu.matmul %43, %1, %cst_28 {dimension_numbers = #tpu.dot_dimension_numbers<[1], [0], [0], [1], [0, 0, 1, 1], [], []>} : vector<32x16xbf16>, vector<16x128xbf16>, vector<32x128xf32> -> vector<32x128xf32>
    %45 = arith.maximumf %35, %44 : vector<32x128xf32>
    %c4_i32 = arith.constant 4 : i32
    %c0_29 = arith.constant 0 : index
    %46 = arith.index_cast %c4_i32 : i32 to index
    %c0_30 = arith.constant 0 : index
    %c0_31 = arith.constant 0 : index
    %47 = vector.load %arg2[%c0_29, %46, %c0_30, %c0_31] : memref<1x16x32x19xbf16, #tpu.memory_space<vmem>>, vector<1x1x32x19xbf16>
    %48 = vector.shape_cast %47 : vector<1x1x32x19xbf16> to vector<32x19xbf16>
    %cst_32 = arith.constant dense<0.000000e+00> : vector<32x16xf32>
    %49 = tpu.matmul %48, %0, %cst_32 {dimension_numbers = #tpu.dot_dimension_numbers<[1], [0], [0], [1], [0, 0, 1, 1], [], []>} : vector<32x19xbf16>, vector<19x16xbf16>, vector<32x16xf32> -> vector<32x16xf32>
    %50 = arith.addf %49, %4 : vector<32x16xf32>
    %cst_33 = arith.constant 0.000000e+00 : f32
    %51 = vector.broadcast %cst_33 : f32 to vector<32x16xf32>
    %52 = arith.maximumf %50, %51 : vector<32x16xf32>
    %53 = arith.truncf %52 : vector<32x16xf32> to vector<32x16xbf16>
    %cst_34 = arith.constant dense<0.000000e+00> : vector<32x128xf32>
    %54 = tpu.matmul %53, %1, %cst_34 {dimension_numbers = #tpu.dot_dimension_numbers<[1], [0], [0], [1], [0, 0, 1, 1], [], []>} : vector<32x16xbf16>, vector<16x128xbf16>, vector<32x128xf32> -> vector<32x128xf32>
    %55 = arith.maximumf %45, %54 : vector<32x128xf32>
    %c5_i32 = arith.constant 5 : i32
    %c0_35 = arith.constant 0 : index
    %56 = arith.index_cast %c5_i32 : i32 to index
    %c0_36 = arith.constant 0 : index
    %c0_37 = arith.constant 0 : index
    %57 = vector.load %arg2[%c0_35, %56, %c0_36, %c0_37] : memref<1x16x32x19xbf16, #tpu.memory_space<vmem>>, vector<1x1x32x19xbf16>
    %58 = vector.shape_cast %57 : vector<1x1x32x19xbf16> to vector<32x19xbf16>
    %cst_38 = arith.constant dense<0.000000e+00> : vector<32x16xf32>
    %59 = tpu.matmul %58, %0, %cst_38 {dimension_numbers = #tpu.dot_dimension_numbers<[1], [0], [0], [1], [0, 0, 1, 1], [], []>} : vector<32x19xbf16>, vector<19x16xbf16>, vector<32x16xf32> -> vector<32x16xf32>
    %60 = arith.addf %59, %4 : vector<32x16xf32>
    %cst_39 = arith.constant 0.000000e+00 : f32
    %61 = vector.broadcast %cst_39 : f32 to vector<32x16xf32>
    %62 = arith.maximumf %60, %61 : vector<32x16xf32>
    %63 = arith.truncf %62 : vector<32x16xf32> to vector<32x16xbf16>
    %cst_40 = arith.constant dense<0.000000e+00> : vector<32x128xf32>
    %64 = tpu.matmul %63, %1, %cst_40 {dimension_numbers = #tpu.dot_dimension_numbers<[1], [0], [0], [1], [0, 0, 1, 1], [], []>} : vector<32x16xbf16>, vector<16x128xbf16>, vector<32x128xf32> -> vector<32x128xf32>
    %65 = arith.maximumf %55, %64 : vector<32x128xf32>
    %c6_i32 = arith.constant 6 : i32
    %c0_41 = arith.constant 0 : index
    %66 = arith.index_cast %c6_i32 : i32 to index
    %c0_42 = arith.constant 0 : index
    %c0_43 = arith.constant 0 : index
    %67 = vector.load %arg2[%c0_41, %66, %c0_42, %c0_43] : memref<1x16x32x19xbf16, #tpu.memory_space<vmem>>, vector<1x1x32x19xbf16>
    %68 = vector.shape_cast %67 : vector<1x1x32x19xbf16> to vector<32x19xbf16>
    %cst_44 = arith.constant dense<0.000000e+00> : vector<32x16xf32>
    %69 = tpu.matmul %68, %0, %cst_44 {dimension_numbers = #tpu.dot_dimension_numbers<[1], [0], [0], [1], [0, 0, 1, 1], [], []>} : vector<32x19xbf16>, vector<19x16xbf16>, vector<32x16xf32> -> vector<32x16xf32>
    %70 = arith.addf %69, %4 : vector<32x16xf32>
    %cst_45 = arith.constant 0.000000e+00 : f32
    %71 = vector.broadcast %cst_45 : f32 to vector<32x16xf32>
    %72 = arith.maximumf %70, %71 : vector<32x16xf32>
    %73 = arith.truncf %72 : vector<32x16xf32> to vector<32x16xbf16>
    %cst_46 = arith.constant dense<0.000000e+00> : vector<32x128xf32>
    %74 = tpu.matmul %73, %1, %cst_46 {dimension_numbers = #tpu.dot_dimension_numbers<[1], [0], [0], [1], [0, 0, 1, 1], [], []>} : vector<32x16xbf16>, vector<16x128xbf16>, vector<32x128xf32> -> vector<32x128xf32>
    %75 = arith.maximumf %65, %74 : vector<32x128xf32>
    %c7_i32 = arith.constant 7 : i32
    %c0_47 = arith.constant 0 : index
    %76 = arith.index_cast %c7_i32 : i32 to index
    %c0_48 = arith.constant 0 : index
    %c0_49 = arith.constant 0 : index
    %77 = vector.load %arg2[%c0_47, %76, %c0_48, %c0_49] : memref<1x16x32x19xbf16, #tpu.memory_space<vmem>>, vector<1x1x32x19xbf16>
    %78 = vector.shape_cast %77 : vector<1x1x32x19xbf16> to vector<32x19xbf16>
    %cst_50 = arith.constant dense<0.000000e+00> : vector<32x16xf32>
    %79 = tpu.matmul %78, %0, %cst_50 {dimension_numbers = #tpu.dot_dimension_numbers<[1], [0], [0], [1], [0, 0, 1, 1], [], []>} : vector<32x19xbf16>, vector<19x16xbf16>, vector<32x16xf32> -> vector<32x16xf32>
    %80 = arith.addf %79, %4 : vector<32x16xf32>
    %cst_51 = arith.constant 0.000000e+00 : f32
    %81 = vector.broadcast %cst_51 : f32 to vector<32x16xf32>
    %82 = arith.maximumf %80, %81 : vector<32x16xf32>
    %83 = arith.truncf %82 : vector<32x16xf32> to vector<32x16xbf16>
    %cst_52 = arith.constant dense<0.000000e+00> : vector<32x128xf32>
    %84 = tpu.matmul %83, %1, %cst_52 {dimension_numbers = #tpu.dot_dimension_numbers<[1], [0], [0], [1], [0, 0, 1, 1], [], []>} : vector<32x16xbf16>, vector<16x128xbf16>, vector<32x128xf32> -> vector<32x128xf32>
    %85 = arith.maximumf %75, %84 : vector<32x128xf32>
    %c8_i32 = arith.constant 8 : i32
    %c0_53 = arith.constant 0 : index
    %86 = arith.index_cast %c8_i32 : i32 to index
    %c0_54 = arith.constant 0 : index
    %c0_55 = arith.constant 0 : index
    %87 = vector.load %arg2[%c0_53, %86, %c0_54, %c0_55] : memref<1x16x32x19xbf16, #tpu.memory_space<vmem>>, vector<1x1x32x19xbf16>
    %88 = vector.shape_cast %87 : vector<1x1x32x19xbf16> to vector<32x19xbf16>
    %cst_56 = arith.constant dense<0.000000e+00> : vector<32x16xf32>
    %89 = tpu.matmul %88, %0, %cst_56 {dimension_numbers = #tpu.dot_dimension_numbers<[1], [0], [0], [1], [0, 0, 1, 1], [], []>} : vector<32x19xbf16>, vector<19x16xbf16>, vector<32x16xf32> -> vector<32x16xf32>
    %90 = arith.addf %89, %4 : vector<32x16xf32>
    %cst_57 = arith.constant 0.000000e+00 : f32
    %91 = vector.broadcast %cst_57 : f32 to vector<32x16xf32>
    %92 = arith.maximumf %90, %91 : vector<32x16xf32>
    %93 = arith.truncf %92 : vector<32x16xf32> to vector<32x16xbf16>
    %cst_58 = arith.constant dense<0.000000e+00> : vector<32x128xf32>
    %94 = tpu.matmul %93, %1, %cst_58 {dimension_numbers = #tpu.dot_dimension_numbers<[1], [0], [0], [1], [0, 0, 1, 1], [], []>} : vector<32x16xbf16>, vector<16x128xbf16>, vector<32x128xf32> -> vector<32x128xf32>
    %95 = arith.maximumf %85, %94 : vector<32x128xf32>
    %c9_i32 = arith.constant 9 : i32
    %c0_59 = arith.constant 0 : index
    %96 = arith.index_cast %c9_i32 : i32 to index
    %c0_60 = arith.constant 0 : index
    %c0_61 = arith.constant 0 : index
    %97 = vector.load %arg2[%c0_59, %96, %c0_60, %c0_61] : memref<1x16x32x19xbf16, #tpu.memory_space<vmem>>, vector<1x1x32x19xbf16>
    %98 = vector.shape_cast %97 : vector<1x1x32x19xbf16> to vector<32x19xbf16>
    %cst_62 = arith.constant dense<0.000000e+00> : vector<32x16xf32>
    %99 = tpu.matmul %98, %0, %cst_62 {dimension_numbers = #tpu.dot_dimension_numbers<[1], [0], [0], [1], [0, 0, 1, 1], [], []>} : vector<32x19xbf16>, vector<19x16xbf16>, vector<32x16xf32> -> vector<32x16xf32>
    %100 = arith.addf %99, %4 : vector<32x16xf32>
    %cst_63 = arith.constant 0.000000e+00 : f32
    %101 = vector.broadcast %cst_63 : f32 to vector<32x16xf32>
    %102 = arith.maximumf %100, %101 : vector<32x16xf32>
    %103 = arith.truncf %102 : vector<32x16xf32> to vector<32x16xbf16>
    %cst_64 = arith.constant dense<0.000000e+00> : vector<32x128xf32>
    %104 = tpu.matmul %103, %1, %cst_64 {dimension_numbers = #tpu.dot_dimension_numbers<[1], [0], [0], [1], [0, 0, 1, 1], [], []>} : vector<32x16xbf16>, vector<16x128xbf16>, vector<32x128xf32> -> vector<32x128xf32>
    %105 = arith.maximumf %95, %104 : vector<32x128xf32>
    %c10_i32 = arith.constant 10 : i32
    %c0_65 = arith.constant 0 : index
    %106 = arith.index_cast %c10_i32 : i32 to index
    %c0_66 = arith.constant 0 : index
    %c0_67 = arith.constant 0 : index
    %107 = vector.load %arg2[%c0_65, %106, %c0_66, %c0_67] : memref<1x16x32x19xbf16, #tpu.memory_space<vmem>>, vector<1x1x32x19xbf16>
    %108 = vector.shape_cast %107 : vector<1x1x32x19xbf16> to vector<32x19xbf16>
    %cst_68 = arith.constant dense<0.000000e+00> : vector<32x16xf32>
    %109 = tpu.matmul %108, %0, %cst_68 {dimension_numbers = #tpu.dot_dimension_numbers<[1], [0], [0], [1], [0, 0, 1, 1], [], []>} : vector<32x19xbf16>, vector<19x16xbf16>, vector<32x16xf32> -> vector<32x16xf32>
    %110 = arith.addf %109, %4 : vector<32x16xf32>
    %cst_69 = arith.constant 0.000000e+00 : f32
    %111 = vector.broadcast %cst_69 : f32 to vector<32x16xf32>
    %112 = arith.maximumf %110, %111 : vector<32x16xf32>
    %113 = arith.truncf %112 : vector<32x16xf32> to vector<32x16xbf16>
    %cst_70 = arith.constant dense<0.000000e+00> : vector<32x128xf32>
    %114 = tpu.matmul %113, %1, %cst_70 {dimension_numbers = #tpu.dot_dimension_numbers<[1], [0], [0], [1], [0, 0, 1, 1], [], []>} : vector<32x16xbf16>, vector<16x128xbf16>, vector<32x128xf32> -> vector<32x128xf32>
    %115 = arith.maximumf %105, %114 : vector<32x128xf32>
    %c11_i32 = arith.constant 11 : i32
    %c0_71 = arith.constant 0 : index
    %116 = arith.index_cast %c11_i32 : i32 to index
    %c0_72 = arith.constant 0 : index
    %c0_73 = arith.constant 0 : index
    %117 = vector.load %arg2[%c0_71, %116, %c0_72, %c0_73] : memref<1x16x32x19xbf16, #tpu.memory_space<vmem>>, vector<1x1x32x19xbf16>
    %118 = vector.shape_cast %117 : vector<1x1x32x19xbf16> to vector<32x19xbf16>
    %cst_74 = arith.constant dense<0.000000e+00> : vector<32x16xf32>
    %119 = tpu.matmul %118, %0, %cst_74 {dimension_numbers = #tpu.dot_dimension_numbers<[1], [0], [0], [1], [0, 0, 1, 1], [], []>} : vector<32x19xbf16>, vector<19x16xbf16>, vector<32x16xf32> -> vector<32x16xf32>
    %120 = arith.addf %119, %4 : vector<32x16xf32>
    %cst_75 = arith.constant 0.000000e+00 : f32
    %121 = vector.broadcast %cst_75 : f32 to vector<32x16xf32>
    %122 = arith.maximumf %120, %121 : vector<32x16xf32>
    %123 = arith.truncf %122 : vector<32x16xf32> to vector<32x16xbf16>
    %cst_76 = arith.constant dense<0.000000e+00> : vector<32x128xf32>
    %124 = tpu.matmul %123, %1, %cst_76 {dimension_numbers = #tpu.dot_dimension_numbers<[1], [0], [0], [1], [0, 0, 1, 1], [], []>} : vector<32x16xbf16>, vector<16x128xbf16>, vector<32x128xf32> -> vector<32x128xf32>
    %125 = arith.maximumf %115, %124 : vector<32x128xf32>
    %c12_i32 = arith.constant 12 : i32
    %c0_77 = arith.constant 0 : index
    %126 = arith.index_cast %c12_i32 : i32 to index
    %c0_78 = arith.constant 0 : index
    %c0_79 = arith.constant 0 : index
    %127 = vector.load %arg2[%c0_77, %126, %c0_78, %c0_79] : memref<1x16x32x19xbf16, #tpu.memory_space<vmem>>, vector<1x1x32x19xbf16>
    %128 = vector.shape_cast %127 : vector<1x1x32x19xbf16> to vector<32x19xbf16>
    %cst_80 = arith.constant dense<0.000000e+00> : vector<32x16xf32>
    %129 = tpu.matmul %128, %0, %cst_80 {dimension_numbers = #tpu.dot_dimension_numbers<[1], [0], [0], [1], [0, 0, 1, 1], [], []>} : vector<32x19xbf16>, vector<19x16xbf16>, vector<32x16xf32> -> vector<32x16xf32>
    %130 = arith.addf %129, %4 : vector<32x16xf32>
    %cst_81 = arith.constant 0.000000e+00 : f32
    %131 = vector.broadcast %cst_81 : f32 to vector<32x16xf32>
    %132 = arith.maximumf %130, %131 : vector<32x16xf32>
    %133 = arith.truncf %132 : vector<32x16xf32> to vector<32x16xbf16>
    %cst_82 = arith.constant dense<0.000000e+00> : vector<32x128xf32>
    %134 = tpu.matmul %133, %1, %cst_82 {dimension_numbers = #tpu.dot_dimension_numbers<[1], [0], [0], [1], [0, 0, 1, 1], [], []>} : vector<32x16xbf16>, vector<16x128xbf16>, vector<32x128xf32> -> vector<32x128xf32>
    %135 = arith.maximumf %125, %134 : vector<32x128xf32>
    %c13_i32 = arith.constant 13 : i32
    %c0_83 = arith.constant 0 : index
    %136 = arith.index_cast %c13_i32 : i32 to index
    %c0_84 = arith.constant 0 : index
    %c0_85 = arith.constant 0 : index
    %137 = vector.load %arg2[%c0_83, %136, %c0_84, %c0_85] : memref<1x16x32x19xbf16, #tpu.memory_space<vmem>>, vector<1x1x32x19xbf16>
    %138 = vector.shape_cast %137 : vector<1x1x32x19xbf16> to vector<32x19xbf16>
    %cst_86 = arith.constant dense<0.000000e+00> : vector<32x16xf32>
    %139 = tpu.matmul %138, %0, %cst_86 {dimension_numbers = #tpu.dot_dimension_numbers<[1], [0], [0], [1], [0, 0, 1, 1], [], []>} : vector<32x19xbf16>, vector<19x16xbf16>, vector<32x16xf32> -> vector<32x16xf32>
    %140 = arith.addf %139, %4 : vector<32x16xf32>
    %cst_87 = arith.constant 0.000000e+00 : f32
    %141 = vector.broadcast %cst_87 : f32 to vector<32x16xf32>
    %142 = arith.maximumf %140, %141 : vector<32x16xf32>
    %143 = arith.truncf %142 : vector<32x16xf32> to vector<32x16xbf16>
    %cst_88 = arith.constant dense<0.000000e+00> : vector<32x128xf32>
    %144 = tpu.matmul %143, %1, %cst_88 {dimension_numbers = #tpu.dot_dimension_numbers<[1], [0], [0], [1], [0, 0, 1, 1], [], []>} : vector<32x16xbf16>, vector<16x128xbf16>, vector<32x128xf32> -> vector<32x128xf32>
    %145 = arith.maximumf %135, %144 : vector<32x128xf32>
    %c14_i32 = arith.constant 14 : i32
    %c0_89 = arith.constant 0 : index
    %146 = arith.index_cast %c14_i32 : i32 to index
    %c0_90 = arith.constant 0 : index
    %c0_91 = arith.constant 0 : index
    %147 = vector.load %arg2[%c0_89, %146, %c0_90, %c0_91] : memref<1x16x32x19xbf16, #tpu.memory_space<vmem>>, vector<1x1x32x19xbf16>
    %148 = vector.shape_cast %147 : vector<1x1x32x19xbf16> to vector<32x19xbf16>
    %cst_92 = arith.constant dense<0.000000e+00> : vector<32x16xf32>
    %149 = tpu.matmul %148, %0, %cst_92 {dimension_numbers = #tpu.dot_dimension_numbers<[1], [0], [0], [1], [0, 0, 1, 1], [], []>} : vector<32x19xbf16>, vector<19x16xbf16>, vector<32x16xf32> -> vector<32x16xf32>
    %150 = arith.addf %149, %4 : vector<32x16xf32>
    %cst_93 = arith.constant 0.000000e+00 : f32
    %151 = vector.broadcast %cst_93 : f32 to vector<32x16xf32>
    %152 = arith.maximumf %150, %151 : vector<32x16xf32>
    %153 = arith.truncf %152 : vector<32x16xf32> to vector<32x16xbf16>
    %cst_94 = arith.constant dense<0.000000e+00> : vector<32x128xf32>
    %154 = tpu.matmul %153, %1, %cst_94 {dimension_numbers = #tpu.dot_dimension_numbers<[1], [0], [0], [1], [0, 0, 1, 1], [], []>} : vector<32x16xbf16>, vector<16x128xbf16>, vector<32x128xf32> -> vector<32x128xf32>
    %155 = arith.maximumf %145, %154 : vector<32x128xf32>
    %c15_i32 = arith.constant 15 : i32
    %c0_95 = arith.constant 0 : index
    %156 = arith.index_cast %c15_i32 : i32 to index
    %c0_96 = arith.constant 0 : index
    %c0_97 = arith.constant 0 : index
    %157 = vector.load %arg2[%c0_95, %156, %c0_96, %c0_97] : memref<1x16x32x19xbf16, #tpu.memory_space<vmem>>, vector<1x1x32x19xbf16>
    %158 = vector.shape_cast %157 : vector<1x1x32x19xbf16> to vector<32x19xbf16>
    %cst_98 = arith.constant dense<0.000000e+00> : vector<32x16xf32>
    %159 = tpu.matmul %158, %0, %cst_98 {dimension_numbers = #tpu.dot_dimension_numbers<[1], [0], [0], [1], [0, 0, 1, 1], [], []>} : vector<32x19xbf16>, vector<19x16xbf16>, vector<32x16xf32> -> vector<32x16xf32>
    %160 = arith.addf %159, %4 : vector<32x16xf32>
    %cst_99 = arith.constant 0.000000e+00 : f32
    %161 = vector.broadcast %cst_99 : f32 to vector<32x16xf32>
    %162 = arith.maximumf %160, %161 : vector<32x16xf32>
    %163 = arith.truncf %162 : vector<32x16xf32> to vector<32x16xbf16>
    %cst_100 = arith.constant dense<0.000000e+00> : vector<32x128xf32>
    %164 = tpu.matmul %163, %1, %cst_100 {dimension_numbers = #tpu.dot_dimension_numbers<[1], [0], [0], [1], [0, 0, 1, 1], [], []>} : vector<32x16xbf16>, vector<16x128xbf16>, vector<32x128xf32> -> vector<32x128xf32>
    %165 = arith.maximumf %155, %164 : vector<32x128xf32>
    %c16_i32 = arith.constant 16 : i32
    %c0_101 = arith.constant 0 : index
    %c0_102 = arith.constant 0 : index
    %c0_103 = arith.constant 0 : index
    %166 = vector.load %arg3[%c0_101, %c0_102, %c0_103] : memref<1x32x16xbf16, #tpu.memory_space<vmem>>, vector<1x32x16xbf16>
    %167 = vector.shape_cast %166 : vector<1x32x16xbf16> to vector<32x16xbf16>
    %c0_104 = arith.constant 0 : index
    %c0_105 = arith.constant 0 : index
    %168 = vector.load %arg7[%c0_104, %c0_105] : memref<16x128xbf16, #tpu.memory_space<vmem>>, vector<16x128xbf16>
    %cst_106 = arith.constant dense<0.000000e+00> : vector<32x128xf32>
    %169 = tpu.matmul %167, %168, %cst_106 {dimension_numbers = #tpu.dot_dimension_numbers<[1], [0], [0], [1], [0, 0, 1, 1], [], []>} : vector<32x16xbf16>, vector<16x128xbf16>, vector<32x128xf32> -> vector<32x128xf32>
    %170 = arith.addf %165, %169 : vector<32x128xf32>
    %c0_107 = arith.constant 0 : index
    %c0_108 = arith.constant 0 : index
    %171 = vector.load %arg8[%c0_107, %c0_108] : memref<1x128xf32, #tpu.memory_space<vmem>>, vector<1x128xf32>
    %172 = vector.broadcast %171 : vector<1x128xf32> to vector<32x128xf32>
    %173 = arith.addf %170, %172 : vector<32x128xf32>
    %cst_109 = arith.constant 0.000000e+00 : f32
    %174 = vector.broadcast %cst_109 : f32 to vector<32x128xf32>
    %175 = arith.maximumf %173, %174 : vector<32x128xf32>
    %176 = arith.truncf %175 : vector<32x128xf32> to vector<32x128xbf16>
    %c0_110 = arith.constant 0 : index
    %c0_111 = arith.constant 0 : index
    %c0_112 = arith.constant 0 : index
    %177 = vector.load %arg9[%c0_110, %c0_111, %c0_112] : memref<1x32x128xbf16, #tpu.memory_space<vmem>>, vector<1x32x128xbf16>
    %178 = vector.shape_cast %177 : vector<1x32x128xbf16> to vector<32x128xbf16>
    %179 = vector.shape_cast %176 : vector<32x128xbf16> to vector<1x32x128xbf16>
    tpu.vector_store %arg9[%c0_110, %c0_111, %c0_112], %179 {strides = array<i32>} : memref<1x32x128xbf16, #tpu.memory_space<vmem>>, vector<1x32x128xbf16>,
    return
  }
  func.func @transform_0(%arg0: i32, %arg1: i32) -> (i32, i32, i32, i32) {
    %c0_i32 = arith.constant 0 : i32
    %c0_i32_0 = arith.constant 0 : i32
    %c0_i32_1 = arith.constant 0 : i32
    return %arg0, %c0_i32, %arg1, %c0_i32_0 : i32, i32, i32, i32
  }
  func.func @transform_1(%arg0: i32, %arg1: i32) -> (i32, i32, i32) {
    %c0_i32 = arith.constant 0 : i32
    %c0_i32_0 = arith.constant 0 : i32
    return %arg0, %arg1, %c0_i32 : i32, i32, i32
  }
  func.func @transform_2(%arg0: i32, %arg1: i32) -> (i32, i32) {
    %c0_i32 = arith.constant 0 : i32
    %c0_i32_0 = arith.constant 0 : i32
    %c0_i32_1 = arith.constant 0 : i32
    return %c0_i32, %c0_i32_0 : i32, i32
  }
  func.func @transform_3(%arg0: i32, %arg1: i32) -> (i32, i32) {
    %c0_i32 = arith.constant 0 : i32
    %c0_i32_0 = arith.constant 0 : i32
    %c0_i32_1 = arith.constant 0 : i32
    return %c0_i32, %c0_i32_0 : i32, i32
  }
  func.func @transform_4(%arg0: i32, %arg1: i32) -> (i32, i32) {
    %c0_i32 = arith.constant 0 : i32
    %c0_i32_0 = arith.constant 0 : i32
    %c0_i32_1 = arith.constant 0 : i32
    return %c0_i32, %c0_i32_0 : i32, i32
  }
  func.func @transform_5(%arg0: i32, %arg1: i32) -> (i32, i32) {
    %c0_i32 = arith.constant 0 : i32
    %c0_i32_0 = arith.constant 0 : i32
    %c0_i32_1 = arith.constant 0 : i32
    return %c0_i32, %c0_i32_0 : i32, i32
  }
  func.func @transform_6(%arg0: i32, %arg1: i32) -> (i32, i32) {
    %c0_i32 = arith.constant 0 : i32
    %c0_i32_0 = arith.constant 0 : i32
    %c0_i32_1 = arith.constant 0 : i32
    return %c0_i32, %c0_i32_0 : i32, i32
  }
  func.func @transform_7(%arg0: i32, %arg1: i32) -> (i32, i32, i32) {
    %c0_i32 = arith.constant 0 : i32
    %c0_i32_0 = arith.constant 0 : i32
    return %arg0, %arg1, %c0_i32 : i32, i32, i32
  }
}

</mosaic_0001>

<llo_original>
// kernel: tpu_custom_call.1
$region0: #{tpu_custom_call.1}
  #allocation0 [shape = 'u32[]', space=smem, size = 0x4, offset = 0x4, fixed_abs, tag = 'smem constant byte address 0x4 - core index']
  #allocation1 [shape = 'u32[144,128]{1,0:T(1,128)}', space=vmem, size = 0x12000, scoped, tag = 'internal scratch']
  %s0 = inlined_call_operand.vmem [shape: bf16[2,16,32,19], index: 0, kind: input, shape index: {}]
  %s1 = inlined_call_operand.vmem [shape: bf16[2,32,16], index: 1, kind: input, shape index: {}]
  %s2 = inlined_call_operand.vmem [shape: bf16[19,16], index: 2, kind: input, shape index: {}]
  %s3 = inlined_call_operand.vmem [shape: f32[1,16], index: 3, kind: input, shape index: {}]
  %s4 = inlined_call_operand.vmem [shape: bf16[16,128], index: 4, kind: input, shape index: {}]
  %s5 = inlined_call_operand.vmem [shape: bf16[16,128], index: 5, kind: input, shape index: {}]
  %s6 = inlined_call_operand.vmem [shape: f32[1,128], index: 6, kind: input, shape index: {}]
  %s7 = inlined_call_operand.hbm [shape: bf16[2,32,128], index: 7, kind: output, shape index: {}]
  %s8 = sld [smem:[#allocation0]]
  $region61: #{tpu_custom_call.1} parent=0
    _
  %s10 = ssub.s32 1, %s8
  %s11 = scalar_select 0, %s10, %s8
  $region1: #{tpu_custom_call.1} parent=0
    #allocation2 [shape = 'u8[16384]{0}', space=vmem, size = 0x4000, scoped, tag = 'output window, operand 0']
    #allocation3 [shape = 's32[2]{0}', space=sflag, size = 0x8, scoped, tag = 'scoped memory for tpu_custom_call.1']
    %12 = vsyncpa [#allocation3], 0
    %s13 = scalar_lea.sflag [#allocation3], 1
    %14 = vsyncpa %s13, 0
    loop: start=0, step=1, limit=4
    $region2: #{tpu_custom_call.1} parent=1 // loop_pre_header
      _
    $region3: #{tpu_custom_call.1} parent=1 // loop_header
      %s16 = sphi 0, %s20
      %p17 = scmp.ge.s32.totalorder %s16, 4
      %s23 = sphi 0, %s35
      %s24 = sphi 0, %s31
      %s25 = sphi 0, %s23
      %s26 = sphi 0, %s24
      %s27 = sphi 0, %s25
      %s28 = sphi 0, %s26
      %s40 = sphi 0, %s42
      %s43 = sphi 0, %s40
      %s44 = sphi 0, %s43
      %s60 = sphi 0, %s44
      %s68 = sphi 0, %s70
      %s71 = sphi 0, %s68
      %s72 = sphi 0, %s71
      %s88 = sphi 0, %s72
      %s92 = sphi 0, %s92
      %s94 = sphi 0, %s92
      %s95 = sphi 0, %s94
      %s109 = sphi 0, %s95
      %s113 = sphi 0, %s113
      %s115 = sphi 0, %s113
      %s116 = sphi 0, %s115
      %s130 = sphi 0, %s116
      %s134 = sphi 0, %s134
      %s136 = sphi 0, %s134
      %s137 = sphi 0, %s136
      %s151 = sphi 0, %s137
      %s155 = sphi 0, %s155
      %s157 = sphi 0, %s155
      %s158 = sphi 0, %s157
      %s172 = sphi 0, %s158
      %s176 = sphi 0, %s176
      %s178 = sphi 0, %s176
      %s179 = sphi 0, %s178
      %s193 = sphi 0, %s179
      %s201 = sphi 0, %s203
      %s204 = sphi 0, %s201
      %s205 = sphi 0, %s204
      %s221 = sphi 0, %s205
    $region4: #{tpu_custom_call.1} parent=1 // loop_header_branch
      %19 = sbr.rel (%p17) target = $region8
    $region5: #{tpu_custom_call.1} parent=1 // loop_body
      %s21 = ssub.s32 %s16, 1
      %s22 = ssub.s32 %s16, 2
      %s29 = sadd.s32 1, %s24
      %p30 = scmp.ge.s32.totalorder %s29, 1
      %s31 = scalar_select %p30, 0, %s29
      %s32 = sadd.s32 1, %s23
      %s33 = scalar_select %p30, %s32, %s23
      %p34 = scmp.ge.s32.totalorder %s33, 2
      %s35 = scalar_select %p34, 0, %s33
      %s36 = ssub.s32 %s23, %s35
      %s37 = ssub.s32 %s24, %s31
      %s38 = sor.u32 %s36, %s37
      %p39 = scmp.eq.s32.totalorder %s38, 0
      %s41 = sadd.s32 %s40, 1
      %s42 = scalar_select %p39, %s40, %s41
      %p45 = pneg %p39
      %p46 = scmp.eq.s32.totalorder %s16, 1
      %p47 = por %p45, %p46
      %p48 = scmp.ne.s32.totalorder %s40, %s43
      %p49 = scmp.eq.s32.totalorder %s16, 0
      %p50 = por %p48, %p49
      %p51 = scmp.ne.s32.totalorder %s40, %s43
      %p52 = scmp.eq.s32.totalorder %s21, 1
      %p53 = por %p51, %p52
      %p54 = scmp.ne.s32.totalorder %s43, %s44
      %p55 = scmp.eq.s32.totalorder %s21, 0
      %p56 = por %p54, %p55
      %p57 = scmp.ne.s32.totalorder %s43, %s44
      %p58 = scmp.eq.s32.totalorder %s22, 1
      %p59 = por %p57, %p58
      %p61 = scmp.ne.s32.totalorder %s44, %s60
      %p62 = scmp.eq.s32.totalorder %s22, 0
      %p63 = por %p61, %p62
      %s64 = ssub.s32 %s23, %s35
      %s65 = ssub.s32 %s24, %s31
      %s66 = sor.u32 %s64, %s65
      %p67 = scmp.eq.s32.totalorder %s66, 0
      %s69 = sadd.s32 %s68, 1
      %s70 = scalar_select %p67, %s68, %s69
      %p73 = pneg %p67
      %p74 = scmp.eq.s32.totalorder %s16, 1
      %p75 = por %p73, %p74
      %p76 = scmp.ne.s32.totalorder %s68, %s71
      %p77 = scmp.eq.s32.totalorder %s16, 0
      %p78 = por %p76, %p77
      %p79 = scmp.ne.s32.totalorder %s68, %s71
      %p80 = scmp.eq.s32.totalorder %s21, 1
      %p81 = por %p79, %p80
      %p82 = scmp.ne.s32.totalorder %s71, %s72
      %p83 = scmp.eq.s32.totalorder %s21, 0
      %p84 = por %p82, %p83
      %p85 = scmp.ne.s32.totalorder %s71, %s72
      %p86 = scmp.eq.s32.totalorder %s22, 1
      %p87 = por %p85, %p86
      %p89 = scmp.ne.s32.totalorder %s72, %s88
      %p90 = scmp.eq.s32.totalorder %s22, 0
      %p91 = por %p89, %p90
      %s93 = sadd.s32 %s92, 1
      %p96 = scmp.eq.s32.totalorder %s16, 1
      %p97 = scmp.ne.s32.totalorder %s92, %s94
      %p98 = scmp.eq.s32.totalorder %s16, 0
      %p99 = por %p97, %p98
      %p100 = scmp.ne.s32.totalorder %s92, %s94
      %p101 = scmp.eq.s32.totalorder %s21, 1
      %p102 = por %p100, %p101
      %p103 = scmp.ne.s32.totalorder %s94, %s95
      %p104 = scmp.eq.s32.totalorder %s21, 0
      %p105 = por %p103, %p104
      %p106 = scmp.ne.s32.totalorder %s94, %s95
      %p107 = scmp.eq.s32.totalorder %s22, 1
      %p108 = por %p106, %p107
      %p110 = scmp.ne.s32.totalorder %s95, %s109
      %p111 = scmp.eq.s32.totalorder %s22, 0
      %p112 = por %p110, %p111
      %s114 = sadd.s32 %s113, 1
      %p117 = scmp.eq.s32.totalorder %s16, 1
      %p118 = scmp.ne.s32.totalorder %s113, %s115
      %p119 = scmp.eq.s32.totalorder %s16, 0
      %p120 = por %p118, %p119
      %p121 = scmp.ne.s32.totalorder %s113, %s115
      %p122 = scmp.eq.s32.totalorder %s21, 1
      %p123 = por %p121, %p122
      %p124 = scmp.ne.s32.totalorder %s115, %s116
      %p125 = scmp.eq.s32.totalorder %s21, 0
      %p126 = por %p124, %p125
      %p127 = scmp.ne.s32.totalorder %s115, %s116
      %p128 = scmp.eq.s32.totalorder %s22, 1
      %p129 = por %p127, %p128
      %p131 = scmp.ne.s32.totalorder %s116, %s130
      %p132 = scmp.eq.s32.totalorder %s22, 0
      %p133 = por %p131, %p132
      %s135 = sadd.s32 %s134, 1
      %p138 = scmp.eq.s32.totalorder %s16, 1
      %p139 = scmp.ne.s32.totalorder %s134, %s136
      %p140 = scmp.eq.s32.totalorder %s16, 0
      %p141 = por %p139, %p140
      %p142 = scmp.ne.s32.totalorder %s134, %s136
      %p143 = scmp.eq.s32.totalorder %s21, 1
      %p144 = por %p142, %p143
      %p145 = scmp.ne.s32.totalorder %s136, %s137
      %p146 = scmp.eq.s32.totalorder %s21, 0
      %p147 = por %p145, %p146
      %p148 = scmp.ne.s32.totalorder %s136, %s137
      %p149 = scmp.eq.s32.totalorder %s22, 1
      %p150 = por %p148, %p149
      %p152 = scmp.ne.s32.totalorder %s137, %s151
      %p153 = scmp.eq.s32.totalorder %s22, 0
      %p154 = por %p152, %p153
      %s156 = sadd.s32 %s155, 1
      %p159 = scmp.eq.s32.totalorder %s16, 1
      %p160 = scmp.ne.s32.totalorder %s155, %s157
      %p161 = scmp.eq.s32.totalorder %s16, 0
      %p162 = por %p160, %p161
      %p163 = scmp.ne.s32.totalorder %s155, %s157
      %p164 = scmp.eq.s32.totalorder %s21, 1
      %p165 = por %p163, %p164
      %p166 = scmp.ne.s32.totalorder %s157, %s158
      %p167 = scmp.eq.s32.totalorder %s21, 0
      %p168 = por %p166, %p167
      %p169 = scmp.ne.s32.totalorder %s157, %s158
      %p170 = scmp.eq.s32.totalorder %s22, 1
      %p171 = por %p169, %p170
      %p173 = scmp.ne.s32.totalorder %s158, %s172
      %p174 = scmp.eq.s32.totalorder %s22, 0
      %p175 = por %p173, %p174
      %s177 = sadd.s32 %s176, 1
      %p180 = scmp.eq.s32.totalorder %s16, 1
      %p181 = scmp.ne.s32.totalorder %s176, %s178
      %p182 = scmp.eq.s32.totalorder %s16, 0
      %p183 = por %p181, %p182
      %p184 = scmp.ne.s32.totalorder %s176, %s178
      %p185 = scmp.eq.s32.totalorder %s21, 1
      %p186 = por %p184, %p185
      %p187 = scmp.ne.s32.totalorder %s178, %s179
      %p188 = scmp.eq.s32.totalorder %s21, 0
      %p189 = por %p187, %p188
      %p190 = scmp.ne.s32.totalorder %s178, %s179
      %p191 = scmp.eq.s32.totalorder %s22, 1
      %p192 = por %p190, %p191
      %p194 = scmp.ne.s32.totalorder %s179, %s193
      %p195 = scmp.eq.s32.totalorder %s22, 0
      %p196 = por %p194, %p195
      %s197 = ssub.s32 %s23, %s35
      %s198 = ssub.s32 %s24, %s31
      %s199 = sor.u32 %s197, %s198
      %p200 = scmp.eq.s32.totalorder %s199, 0
      %s202 = sadd.s32 %s201, 1
      %s203 = scalar_select %p200, %s201, %s202
      %p206 = pneg %p200
      %p207 = scmp.eq.s32.totalorder %s16, 1
      %p208 = por %p206, %p207
      %p209 = scmp.ne.s32.totalorder %s201, %s204
      %p210 = scmp.eq.s32.totalorder %s16, 0
      %p211 = por %p209, %p210
      %p212 = scmp.ne.s32.totalorder %s201, %s204
      %p213 = scmp.eq.s32.totalorder %s21, 1
      %p214 = por %p212, %p213
      %p215 = scmp.ne.s32.totalorder %s204, %s205
      %p216 = scmp.eq.s32.totalorder %s21, 0
      %p217 = por %p215, %p216
      %p218 = scmp.ne.s32.totalorder %s204, %s205
      %p219 = scmp.eq.s32.totalorder %s22, 1
      %p220 = por %p218, %p219
      %p222 = scmp.ne.s32.totalorder %s205, %s221
      %p223 = scmp.eq.s32.totalorder %s22, 0
      %p224 = por %p222, %p223
      %p225 = scmp.le.s32.totalorder 1, %s16
      %p226 = scmp.lt.s32.totalorder %s16, 3
      %p227 = pnand %p225, %p226
      %p228 = pneg %p227
      // Predicated region
      $region9: #{tpu_custom_call.1} parent=5 // pred_check
        _
      $region10: #{tpu_custom_call.1} parent=5 // pred_check_branch
        %230 = sbr.rel (%p227) target = $region12
      $region11: #{tpu_custom_call.1} parent=5 // pred_region
        %s231 = ssub.s32 %s16, 1
        // Predicated region
        $region13: #{tpu_custom_call.1} parent=11 // pred_check
          %p232 = pneg %p105
        $region14: #{tpu_custom_call.1} parent=11 // pred_check_branch
          %234 = sbr.rel (%p232) target = $region16
        $region15: #{tpu_custom_call.1} parent=11 // pred_region
          _
        $region16: #{tpu_custom_call.1} parent=11 // pred_fallthru
          _
        // Predicated region
        $region17: #{tpu_custom_call.1} parent=11 // pred_check
          %p235 = pneg %p126
        $region18: #{tpu_custom_call.1} parent=11 // pred_check_branch
          %237 = sbr.rel (%p235) target = $region20
        $region19: #{tpu_custom_call.1} parent=11 // pred_region
          _
        $region20: #{tpu_custom_call.1} parent=11 // pred_fallthru
          _
        // Predicated region
        $region21: #{tpu_custom_call.1} parent=11 // pred_check
          %p238 = pneg %p147
        $region22: #{tpu_custom_call.1} parent=11 // pred_check_branch
          %240 = sbr.rel (%p238) target = $region24
        $region23: #{tpu_custom_call.1} parent=11 // pred_region
          _
        $region24: #{tpu_custom_call.1} parent=11 // pred_fallthru
          _
        // Predicated region
        $region25: #{tpu_custom_call.1} parent=11 // pred_check
          %p241 = pneg %p168
        $region26: #{tpu_custom_call.1} parent=11 // pred_check_branch
          %243 = sbr.rel (%p241) target = $region28
        $region27: #{tpu_custom_call.1} parent=11 // pred_region
          _
        $region28: #{tpu_custom_call.1} parent=11 // pred_fallthru
          _
        // Predicated region
        $region29: #{tpu_custom_call.1} parent=11 // pred_check
          %p244 = pneg %p189
        $region30: #{tpu_custom_call.1} parent=11 // pred_check_branch
          %246 = sbr.rel (%p244) target = $region32
        $region31: #{tpu_custom_call.1} parent=11 // pred_region
          _
        $region32: #{tpu_custom_call.1} parent=11 // pred_fallthru
          _
      $region12: #{tpu_custom_call.1} parent=5 // pred_fallthru
        _
      %p247 = scmp.lt.s32.totalorder %s16, 2
      // Predicated region
      $region33: #{tpu_custom_call.1} parent=5 // pred_check
        %p248 = pneg %p247
      $region34: #{tpu_custom_call.1} parent=5 // pred_check_branch
        %250 = sbr.rel (%p248) target = $region36
      $region35: #{tpu_custom_call.1} parent=5 // pred_region
        // Predicated region
        $region37: #{tpu_custom_call.1} parent=35 // pred_check
          %p251 = pneg %p50
        $region38: #{tpu_custom_call.1} parent=35 // pred_check_branch
          %253 = sbr.rel (%p251) target = $region40
        $region39: #{tpu_custom_call.1} parent=35 // pred_region
          %s254 = smul.u32 4, %s24
          %p255 = scmp.lt.s32.totalorder %s23, 1
          %s256 = scalar_select %p255, %s23, 1
          %p257 = scmp.lt.s32.totalorder %s254, 3
          %s258 = scalar_select %p257, %s254, 3
          %s259 = smul.addr %s256, 64
          %s260 = sadd.s32 %s258, %s259
          %s261 = smul.addr %s260, 4
          %s262 = scalar_lea.vmem %s0, %s261
          %s263 = smul.u32 4, %s24
        $region40: #{tpu_custom_call.1} parent=35 // pred_fallthru
          _
        // Predicated region
        $region41: #{tpu_custom_call.1} parent=35 // pred_check
          %p264 = pneg %p78
        $region42: #{tpu_custom_call.1} parent=35 // pred_check_branch
          %266 = sbr.rel (%p264) target = $region44
        $region43: #{tpu_custom_call.1} parent=35 // pred_region
          %s267 = smul.u32 4, %s24
          %p268 = scmp.lt.s32.totalorder %s23, 1
          %s269 = scalar_select %p268, %s23, 1
          %p270 = scmp.lt.s32.totalorder %s267, 3
          %s271 = scalar_select %p270, %s267, 3
          %s272 = smul.addr %s269, 4
          %s273 = sadd.s32 %s271, %s272
          %s274 = smul.addr %s273, 4
          %s275 = scalar_lea.vmem %s1, %s274
          %s276 = smul.u32 4, %s24
        $region44: #{tpu_custom_call.1} parent=35 // pred_fallthru
          _
      $region36: #{tpu_custom_call.1} parent=5 // pred_fallthru
        _
      %p277 = scmp.le.s32.totalorder 1, %s16
      %p278 = scmp.lt.s32.totalorder %s16, 3
      %p279 = pnand %p277, %p278
      %p280 = pneg %p279
      // Predicated region
      $region45: #{tpu_custom_call.1} parent=5 // pred_check
        _
      $region46: #{tpu_custom_call.1} parent=5 // pred_check_branch
        %282 = sbr.rel (%p279) target = $region48
      $region47: #{tpu_custom_call.1} parent=5 // pred_region
        %s283 = ssub.s32 %s16, 1
        %s284 = smul.u32 4, %s26
        %p285 = scmp.lt.s32.totalorder %s25, 1
        %s286 = scalar_select %p285, %s25, 1
        %p287 = scmp.lt.s32.totalorder %s284, 3
        %s288 = scalar_select %p287, %s284, 3
        %s289 = smul.addr %s286, 64
        %s290 = sadd.s32 %s288, %s289
        %s291 = smul.addr %s290, 4
        %s292 = scalar_lea.vmem %s0, %s291
        %p293 = pneg %p56
        %p294 = pneg %p53
        %s295 = smul.u32 4, %s26
        %p296 = scmp.lt.s32.totalorder %s25, 1
        %s297 = scalar_select %p296, %s25, 1
        %p298 = scmp.lt.s32.totalorder %s295, 3
        %s299 = scalar_select %p298, %s295, 3
        %s300 = smul.addr %s297, 4
        %s301 = sadd.s32 %s299, %s300
        %s302 = smul.addr %s301, 4
        %s303 = scalar_lea.vmem %s1, %s302
        %p304 = pneg %p84
        %p305 = pneg %p81
        %p306 = pneg %p105
        %p307 = pneg %p102
        %p308 = pneg %p126
        %p309 = pneg %p123
        %p310 = pneg %p147
        %p311 = pneg %p144
        %p312 = pneg %p168
        %p313 = pneg %p165
        %p314 = pneg %p189
        %p315 = pneg %p186
        %p316 = pneg %p217
        %p317 = pneg %p214
        %s318 = sand.u32 %s204, 1
        %s319 = scalar_lea.sflag [#allocation3], %s318
        %s320 = sand.u32 %s204, 1
        %s321 = smul.addr %s320, 16
        %s322 = scalar_lea.vmem [#allocation2], %s321
        %s323 = smul.u32 4, %s26
        %p324 = scmp.lt.s32.totalorder %s25, 1
        %s325 = scalar_select %p324, %s25, 1
        %p326 = scmp.lt.s32.totalorder %s323, 3
        %s327 = scalar_select %p326, %s323, 3
        %s328 = smul.addr %s325, 64
        %s329 = sadd.s32 %s327, %s328
        %s330 = smul.addr %s329, 4
        %s331 = scalar_lea.vmem %s0, %s330
        %s332 = smul.u32 4, %s26
        %s333 = smul.u32 4, %s26
        %p334 = scmp.lt.s32.totalorder %s25, 1
        %s335 = scalar_select %p334, %s25, 1
        %p336 = scmp.lt.s32.totalorder %s333, 3
        %s337 = scalar_select %p336, %s333, 3
        %s338 = smul.addr %s335, 4
        %s339 = sadd.s32 %s337, %s338
        %s340 = smul.addr %s339, 4
        %s341 = scalar_lea.vmem %s1, %s340
        %s342 = smul.u32 4, %s26
        %s343 = smul.u32 4, %s26
        %v345 = vld [vmem:[%s2] sm:$0xf]
        %v346 = vld [vmem:[%s2 + $0x4] sm:$0xf]
        %v347 = vld [vmem:[%s2 + $0x8] sm:$0x3]
        %v348 = vld [vmem:[%s4] sm:$0xf]
        %v349 = vld [vmem:[%s4 + $0x4] sm:$0xf]
        %v350 = vld [vmem:[%s3] sm:$0x1]
        %v352 = vlaneseq
        %v353 = vshrl.u32 %v352, 7
        %v354 = vsub.s32 0, %v353
        %v355 = vrot.slane %v350, %v354
        %v357 = vld [vmem:[%s331] sm:$0xf]
        %v358 = vld [vmem:[%s331 + $0x4] sm:$0xf]
        %v359 = vld [vmem:[%s331 + $0x8] sm:$0xf]
        %v360 = vld [vmem:[%s331 + $0xc] sm:$0xf]
        %v365 = vunpack.c.l.b16 %v357
        %v366 = vunpack.c.l.b16 %v358
        %v367 = vunpack.c.l.b16 %v359
        %v368 = vunpack.c.l.b16 %v360
        %v369 = vpack.c.b16 %v366, %v365
        %v370 = vpack.c.b16 %v368, %v367
        %v374 = vunpack.c.l.b16 %v345
        %v375 = vunpack.c.l.b16 %v346
        %v376 = vunpack.c.l.b16 %v347
        %v377 = vpack.c.b16 %v375, %v374
        %v378 = vpack.c.b16 %v376, %v376
        %vm380 = vcmask 154624
        %v382 = vsel %vm380, %v369, 0
        %v385 = vsel %vm380, %v370, 0
        %vm387 = vcmask 1040384
        %vm388 = vcmask 1041408
        %v389 = vsel %vm387, 4294967295, 65535
        %v390 = vsel %vm388, %v389, 0
        %v392 = vand.u32 %v378, %v390
        %394 = vmatprep.subr.bf16.mxu0 0
        %395 = vmatpush1.bf16.msra.mxu0 0
        %396 = vmatprep.subr.bf16.mxu0 0
        %397 = vmatpush1.bf16.msra.mxu0 0
        %398 = vmatprep.subr.bf16.mxu0 0
        %399 = vmatpush1.bf16.msra.mxu0 0
        %400 = vmatprep.subr.bf16.mxu0 0
        %401 = vmatpush1.bf16.msra.mxu0 0
        %402 = vmatprep.subr.bf16.mxu0 0
        %403 = vmatpush1.bf16.msra.mxu0 0
        %404 = vmatprep.subr.bf16.mxu0 0
        %405 = vmatpush1.bf16.msra.mxu0 0
        %406 = vmatprep.subr.bf16.mxu0 0
        %407 = vmatpush1.bf16.msra.mxu0 %v392
        %408 = vmatprep.subr.bf16.mxu0 0
        %409 = vmatpush1.bf16.msra.mxu0 %v377
        %410 = vmatprep.subr.bf16.mxu0 0
        %411 = vmatpush2.bf16.msra.mxu0 0
        %412 = vmatprep.subr.bf16.mxu0 0
        %413 = vmatpush2.bf16.msra.mxu0 0
        %414 = vmatprep.subr.bf16.mxu0 0
        %415 = vmatpush2.bf16.msra.mxu0 0
        %416 = vmatprep.subr.bf16.mxu0 0
        %417 = vmatpush2.bf16.msra.mxu0 0
        %418 = vmatprep.subr.bf16.mxu0 0
        %419 = vmatpush2.bf16.msra.mxu0 0
        %420 = vmatprep.subr.bf16.mxu0 0
        %421 = vmatpush2.bf16.msra.mxu0 0
        %422 = vmatprep.subr.bf16.mxu0 0
        %423 = vmatpush2.bf16.msra.mxu0 0
        %424 = vmatprep.subr.bf16.mxu0 0
        %425 = vmatpush2.bf16.msra.mxu0 0
        %426 = vmatprep.mubr.bf16.mxu0 0
        %427 = vmatmul.mubr.bf16.gmra.mxu0 %v382
        %v428 = vpop.f32.mrf.mxu0
        %v429 = vadd.f32 %v355, %v428
        %v430 = vpop.f32.mrf.mxu0
        %v431 = vpop.f32.mrf.mxu0
        %v432 = vadd.f32 %v355, %v431
        %v433 = vpop.f32.mrf.mxu0
        %434 = vmatprep.mubr.bf16.mxu0 0
        %435 = vmatmul.mubr.bf16.gmra.mxu0 %v385
        %v436 = vpop.f32.mrf.mxu0
        %v437 = vadd.f32 %v355, %v436
        %v438 = vpop.f32.mrf.mxu0
        %v439 = vpop.f32.mrf.mxu0
        %v440 = vadd.f32 %v355, %v439
        %v441 = vpop.f32.mrf.mxu0
        %442 = vdwg.mxu0
        %v443 = vmax.f32 %v429, 0.0
        %v444 = vmax.f32 %v432, 0.0
        %v445 = vmax.f32 %v437, 0.0
        %v446 = vmax.f32 %v440, 0.0
        %v447 = vpack.c.bf16 %v444, %v443
        %v448 = vpack.c.bf16 %v446, %v445
        %v451 = vunpack.c.l.b16 %v348
        %v452 = vunpack.c.l.b16 %v349
        %v453 = vpack.c.b16 %v452, %v451
        %vm455 = vcmask 130048
        %v457 = vsel %vm455, %v447, 0
        %v460 = vsel %vm455, %v448, 0
        %462 = vmatprep.subr.bf16.mxu0 0
        %463 = vmatpush1.bf16.msra.mxu0 0
        %464 = vmatprep.subr.bf16.mxu0 0
        %465 = vmatpush1.bf16.msra.mxu0 0
        %466 = vmatprep.subr.bf16.mxu0 0
        %467 = vmatpush1.bf16.msra.mxu0 0
        %468 = vmatprep.subr.bf16.mxu0 0
        %469 = vmatpush1.bf16.msra.mxu0 0
        %470 = vmatprep.subr.bf16.mxu0 0
        %471 = vmatpush1.bf16.msra.mxu0 0
        %472 = vmatprep.subr.bf16.mxu0 0
        %473 = vmatpush1.bf16.msra.mxu0 0
        %474 = vmatprep.subr.bf16.mxu0 0
        %475 = vmatpush1.bf16.msra.mxu0 0
        %476 = vmatprep.subr.bf16.mxu0 0
        %477 = vmatpush1.bf16.msra.mxu0 %v453
        %478 = vmatprep.subr.bf16.mxu0 0
        %479 = vmatpush2.bf16.msra.mxu0 0
        %480 = vmatprep.subr.bf16.mxu0 0
        %481 = vmatpush2.bf16.msra.mxu0 0
        %482 = vmatprep.subr.bf16.mxu0 0
        %483 = vmatpush2.bf16.msra.mxu0 0
        %484 = vmatprep.subr.bf16.mxu0 0
        %485 = vmatpush2.bf16.msra.mxu0 0
        %486 = vmatprep.subr.bf16.mxu0 0
        %487 = vmatpush2.bf16.msra.mxu0 0
        %488 = vmatprep.subr.bf16.mxu0 0
        %489 = vmatpush2.bf16.msra.mxu0 0
        %490 = vmatprep.subr.bf16.mxu0 0
        %491 = vmatpush2.bf16.msra.mxu0 0
        %492 = vmatprep.subr.bf16.mxu0 0
        %493 = vmatpush2.bf16.msra.mxu0 0
        %494 = vmatprep.mubr.bf16.mxu0 0
        %495 = vmatmul.mubr.bf16.gmra.mxu0 %v457
        %v496 = vpop.f32.mrf.mxu0
        %v497 = vadd.f32 0.0, %v496
        %v498 = vpop.f32.mrf.mxu0
        %v499 = vpop.f32.mrf.mxu0
        %v500 = vadd.f32 0.0, %v499
        %v501 = vpop.f32.mrf.mxu0
        %502 = vmatprep.mubr.bf16.mxu0 0
        %503 = vmatmul.mubr.bf16.gmra.mxu0 %v460
        %v504 = vpop.f32.mrf.mxu0
        %v505 = vadd.f32 0.0, %v504
        %v506 = vpop.f32.mrf.mxu0
        %v507 = vpop.f32.mrf.mxu0
        %v508 = vadd.f32 0.0, %v507
        %v509 = vpop.f32.mrf.mxu0
        %510 = vdwg.mxu0
        %s511 = scalar_lea.vmem %s331, 16
        %v512 = vld [vmem:[%s511] sm:$0xf]
        %v513 = vld [vmem:[%s511 + $0x4] sm:$0xf]
        %v514 = vld [vmem:[%s511 + $0x8] sm:$0xf]
        %v515 = vld [vmem:[%s511 + $0xc] sm:$0xf]
        %v520 = vunpack.c.l.b16 %v512
        %v521 = vunpack.c.l.b16 %v513
        %v522 = vunpack.c.l.b16 %v514
        %v523 = vunpack.c.l.b16 %v515
        %v524 = vpack.c.b16 %v521, %v520
        %v525 = vpack.c.b16 %v523, %v522
        %v527 = vsel %vm380, %v524, 0
        %v530 = vsel %vm380, %v525, 0
        %532 = vmatprep.subr.bf16.mxu0 0
        %533 = vmatpush1.bf16.msra.mxu0 0
        %534 = vmatprep.subr.bf16.mxu0 0
        %535 = vmatpush1.bf16.msra.mxu0 0
        %536 = vmatprep.subr.bf16.mxu0 0
        %537 = vmatpush1.bf16.msra.mxu0 0
        %538 = vmatprep.subr.bf16.mxu0 0
        %539 = vmatpush1.bf16.msra.mxu0 0
        %540 = vmatprep.subr.bf16.mxu0 0
        %541 = vmatpush1.bf16.msra.mxu0 0
        %542 = vmatprep.subr.bf16.mxu0 0
        %543 = vmatpush1.bf16.msra.mxu0 0
        %544 = vmatprep.subr.bf16.mxu0 0
        %545 = vmatpush1.bf16.msra.mxu0 %v392
        %546 = vmatprep.subr.bf16.mxu0 0
        %547 = vmatpush1.bf16.msra.mxu0 %v377
        %548 = vmatprep.subr.bf16.mxu0 0
        %549 = vmatpush2.bf16.msra.mxu0 0
        %550 = vmatprep.subr.bf16.mxu0 0
        %551 = vmatpush2.bf16.msra.mxu0 0
        %552 = vmatprep.subr.bf16.mxu0 0
        %553 = vmatpush2.bf16.msra.mxu0 0
        %554 = vmatprep.subr.bf16.mxu0 0
        %555 = vmatpush2.bf16.msra.mxu0 0
        %556 = vmatprep.subr.bf16.mxu0 0
        %557 = vmatpush2.bf16.msra.mxu0 0
        %558 = vmatprep.subr.bf16.mxu0 0
        %559 = vmatpush2.bf16.msra.mxu0 0
        %560 = vmatprep.subr.bf16.mxu0 0
        %561 = vmatpush2.bf16.msra.mxu0 0
        %562 = vmatprep.subr.bf16.mxu0 0
        %563 = vmatpush2.bf16.msra.mxu0 0
        %564 = vmatprep.mubr.bf16.mxu0 0
        %565 = vmatmul.mubr.bf16.gmra.mxu0 %v527
        %v566 = vpop.f32.mrf.mxu0
        %v567 = vadd.f32 %v355, %v566
        %v568 = vpop.f32.mrf.mxu0
        %v569 = vpop.f32.mrf.mxu0
        %v570 = vadd.f32 %v355, %v569
        %v571 = vpop.f32.mrf.mxu0
        %572 = vmatprep.mubr.bf16.mxu0 0
        %573 = vmatmul.mubr.bf16.gmra.mxu0 %v530
        %v574 = vpop.f32.mrf.mxu0
        %v575 = vadd.f32 %v355, %v574
        %v576 = vpop.f32.mrf.mxu0
        %v577 = vpop.f32.mrf.mxu0
        %v578 = vadd.f32 %v355, %v577
        %v579 = vpop.f32.mrf.mxu0
        %580 = vdwg.mxu0
        %v581 = vmax.f32 %v567, 0.0
        %v582 = vmax.f32 %v570, 0.0
        %v583 = vmax.f32 %v575, 0.0
        %v584 = vmax.f32 %v578, 0.0
        %v585 = vpack.c.bf16 %v582, %v581
        %v586 = vpack.c.bf16 %v584, %v583
        %v588 = vsel %vm455, %v585, 0
        %v591 = vsel %vm455, %v586, 0
        %593 = vmatprep.subr.bf16.mxu0 0
        %594 = vmatpush1.bf16.msra.mxu0 0
        %595 = vmatprep.subr.bf16.mxu0 0
        %596 = vmatpush1.bf16.msra.mxu0 0
        %597 = vmatprep.subr.bf16.mxu0 0
        %598 = vmatpush1.bf16.msra.mxu0 0
        %599 = vmatprep.subr.bf16.mxu0 0
        %600 = vmatpush1.bf16.msra.mxu0 0
        %601 = vmatprep.subr.bf16.mxu0 0
        %602 = vmatpush1.bf16.msra.mxu0 0
        %603 = vmatprep.subr.bf16.mxu0 0
        %604 = vmatpush1.bf16.msra.mxu0 0
        %605 = vmatprep.subr.bf16.mxu0 0
        %606 = vmatpush1.bf16.msra.mxu0 0
        %607 = vmatprep.subr.bf16.mxu0 0
        %608 = vmatpush1.bf16.msra.mxu0 %v453
        %609 = vmatprep.subr.bf16.mxu0 0
        %610 = vmatpush2.bf16.msra.mxu0 0
        %611 = vmatprep.subr.bf16.mxu0 0
        %612 = vmatpush2.bf16.msra.mxu0 0
        %613 = vmatprep.subr.bf16.mxu0 0
        %614 = vmatpush2.bf16.msra.mxu0 0
        %615 = vmatprep.subr.bf16.mxu0 0
        %616 = vmatpush2.bf16.msra.mxu0 0
        %617 = vmatprep.subr.bf16.mxu0 0
        %618 = vmatpush2.bf16.msra.mxu0 0
        %619 = vmatprep.subr.bf16.mxu0 0
        %620 = vmatpush2.bf16.msra.mxu0 0
        %621 = vmatprep.subr.bf16.mxu0 0
        %622 = vmatpush2.bf16.msra.mxu0 0
        %623 = vmatprep.subr.bf16.mxu0 0
        %624 = vmatpush2.bf16.msra.mxu0 0
        %625 = vmatprep.mubr.bf16.mxu0 0
        %626 = vmatmul.mubr.bf16.gmra.mxu0 %v588
        %v627 = vpop.f32.mrf.mxu0
        %v628 = vadd.f32 0.0, %v627
        %v629 = vpop.f32.mrf.mxu0
        %v630 = vpop.f32.mrf.mxu0
        %v631 = vadd.f32 0.0, %v630
        %v632 = vpop.f32.mrf.mxu0
        %633 = vmatprep.mubr.bf16.mxu0 0
        %634 = vmatmul.mubr.bf16.gmra.mxu0 %v591
        %v635 = vpop.f32.mrf.mxu0
        %v636 = vadd.f32 0.0, %v635
        %v637 = vpop.f32.mrf.mxu0
        %v638 = vpop.f32.mrf.mxu0
        %v639 = vadd.f32 0.0, %v638
        %v640 = vpop.f32.mrf.mxu0
        %641 = vdwg.mxu0
        %v642 = vmax.f32 %v497, %v628
        %v643 = vmax.f32 %v500, %v631
        %v644 = vmax.f32 %v505, %v636
        %v645 = vmax.f32 %v508, %v639
        %s646 = scalar_lea.vmem %s331, 32
        %v647 = vld [vmem:[%s646] sm:$0xf]
        %v648 = vld [vmem:[%s646 + $0x4] sm:$0xf]
        %v649 = vld [vmem:[%s646 + $0x8] sm:$0xf]
        %v650 = vld [vmem:[%s646 + $0xc] sm:$0xf]
        %v655 = vunpack.c.l.b16 %v647
        %v656 = vunpack.c.l.b16 %v648
        %v657 = vunpack.c.l.b16 %v649
        %v658 = vunpack.c.l.b16 %v650
        %v659 = vpack.c.b16 %v656, %v655
        %v660 = vpack.c.b16 %v658, %v657
        %v662 = vsel %vm380, %v659, 0
        %v665 = vsel %vm380, %v660, 0
        %667 = vmatprep.subr.bf16.mxu0 0
        %668 = vmatpush1.bf16.msra.mxu0 0
        %669 = vmatprep.subr.bf16.mxu0 0
        %670 = vmatpush1.bf16.msra.mxu0 0
        %671 = vmatprep.subr.bf16.mxu0 0
        %672 = vmatpush1.bf16.msra.mxu0 0
        %673 = vmatprep.subr.bf16.mxu0 0
        %674 = vmatpush1.bf16.msra.mxu0 0
        %675 = vmatprep.subr.bf16.mxu0 0
        %676 = vmatpush1.bf16.msra.mxu0 0
        %677 = vmatprep.subr.bf16.mxu0 0
        %678 = vmatpush1.bf16.msra.mxu0 0
        %679 = vmatprep.subr.bf16.mxu0 0
        %680 = vmatpush1.bf16.msra.mxu0 %v392
        %681 = vmatprep.subr.bf16.mxu0 0
        %682 = vmatpush1.bf16.msra.mxu0 %v377
        %683 = vmatprep.subr.bf16.mxu0 0
        %684 = vmatpush2.bf16.msra.mxu0 0
        %685 = vmatprep.subr.bf16.mxu0 0
        %686 = vmatpush2.bf16.msra.mxu0 0
        %687 = vmatprep.subr.bf16.mxu0 0
        %688 = vmatpush2.bf16.msra.mxu0 0
        %689 = vmatprep.subr.bf16.mxu0 0
        %690 = vmatpush2.bf16.msra.mxu0 0
        %691 = vmatprep.subr.bf16.mxu0 0
        %692 = vmatpush2.bf16.msra.mxu0 0
        %693 = vmatprep.subr.bf16.mxu0 0
        %694 = vmatpush2.bf16.msra.mxu0 0
        %695 = vmatprep.subr.bf16.mxu0 0
        %696 = vmatpush2.bf16.msra.mxu0 0
        %697 = vmatprep.subr.bf16.mxu0 0
        %698 = vmatpush2.bf16.msra.mxu0 0
        %699 = vmatprep.mubr.bf16.mxu0 0
        %700 = vmatmul.mubr.bf16.gmra.mxu0 %v662
        %v701 = vpop.f32.mrf.mxu0
        %v702 = vadd.f32 %v355, %v701
        %v703 = vpop.f32.mrf.mxu0
        %v704 = vpop.f32.mrf.mxu0
        %v705 = vadd.f32 %v355, %v704
        %v706 = vpop.f32.mrf.mxu0
        %707 = vmatprep.mubr.bf16.mxu0 0
        %708 = vmatmul.mubr.bf16.gmra.mxu0 %v665
        %v709 = vpop.f32.mrf.mxu0
        %v710 = vadd.f32 %v355, %v709
        %v711 = vpop.f32.mrf.mxu0
        %v712 = vpop.f32.mrf.mxu0
        %v713 = vadd.f32 %v355, %v712
        %v714 = vpop.f32.mrf.mxu0
        %715 = vdwg.mxu0
        %v716 = vmax.f32 %v702, 0.0
        %v717 = vmax.f32 %v705, 0.0
        %v718 = vmax.f32 %v710, 0.0
        %v719 = vmax.f32 %v713, 0.0
        %v720 = vpack.c.bf16 %v717, %v716
        %v721 = vpack.c.bf16 %v719, %v718
        %v723 = vsel %vm455, %v720, 0
        %v726 = vsel %vm455, %v721, 0
        %728 = vmatprep.subr.bf16.mxu0 0
        %729 = vmatpush1.bf16.msra.mxu0 0
        %730 = vmatprep.subr.bf16.mxu0 0
        %731 = vmatpush1.bf16.msra.mxu0 0
        %732 = vmatprep.subr.bf16.mxu0 0
        %733 = vmatpush1.bf16.msra.mxu0 0
        %734 = vmatprep.subr.bf16.mxu0 0
        %735 = vmatpush1.bf16.msra.mxu0 0
        %736 = vmatprep.subr.bf16.mxu0 0
        %737 = vmatpush1.bf16.msra.mxu0 0
        %738 = vmatprep.subr.bf16.mxu0 0
        %739 = vmatpush1.bf16.msra.mxu0 0
        %740 = vmatprep.subr.bf16.mxu0 0
        %741 = vmatpush1.bf16.msra.mxu0 0
        %742 = vmatprep.subr.bf16.mxu0 0
        %743 = vmatpush1.bf16.msra.mxu0 %v453
        %744 = vmatprep.subr.bf16.mxu0 0
        %745 = vmatpush2.bf16.msra.mxu0 0
        %746 = vmatprep.subr.bf16.mxu0 0
        %747 = vmatpush2.bf16.msra.mxu0 0
        %748 = vmatprep.subr.bf16.mxu0 0
        %749 = vmatpush2.bf16.msra.mxu0 0
        %750 = vmatprep.subr.bf16.mxu0 0
        %751 = vmatpush2.bf16.msra.mxu0 0
        %752 = vmatprep.subr.bf16.mxu0 0
        %753 = vmatpush2.bf16.msra.mxu0 0
        %754 = vmatprep.subr.bf16.mxu0 0
        %755 = vmatpush2.bf16.msra.mxu0 0
        %756 = vmatprep.subr.bf16.mxu0 0
        %757 = vmatpush2.bf16.msra.mxu0 0
        %758 = vmatprep.subr.bf16.mxu0 0
        %759 = vmatpush2.bf16.msra.mxu0 0
        %760 = vmatprep.mubr.bf16.mxu0 0
        %761 = vmatmul.mubr.bf16.gmra.mxu0 %v723
        %v762 = vpop.f32.mrf.mxu0
        %v763 = vadd.f32 0.0, %v762
        %v764 = vpop.f32.mrf.mxu0
        %v765 = vpop.f32.mrf.mxu0
        %v766 = vadd.f32 0.0, %v765
        %v767 = vpop.f32.mrf.mxu0
        %768 = vmatprep.mubr.bf16.mxu0 0
        %769 = vmatmul.mubr.bf16.gmra.mxu0 %v726
        %v770 = vpop.f32.mrf.mxu0
        %v771 = vadd.f32 0.0, %v770
        %v772 = vpop.f32.mrf.mxu0
        %v773 = vpop.f32.mrf.mxu0
        %v774 = vadd.f32 0.0, %v773
        %v775 = vpop.f32.mrf.mxu0
        %776 = vdwg.mxu0
        %v777 = vmax.f32 %v642, %v763
        %v778 = vmax.f32 %v643, %v766
        %v779 = vmax.f32 %v644, %v771
        %v780 = vmax.f32 %v645, %v774
        %s781 = scalar_lea.vmem %s331, 48
        %v782 = vld [vmem:[%s781] sm:$0xf]
        %v783 = vld [vmem:[%s781 + $0x4] sm:$0xf]
        %v784 = vld [vmem:[%s781 + $0x8] sm:$0xf]
        %v785 = vld [vmem:[%s781 + $0xc] sm:$0xf]
        %v790 = vunpack.c.l.b16 %v782
        %v791 = vunpack.c.l.b16 %v783
        %v792 = vunpack.c.l.b16 %v784
        %v793 = vunpack.c.l.b16 %v785
        %v794 = vpack.c.b16 %v791, %v790
        %v795 = vpack.c.b16 %v793, %v792
        %v797 = vsel %vm380, %v794, 0
        %v800 = vsel %vm380, %v795, 0
        %802 = vmatprep.subr.bf16.mxu0 0
        %803 = vmatpush1.bf16.msra.mxu0 0
        %804 = vmatprep.subr.bf16.mxu0 0
        %805 = vmatpush1.bf16.msra.mxu0 0
        %806 = vmatprep.subr.bf16.mxu0 0
        %807 = vmatpush1.bf16.msra.mxu0 0
        %808 = vmatprep.subr.bf16.mxu0 0
        %809 = vmatpush1.bf16.msra.mxu0 0
        %810 = vmatprep.subr.bf16.mxu0 0
        %811 = vmatpush1.bf16.msra.mxu0 0
        %812 = vmatprep.subr.bf16.mxu0 0
        %813 = vmatpush1.bf16.msra.mxu0 0
        %814 = vmatprep.subr.bf16.mxu0 0
        %815 = vmatpush1.bf16.msra.mxu0 %v392
        %816 = vmatprep.subr.bf16.mxu0 0
        %817 = vmatpush1.bf16.msra.mxu0 %v377
        %818 = vmatprep.subr.bf16.mxu0 0
        %819 = vmatpush2.bf16.msra.mxu0 0
        %820 = vmatprep.subr.bf16.mxu0 0
        %821 = vmatpush2.bf16.msra.mxu0 0
        %822 = vmatprep.subr.bf16.mxu0 0
        %823 = vmatpush2.bf16.msra.mxu0 0
        %824 = vmatprep.subr.bf16.mxu0 0
        %825 = vmatpush2.bf16.msra.mxu0 0
        %826 = vmatprep.subr.bf16.mxu0 0
        %827 = vmatpush2.bf16.msra.mxu0 0
        %828 = vmatprep.subr.bf16.mxu0 0
        %829 = vmatpush2.bf16.msra.mxu0 0
        %830 = vmatprep.subr.bf16.mxu0 0
        %831 = vmatpush2.bf16.msra.mxu0 0
        %832 = vmatprep.subr.bf16.mxu0 0
        %833 = vmatpush2.bf16.msra.mxu0 0
        %834 = vmatprep.mubr.bf16.mxu0 0
        %835 = vmatmul.mubr.bf16.gmra.mxu0 %v797
        %v836 = vpop.f32.mrf.mxu0
        %v837 = vadd.f32 %v355, %v836
        %v838 = vpop.f32.mrf.mxu0
        %v839 = vpop.f32.mrf.mxu0
        %v840 = vadd.f32 %v355, %v839
        %v841 = vpop.f32.mrf.mxu0
        %842 = vmatprep.mubr.bf16.mxu0 0
        %843 = vmatmul.mubr.bf16.gmra.mxu0 %v800
        %v844 = vpop.f32.mrf.mxu0
        %v845 = vadd.f32 %v355, %v844
        %v846 = vpop.f32.mrf.mxu0
        %v847 = vpop.f32.mrf.mxu0
        %v848 = vadd.f32 %v355, %v847
        %v849 = vpop.f32.mrf.mxu0
        %850 = vdwg.mxu0
        %v851 = vmax.f32 %v837, 0.0
        %v852 = vmax.f32 %v840, 0.0
        %v853 = vmax.f32 %v845, 0.0
        %v854 = vmax.f32 %v848, 0.0
        %v855 = vpack.c.bf16 %v852, %v851
        %v856 = vpack.c.bf16 %v854, %v853
        %v858 = vsel %vm455, %v855, 0
        %v861 = vsel %vm455, %v856, 0
        %863 = vmatprep.subr.bf16.mxu0 0
        %864 = vmatpush1.bf16.msra.mxu0 0
        %865 = vmatprep.subr.bf16.mxu0 0
        %866 = vmatpush1.bf16.msra.mxu0 0
        %867 = vmatprep.subr.bf16.mxu0 0
        %868 = vmatpush1.bf16.msra.mxu0 0
        %869 = vmatprep.subr.bf16.mxu0 0
        %870 = vmatpush1.bf16.msra.mxu0 0
        %871 = vmatprep.subr.bf16.mxu0 0
        %872 = vmatpush1.bf16.msra.mxu0 0
        %873 = vmatprep.subr.bf16.mxu0 0
        %874 = vmatpush1.bf16.msra.mxu0 0
        %875 = vmatprep.subr.bf16.mxu0 0
        %876 = vmatpush1.bf16.msra.mxu0 0
        %877 = vmatprep.subr.bf16.mxu0 0
        %878 = vmatpush1.bf16.msra.mxu0 %v453
        %879 = vmatprep.subr.bf16.mxu0 0
        %880 = vmatpush2.bf16.msra.mxu0 0
        %881 = vmatprep.subr.bf16.mxu0 0
        %882 = vmatpush2.bf16.msra.mxu0 0
        %883 = vmatprep.subr.bf16.mxu0 0
        %884 = vmatpush2.bf16.msra.mxu0 0
        %885 = vmatprep.subr.bf16.mxu0 0
        %886 = vmatpush2.bf16.msra.mxu0 0
        %887 = vmatprep.subr.bf16.mxu0 0
        %888 = vmatpush2.bf16.msra.mxu0 0
        %889 = vmatprep.subr.bf16.mxu0 0
        %890 = vmatpush2.bf16.msra.mxu0 0
        %891 = vmatprep.subr.bf16.mxu0 0
        %892 = vmatpush2.bf16.msra.mxu0 0
        %893 = vmatprep.subr.bf16.mxu0 0
        %894 = vmatpush2.bf16.msra.mxu0 0
        %895 = vmatprep.mubr.bf16.mxu0 0
        %896 = vmatmul.mubr.bf16.gmra.mxu0 %v858
        %v897 = vpop.f32.mrf.mxu0
        %v898 = vadd.f32 0.0, %v897
        %v899 = vpop.f32.mrf.mxu0
        %v900 = vpop.f32.mrf.mxu0
        %v901 = vadd.f32 0.0, %v900
        %v902 = vpop.f32.mrf.mxu0
        %903 = vmatprep.mubr.bf16.mxu0 0
        %904 = vmatmul.mubr.bf16.gmra.mxu0 %v861
        %v905 = vpop.f32.mrf.mxu0
        %v906 = vadd.f32 0.0, %v905
        %v907 = vpop.f32.mrf.mxu0
        %v908 = vpop.f32.mrf.mxu0
        %v909 = vadd.f32 0.0, %v908
        %v910 = vpop.f32.mrf.mxu0
        %911 = vdwg.mxu0
        %v912 = vmax.f32 %v777, %v898
        %v913 = vmax.f32 %v778, %v901
        %v914 = vmax.f32 %v779, %v906
        %v915 = vmax.f32 %v780, %v909
        %s916 = scalar_lea.vmem %s331, 64
        %v917 = vld [vmem:[%s916] sm:$0xf]
        %v918 = vld [vmem:[%s916 + $0x4] sm:$0xf]
        %v919 = vld [vmem:[%s916 + $0x8] sm:$0xf]
        %v920 = vld [vmem:[%s916 + $0xc] sm:$0xf]
        %v925 = vunpack.c.l.b16 %v917
        %v926 = vunpack.c.l.b16 %v918
        %v927 = vunpack.c.l.b16 %v919
        %v928 = vunpack.c.l.b16 %v920
        %v929 = vpack.c.b16 %v926, %v925
        %v930 = vpack.c.b16 %v928, %v927
        %v932 = vsel %vm380, %v929, 0
        %v935 = vsel %vm380, %v930, 0
        %937 = vmatprep.subr.bf16.mxu0 0
        %938 = vmatpush1.bf16.msra.mxu0 0
        %939 = vmatprep.subr.bf16.mxu0 0
        %940 = vmatpush1.bf16.msra.mxu0 0
        %941 = vmatprep.subr.bf16.mxu0 0
        %942 = vmatpush1.bf16.msra.mxu0 0
        %943 = vmatprep.subr.bf16.mxu0 0
        %944 = vmatpush1.bf16.msra.mxu0 0
        %945 = vmatprep.subr.bf16.mxu0 0
        %946 = vmatpush1.bf16.msra.mxu0 0
        %947 = vmatprep.subr.bf16.mxu0 0
        %948 = vmatpush1.bf16.msra.mxu0 0
        %949 = vmatprep.subr.bf16.mxu0 0
        %950 = vmatpush1.bf16.msra.mxu0 %v392
        %951 = vmatprep.subr.bf16.mxu0 0
        %952 = vmatpush1.bf16.msra.mxu0 %v377
        %953 = vmatprep.subr.bf16.mxu0 0
        %954 = vmatpush2.bf16.msra.mxu0 0
        %955 = vmatprep.subr.bf16.mxu0 0
        %956 = vmatpush2.bf16.msra.mxu0 0
        %957 = vmatprep.subr.bf16.mxu0 0
        %958 = vmatpush2.bf16.msra.mxu0 0
        %959 = vmatprep.subr.bf16.mxu0 0
        %960 = vmatpush2.bf16.msra.mxu0 0
        %961 = vmatprep.subr.bf16.mxu0 0
        %962 = vmatpush2.bf16.msra.mxu0 0
        %963 = vmatprep.subr.bf16.mxu0 0
        %964 = vmatpush2.bf16.msra.mxu0 0
        %965 = vmatprep.subr.bf16.mxu0 0
        %966 = vmatpush2.bf16.msra.mxu0 0
        %967 = vmatprep.subr.bf16.mxu0 0
        %968 = vmatpush2.bf16.msra.mxu0 0
        %969 = vmatprep.mubr.bf16.mxu0 0
        %970 = vmatmul.mubr.bf16.gmra.mxu0 %v932
        %v971 = vpop.f32.mrf.mxu0
        %v972 = vadd.f32 %v355, %v971
        %v973 = vpop.f32.mrf.mxu0
        %v974 = vpop.f32.mrf.mxu0
        %v975 = vadd.f32 %v355, %v974
        %v976 = vpop.f32.mrf.mxu0
        %977 = vmatprep.mubr.bf16.mxu0 0
        %978 = vmatmul.mubr.bf16.gmra.mxu0 %v935
        %v979 = vpop.f32.mrf.mxu0
        %v980 = vadd.f32 %v355, %v979
        %v981 = vpop.f32.mrf.mxu0
        %v982 = vpop.f32.mrf.mxu0
        %v983 = vadd.f32 %v355, %v982
        %v984 = vpop.f32.mrf.mxu0
        %985 = vdwg.mxu0
        %v986 = vmax.f32 %v972, 0.0
        %v987 = vmax.f32 %v975, 0.0
        %v988 = vmax.f32 %v980, 0.0
        %v989 = vmax.f32 %v983, 0.0
        %v990 = vpack.c.bf16 %v987, %v986
        %v991 = vpack.c.bf16 %v989, %v988
        %v993 = vsel %vm455, %v990, 0
        %v996 = vsel %vm455, %v991, 0
        %998 = vmatprep.subr.bf16.mxu0 0
        %999 = vmatpush1.bf16.msra.mxu0 0
        %1000 = vmatprep.subr.bf16.mxu0 0
        %1001 = vmatpush1.bf16.msra.mxu0 0
        %1002 = vmatprep.subr.bf16.mxu0 0
        %1003 = vmatpush1.bf16.msra.mxu0 0
        %1004 = vmatprep.subr.bf16.mxu0 0
        %1005 = vmatpush1.bf16.msra.mxu0 0
        %1006 = vmatprep.subr.bf16.mxu0 0
        %1007 = vmatpush1.bf16.msra.mxu0 0
        %1008 = vmatprep.subr.bf16.mxu0 0
        %1009 = vmatpush1.bf16.msra.mxu0 0
        %1010 = vmatprep.subr.bf16.mxu0 0
        %1011 = vmatpush1.bf16.msra.mxu0 0
        %1012 = vmatprep.subr.bf16.mxu0 0
        %1013 = vmatpush1.bf16.msra.mxu0 %v453
        %1014 = vmatprep.subr.bf16.mxu0 0
        %1015 = vmatpush2.bf16.msra.mxu0 0
        %1016 = vmatprep.subr.bf16.mxu0 0
        %1017 = vmatpush2.bf16.msra.mxu0 0
        %1018 = vmatprep.subr.bf16.mxu0 0
        %1019 = vmatpush2.bf16.msra.mxu0 0
        %1020 = vmatprep.subr.bf16.mxu0 0
        %1021 = vmatpush2.bf16.msra.mxu0 0
        %1022 = vmatprep.subr.bf16.mxu0 0
        %1023 = vmatpush2.bf16.msra.mxu0 0
        %1024 = vmatprep.subr.bf16.mxu0 0
        %1025 = vmatpush2.bf16.msra.mxu0 0
        %1026 = vmatprep.subr.bf16.mxu0 0
        %1027 = vmatpush2.bf16.msra.mxu0 0
        %1028 = vmatprep.subr.bf16.mxu0 0
        %1029 = vmatpush2.bf16.msra.mxu0 0
        %1030 = vmatprep.mubr.bf16.mxu0 0
        %1031 = vmatmul.mubr.bf16.gmra.mxu0 %v993
        %v1032 = vpop.f32.mrf.mxu0
        %v1033 = vadd.f32 0.0, %v1032
        %v1034 = vpop.f32.mrf.mxu0
        %v1035 = vpop.f32.mrf.mxu0
        %v1036 = vadd.f32 0.0, %v1035
        %v1037 = vpop.f32.mrf.mxu0
        %1038 = vmatprep.mubr.bf16.mxu0 0
        %1039 = vmatmul.mubr.bf16.gmra.mxu0 %v996
        %v1040 = vpop.f32.mrf.mxu0
        %v1041 = vadd.f32 0.0, %v1040
        %v1042 = vpop.f32.mrf.mxu0
        %v1043 = vpop.f32.mrf.mxu0
        %v1044 = vadd.f32 0.0, %v1043
        %v1045 = vpop.f32.mrf.mxu0
        %1046 = vdwg.mxu0
        %v1047 = vmax.f32 %v912, %v1033
        %v1048 = vmax.f32 %v913, %v1036
        %v1049 = vmax.f32 %v914, %v1041
        %v1050 = vmax.f32 %v915, %v1044
        %s1051 = scalar_lea.vmem %s331, 80
        %v1052 = vld [vmem:[%s1051] sm:$0xf]
        %v1053 = vld [vmem:[%s1051 + $0x4] sm:$0xf]
        %v1054 = vld [vmem:[%s1051 + $0x8] sm:$0xf]
        %v1055 = vld [vmem:[%s1051 + $0xc] sm:$0xf]
        %v1060 = vunpack.c.l.b16 %v1052
        %v1061 = vunpack.c.l.b16 %v1053
        %v1062 = vunpack.c.l.b16 %v1054
        %v1063 = vunpack.c.l.b16 %v1055
        %v1064 = vpack.c.b16 %v1061, %v1060
        %v1065 = vpack.c.b16 %v1063, %v1062
        %v1067 = vsel %vm380, %v1064, 0
        %v1070 = vsel %vm380, %v1065, 0
        %1072 = vmatprep.subr.bf16.mxu0 0
        %1073 = vmatpush1.bf16.msra.mxu0 0
        %1074 = vmatprep.subr.bf16.mxu0 0
        %1075 = vmatpush1.bf16.msra.mxu0 0
        %1076 = vmatprep.subr.bf16.mxu0 0
        %1077 = vmatpush1.bf16.msra.mxu0 0
        %1078 = vmatprep.subr.bf16.mxu0 0
        %1079 = vmatpush1.bf16.msra.mxu0 0
        %1080 = vmatprep.subr.bf16.mxu0 0
        %1081 = vmatpush1.bf16.msra.mxu0 0
        %1082 = vmatprep.subr.bf16.mxu0 0
        %1083 = vmatpush1.bf16.msra.mxu0 0
        %1084 = vmatprep.subr.bf16.mxu0 0
        %1085 = vmatpush1.bf16.msra.mxu0 %v392
        %1086 = vmatprep.subr.bf16.mxu0 0
        %1087 = vmatpush1.bf16.msra.mxu0 %v377
        %1088 = vmatprep.subr.bf16.mxu0 0
        %1089 = vmatpush2.bf16.msra.mxu0 0
        %1090 = vmatprep.subr.bf16.mxu0 0
        %1091 = vmatpush2.bf16.msra.mxu0 0
        %1092 = vmatprep.subr.bf16.mxu0 0
        %1093 = vmatpush2.bf16.msra.mxu0 0
        %1094 = vmatprep.subr.bf16.mxu0 0
        %1095 = vmatpush2.bf16.msra.mxu0 0
        %1096 = vmatprep.subr.bf16.mxu0 0
        %1097 = vmatpush2.bf16.msra.mxu0 0
        %1098 = vmatprep.subr.bf16.mxu0 0
        %1099 = vmatpush2.bf16.msra.mxu0 0
        %1100 = vmatprep.subr.bf16.mxu0 0
        %1101 = vmatpush2.bf16.msra.mxu0 0
        %1102 = vmatprep.subr.bf16.mxu0 0
        %1103 = vmatpush2.bf16.msra.mxu0 0
        %1104 = vmatprep.mubr.bf16.mxu0 0
        %1105 = vmatmul.mubr.bf16.gmra.mxu0 %v1067
        %v1106 = vpop.f32.mrf.mxu0
        %v1107 = vadd.f32 %v355, %v1106
        %v1108 = vpop.f32.mrf.mxu0
        %v1109 = vpop.f32.mrf.mxu0
        %v1110 = vadd.f32 %v355, %v1109
        %v1111 = vpop.f32.mrf.mxu0
        %1112 = vmatprep.mubr.bf16.mxu0 0
        %1113 = vmatmul.mubr.bf16.gmra.mxu0 %v1070
        %v1114 = vpop.f32.mrf.mxu0
        %v1115 = vadd.f32 %v355, %v1114
        %v1116 = vpop.f32.mrf.mxu0
        %v1117 = vpop.f32.mrf.mxu0
        %v1118 = vadd.f32 %v355, %v1117
        %v1119 = vpop.f32.mrf.mxu0
        %1120 = vdwg.mxu0
        %v1121 = vmax.f32 %v1107, 0.0
        %v1122 = vmax.f32 %v1110, 0.0
        %v1123 = vmax.f32 %v1115, 0.0
        %v1124 = vmax.f32 %v1118, 0.0
        %v1125 = vpack.c.bf16 %v1122, %v1121
        %v1126 = vpack.c.bf16 %v1124, %v1123
        %v1128 = vsel %vm455, %v1125, 0
        %v1131 = vsel %vm455, %v1126, 0
        %1133 = vmatprep.subr.bf16.mxu0 0
        %1134 = vmatpush1.bf16.msra.mxu0 0
        %1135 = vmatprep.subr.bf16.mxu0 0
        %1136 = vmatpush1.bf16.msra.mxu0 0
        %1137 = vmatprep.subr.bf16.mxu0 0
        %1138 = vmatpush1.bf16.msra.mxu0 0
        %1139 = vmatprep.subr.bf16.mxu0 0
        %1140 = vmatpush1.bf16.msra.mxu0 0
        %1141 = vmatprep.subr.bf16.mxu0 0
        %1142 = vmatpush1.bf16.msra.mxu0 0
        %1143 = vmatprep.subr.bf16.mxu0 0
        %1144 = vmatpush1.bf16.msra.mxu0 0
        %1145 = vmatprep.subr.bf16.mxu0 0
        %1146 = vmatpush1.bf16.msra.mxu0 0
        %1147 = vmatprep.subr.bf16.mxu0 0
        %1148 = vmatpush1.bf16.msra.mxu0 %v453
        %1149 = vmatprep.subr.bf16.mxu0 0
        %1150 = vmatpush2.bf16.msra.mxu0 0
        %1151 = vmatprep.subr.bf16.mxu0 0
        %1152 = vmatpush2.bf16.msra.mxu0 0
        %1153 = vmatprep.subr.bf16.mxu0 0
        %1154 = vmatpush2.bf16.msra.mxu0 0
        %1155 = vmatprep.subr.bf16.mxu0 0
        %1156 = vmatpush2.bf16.msra.mxu0 0
        %1157 = vmatprep.subr.bf16.mxu0 0
        %1158 = vmatpush2.bf16.msra.mxu0 0
        %1159 = vmatprep.subr.bf16.mxu0 0
        %1160 = vmatpush2.bf16.msra.mxu0 0
        %1161 = vmatprep.subr.bf16.mxu0 0
        %1162 = vmatpush2.bf16.msra.mxu0 0
        %1163 = vmatprep.subr.bf16.mxu0 0
        %1164 = vmatpush2.bf16.msra.mxu0 0
        %1165 = vmatprep.mubr.bf16.mxu0 0
        %1166 = vmatmul.mubr.bf16.gmra.mxu0 %v1128
        %v1167 = vpop.f32.mrf.mxu0
        %v1168 = vadd.f32 0.0, %v1167
        %v1169 = vpop.f32.mrf.mxu0
        %v1170 = vpop.f32.mrf.mxu0
        %v1171 = vadd.f32 0.0, %v1170
        %v1172 = vpop.f32.mrf.mxu0
        %1173 = vmatprep.mubr.bf16.mxu0 0
        %1174 = vmatmul.mubr.bf16.gmra.mxu0 %v1131
        %v1175 = vpop.f32.mrf.mxu0
        %v1176 = vadd.f32 0.0, %v1175
        %v1177 = vpop.f32.mrf.mxu0
        %v1178 = vpop.f32.mrf.mxu0
        %v1179 = vadd.f32 0.0, %v1178
        %v1180 = vpop.f32.mrf.mxu0
        %1181 = vdwg.mxu0
        %v1182 = vmax.f32 %v1047, %v1168
        %v1183 = vmax.f32 %v1048, %v1171
        %v1184 = vmax.f32 %v1049, %v1176
        %v1185 = vmax.f32 %v1050, %v1179
        %s1186 = scalar_lea.vmem %s331, 96
        %v1187 = vld [vmem:[%s1186] sm:$0xf]
        %v1188 = vld [vmem:[%s1186 + $0x4] sm:$0xf]
        %v1189 = vld [vmem:[%s1186 + $0x8] sm:$0xf]
        %v1190 = vld [vmem:[%s1186 + $0xc] sm:$0xf]
        %v1195 = vunpack.c.l.b16 %v1187
        %v1196 = vunpack.c.l.b16 %v1188
        %v1197 = vunpack.c.l.b16 %v1189
        %v1198 = vunpack.c.l.b16 %v1190
        %v1199 = vpack.c.b16 %v1196, %v1195
        %v1200 = vpack.c.b16 %v1198, %v1197
        %v1202 = vsel %vm380, %v1199, 0
        %v1205 = vsel %vm380, %v1200, 0
        %1207 = vmatprep.subr.bf16.mxu0 0
        %1208 = vmatpush1.bf16.msra.mxu0 0
        %1209 = vmatprep.subr.bf16.mxu0 0
        %1210 = vmatpush1.bf16.msra.mxu0 0
        %1211 = vmatprep.subr.bf16.mxu0 0
        %1212 = vmatpush1.bf16.msra.mxu0 0
        %1213 = vmatprep.subr.bf16.mxu0 0
        %1214 = vmatpush1.bf16.msra.mxu0 0
        %1215 = vmatprep.subr.bf16.mxu0 0
        %1216 = vmatpush1.bf16.msra.mxu0 0
        %1217 = vmatprep.subr.bf16.mxu0 0
        %1218 = vmatpush1.bf16.msra.mxu0 0
        %1219 = vmatprep.subr.bf16.mxu0 0
        %1220 = vmatpush1.bf16.msra.mxu0 %v392
        %1221 = vmatprep.subr.bf16.mxu0 0
        %1222 = vmatpush1.bf16.msra.mxu0 %v377
        %1223 = vmatprep.subr.bf16.mxu0 0
        %1224 = vmatpush2.bf16.msra.mxu0 0
        %1225 = vmatprep.subr.bf16.mxu0 0
        %1226 = vmatpush2.bf16.msra.mxu0 0
        %1227 = vmatprep.subr.bf16.mxu0 0
        %1228 = vmatpush2.bf16.msra.mxu0 0
        %1229 = vmatprep.subr.bf16.mxu0 0
        %1230 = vmatpush2.bf16.msra.mxu0 0
        %1231 = vmatprep.subr.bf16.mxu0 0
        %1232 = vmatpush2.bf16.msra.mxu0 0
        %1233 = vmatprep.subr.bf16.mxu0 0
        %1234 = vmatpush2.bf16.msra.mxu0 0
        %1235 = vmatprep.subr.bf16.mxu0 0
        %1236 = vmatpush2.bf16.msra.mxu0 0
        %1237 = vmatprep.subr.bf16.mxu0 0
        %1238 = vmatpush2.bf16.msra.mxu0 0
        %1239 = vmatprep.mubr.bf16.mxu0 0
        %1240 = vmatmul.mubr.bf16.gmra.mxu0 %v1202
        %v1241 = vpop.f32.mrf.mxu0
        %v1242 = vadd.f32 %v355, %v1241
        %v1243 = vpop.f32.mrf.mxu0
        %v1244 = vpop.f32.mrf.mxu0
        %v1245 = vadd.f32 %v355, %v1244
        %v1246 = vpop.f32.mrf.mxu0
        %1247 = vmatprep.mubr.bf16.mxu0 0
        %1248 = vmatmul.mubr.bf16.gmra.mxu0 %v1205
        %v1249 = vpop.f32.mrf.mxu0
        %v1250 = vadd.f32 %v355, %v1249
        %v1251 = vpop.f32.mrf.mxu0
        %v1252 = vpop.f32.mrf.mxu0
        %v1253 = vadd.f32 %v355, %v1252
        %v1254 = vpop.f32.mrf.mxu0
        %1255 = vdwg.mxu0
        %v1256 = vmax.f32 %v1242, 0.0
        %v1257 = vmax.f32 %v1245, 0.0
        %v1258 = vmax.f32 %v1250, 0.0
        %v1259 = vmax.f32 %v1253, 0.0
        %v1260 = vpack.c.bf16 %v1257, %v1256
        %v1261 = vpack.c.bf16 %v1259, %v1258
        %v1263 = vsel %vm455, %v1260, 0
        %v1266 = vsel %vm455, %v1261, 0
        %1268 = vmatprep.subr.bf16.mxu0 0
        %1269 = vmatpush1.bf16.msra.mxu0 0
        %1270 = vmatprep.subr.bf16.mxu0 0
        %1271 = vmatpush1.bf16.msra.mxu0 0
        %1272 = vmatprep.subr.bf16.mxu0 0
        %1273 = vmatpush1.bf16.msra.mxu0 0
        %1274 = vmatprep.subr.bf16.mxu0 0
        %1275 = vmatpush1.bf16.msra.mxu0 0
        %1276 = vmatprep.subr.bf16.mxu0 0
        %1277 = vmatpush1.bf16.msra.mxu0 0
        %1278 = vmatprep.subr.bf16.mxu0 0
        %1279 = vmatpush1.bf16.msra.mxu0 0
        %1280 = vmatprep.subr.bf16.mxu0 0
        %1281 = vmatpush1.bf16.msra.mxu0 0
        %1282 = vmatprep.subr.bf16.mxu0 0
        %1283 = vmatpush1.bf16.msra.mxu0 %v453
        %1284 = vmatprep.subr.bf16.mxu0 0
        %1285 = vmatpush2.bf16.msra.mxu0 0
        %1286 = vmatprep.subr.bf16.mxu0 0
        %1287 = vmatpush2.bf16.msra.mxu0 0
        %1288 = vmatprep.subr.bf16.mxu0 0
        %1289 = vmatpush2.bf16.msra.mxu0 0
        %1290 = vmatprep.subr.bf16.mxu0 0
        %1291 = vmatpush2.bf16.msra.mxu0 0
        %1292 = vmatprep.subr.bf16.mxu0 0
        %1293 = vmatpush2.bf16.msra.mxu0 0
        %1294 = vmatprep.subr.bf16.mxu0 0
        %1295 = vmatpush2.bf16.msra.mxu0 0
        %1296 = vmatprep.subr.bf16.mxu0 0
        %1297 = vmatpush2.bf16.msra.mxu0 0
        %1298 = vmatprep.subr.bf16.mxu0 0
        %1299 = vmatpush2.bf16.msra.mxu0 0
        %1300 = vmatprep.mubr.bf16.mxu0 0
        %1301 = vmatmul.mubr.bf16.gmra.mxu0 %v1263
        %v1302 = vpop.f32.mrf.mxu0
        %v1303 = vadd.f32 0.0, %v1302
        %v1304 = vpop.f32.mrf.mxu0
        %v1305 = vpop.f32.mrf.mxu0
        %v1306 = vadd.f32 0.0, %v1305
        %v1307 = vpop.f32.mrf.mxu0
        %1308 = vmatprep.mubr.bf16.mxu0 0
        %1309 = vmatmul.mubr.bf16.gmra.mxu0 %v1266
        %v1310 = vpop.f32.mrf.mxu0
        %v1311 = vadd.f32 0.0, %v1310
        %v1312 = vpop.f32.mrf.mxu0
        %v1313 = vpop.f32.mrf.mxu0
        %v1314 = vadd.f32 0.0, %v1313
        %v1315 = vpop.f32.mrf.mxu0
        %1316 = vdwg.mxu0
        %v1317 = vmax.f32 %v1182, %v1303
        %v1318 = vmax.f32 %v1183, %v1306
        %v1319 = vmax.f32 %v1184, %v1311
        %v1320 = vmax.f32 %v1185, %v1314
        %s1321 = scalar_lea.vmem %s331, 112
        %v1322 = vld [vmem:[%s1321] sm:$0xf]
        %v1323 = vld [vmem:[%s1321 + $0x4] sm:$0xf]
        %v1324 = vld [vmem:[%s1321 + $0x8] sm:$0xf]
        %v1325 = vld [vmem:[%s1321 + $0xc] sm:$0xf]
        %v1330 = vunpack.c.l.b16 %v1322
        %v1331 = vunpack.c.l.b16 %v1323
        %v1332 = vunpack.c.l.b16 %v1324
        %v1333 = vunpack.c.l.b16 %v1325
        %v1334 = vpack.c.b16 %v1331, %v1330
        %v1335 = vpack.c.b16 %v1333, %v1332
        %v1337 = vsel %vm380, %v1334, 0
        %v1340 = vsel %vm380, %v1335, 0
        %1342 = vmatprep.subr.bf16.mxu0 0
        %1343 = vmatpush1.bf16.msra.mxu0 0
        %1344 = vmatprep.subr.bf16.mxu0 0
        %1345 = vmatpush1.bf16.msra.mxu0 0
        %1346 = vmatprep.subr.bf16.mxu0 0
        %1347 = vmatpush1.bf16.msra.mxu0 0
        %1348 = vmatprep.subr.bf16.mxu0 0
        %1349 = vmatpush1.bf16.msra.mxu0 0
        %1350 = vmatprep.subr.bf16.mxu0 0
        %1351 = vmatpush1.bf16.msra.mxu0 0
        %1352 = vmatprep.subr.bf16.mxu0 0
        %1353 = vmatpush1.bf16.msra.mxu0 0
        %1354 = vmatprep.subr.bf16.mxu0 0
        %1355 = vmatpush1.bf16.msra.mxu0 %v392
        %1356 = vmatprep.subr.bf16.mxu0 0
        %1357 = vmatpush1.bf16.msra.mxu0 %v377
        %1358 = vmatprep.subr.bf16.mxu0 0
        %1359 = vmatpush2.bf16.msra.mxu0 0
        %1360 = vmatprep.subr.bf16.mxu0 0
        %1361 = vmatpush2.bf16.msra.mxu0 0
        %1362 = vmatprep.subr.bf16.mxu0 0
        %1363 = vmatpush2.bf16.msra.mxu0 0
        %1364 = vmatprep.subr.bf16.mxu0 0
        %1365 = vmatpush2.bf16.msra.mxu0 0
        %1366 = vmatprep.subr.bf16.mxu0 0
        %1367 = vmatpush2.bf16.msra.mxu0 0
        %1368 = vmatprep.subr.bf16.mxu0 0
        %1369 = vmatpush2.bf16.msra.mxu0 0
        %1370 = vmatprep.subr.bf16.mxu0 0
        %1371 = vmatpush2.bf16.msra.mxu0 0
        %1372 = vmatprep.subr.bf16.mxu0 0
        %1373 = vmatpush2.bf16.msra.mxu0 0
        %1374 = vmatprep.mubr.bf16.mxu0 0
        %1375 = vmatmul.mubr.bf16.gmra.mxu0 %v1337
        %v1376 = vpop.f32.mrf.mxu0
        %v1377 = vadd.f32 %v355, %v1376
        %v1378 = vpop.f32.mrf.mxu0
        %v1379 = vpop.f32.mrf.mxu0
        %v1380 = vadd.f32 %v355, %v1379
        %v1381 = vpop.f32.mrf.mxu0
        %1382 = vmatprep.mubr.bf16.mxu0 0
        %1383 = vmatmul.mubr.bf16.gmra.mxu0 %v1340
        %v1384 = vpop.f32.mrf.mxu0
        %v1385 = vadd.f32 %v355, %v1384
        %v1386 = vpop.f32.mrf.mxu0
        %v1387 = vpop.f32.mrf.mxu0
        %v1388 = vadd.f32 %v355, %v1387
        %v1389 = vpop.f32.mrf.mxu0
        %1390 = vdwg.mxu0
        %v1391 = vmax.f32 %v1377, 0.0
        %v1392 = vmax.f32 %v1380, 0.0
        %v1393 = vmax.f32 %v1385, 0.0
        %v1394 = vmax.f32 %v1388, 0.0
        %v1395 = vpack.c.bf16 %v1392, %v1391
        %v1396 = vpack.c.bf16 %v1394, %v1393
        %v1398 = vsel %vm455, %v1395, 0
        %v1401 = vsel %vm455, %v1396, 0
        %1403 = vmatprep.subr.bf16.mxu0 0
        %1404 = vmatpush1.bf16.msra.mxu0 0
        %1405 = vmatprep.subr.bf16.mxu0 0
        %1406 = vmatpush1.bf16.msra.mxu0 0
        %1407 = vmatprep.subr.bf16.mxu0 0
        %1408 = vmatpush1.bf16.msra.mxu0 0
        %1409 = vmatprep.subr.bf16.mxu0 0
        %1410 = vmatpush1.bf16.msra.mxu0 0
        %1411 = vmatprep.subr.bf16.mxu0 0
        %1412 = vmatpush1.bf16.msra.mxu0 0
        %1413 = vmatprep.subr.bf16.mxu0 0
        %1414 = vmatpush1.bf16.msra.mxu0 0
        %1415 = vmatprep.subr.bf16.mxu0 0
        %1416 = vmatpush1.bf16.msra.mxu0 0
        %1417 = vmatprep.subr.bf16.mxu0 0
        %1418 = vmatpush1.bf16.msra.mxu0 %v453
        %1419 = vmatprep.subr.bf16.mxu0 0
        %1420 = vmatpush2.bf16.msra.mxu0 0
        %1421 = vmatprep.subr.bf16.mxu0 0
        %1422 = vmatpush2.bf16.msra.mxu0 0
        %1423 = vmatprep.subr.bf16.mxu0 0
        %1424 = vmatpush2.bf16.msra.mxu0 0
        %1425 = vmatprep.subr.bf16.mxu0 0
        %1426 = vmatpush2.bf16.msra.mxu0 0
        %1427 = vmatprep.subr.bf16.mxu0 0
        %1428 = vmatpush2.bf16.msra.mxu0 0
        %1429 = vmatprep.subr.bf16.mxu0 0
        %1430 = vmatpush2.bf16.msra.mxu0 0
        %1431 = vmatprep.subr.bf16.mxu0 0
        %1432 = vmatpush2.bf16.msra.mxu0 0
        %1433 = vmatprep.subr.bf16.mxu0 0
        %1434 = vmatpush2.bf16.msra.mxu0 0
        %1435 = vmatprep.mubr.bf16.mxu0 0
        %1436 = vmatmul.mubr.bf16.gmra.mxu0 %v1398
        %v1437 = vpop.f32.mrf.mxu0
        %v1438 = vadd.f32 0.0, %v1437
        %v1439 = vpop.f32.mrf.mxu0
        %v1440 = vpop.f32.mrf.mxu0
        %v1441 = vadd.f32 0.0, %v1440
        %v1442 = vpop.f32.mrf.mxu0
        %1443 = vmatprep.mubr.bf16.mxu0 0
        %1444 = vmatmul.mubr.bf16.gmra.mxu0 %v1401
        %v1445 = vpop.f32.mrf.mxu0
        %v1446 = vadd.f32 0.0, %v1445
        %v1447 = vpop.f32.mrf.mxu0
        %v1448 = vpop.f32.mrf.mxu0
        %v1449 = vadd.f32 0.0, %v1448
        %v1450 = vpop.f32.mrf.mxu0
        %1451 = vdwg.mxu0
        %v1452 = vmax.f32 %v1317, %v1438
        %v1453 = vmax.f32 %v1318, %v1441
        %v1454 = vmax.f32 %v1319, %v1446
        %v1455 = vmax.f32 %v1320, %v1449
        %s1456 = scalar_lea.vmem %s331, 128
        %v1457 = vld [vmem:[%s1456] sm:$0xf]
        %v1458 = vld [vmem:[%s1456 + $0x4] sm:$0xf]
        %v1459 = vld [vmem:[%s1456 + $0x8] sm:$0xf]
        %v1460 = vld [vmem:[%s1456 + $0xc] sm:$0xf]
        %v1465 = vunpack.c.l.b16 %v1457
        %v1466 = vunpack.c.l.b16 %v1458
        %v1467 = vunpack.c.l.b16 %v1459
        %v1468 = vunpack.c.l.b16 %v1460
        %v1469 = vpack.c.b16 %v1466, %v1465
        %v1470 = vpack.c.b16 %v1468, %v1467
        %v1472 = vsel %vm380, %v1469, 0
        %v1475 = vsel %vm380, %v1470, 0
        %1477 = vmatprep.subr.bf16.mxu0 0
        %1478 = vmatpush1.bf16.msra.mxu0 0
        %1479 = vmatprep.subr.bf16.mxu0 0
        %1480 = vmatpush1.bf16.msra.mxu0 0
        %1481 = vmatprep.subr.bf16.mxu0 0
        %1482 = vmatpush1.bf16.msra.mxu0 0
        %1483 = vmatprep.subr.bf16.mxu0 0
        %1484 = vmatpush1.bf16.msra.mxu0 0
        %1485 = vmatprep.subr.bf16.mxu0 0
        %1486 = vmatpush1.bf16.msra.mxu0 0
        %1487 = vmatprep.subr.bf16.mxu0 0
        %1488 = vmatpush1.bf16.msra.mxu0 0
        %1489 = vmatprep.subr.bf16.mxu0 0
        %1490 = vmatpush1.bf16.msra.mxu0 %v392
        %1491 = vmatprep.subr.bf16.mxu0 0
        %1492 = vmatpush1.bf16.msra.mxu0 %v377
        %1493 = vmatprep.subr.bf16.mxu0 0
        %1494 = vmatpush2.bf16.msra.mxu0 0
        %1495 = vmatprep.subr.bf16.mxu0 0
        %1496 = vmatpush2.bf16.msra.mxu0 0
        %1497 = vmatprep.subr.bf16.mxu0 0
        %1498 = vmatpush2.bf16.msra.mxu0 0
        %1499 = vmatprep.subr.bf16.mxu0 0
        %1500 = vmatpush2.bf16.msra.mxu0 0
        %1501 = vmatprep.subr.bf16.mxu0 0
        %1502 = vmatpush2.bf16.msra.mxu0 0
        %1503 = vmatprep.subr.bf16.mxu0 0
        %1504 = vmatpush2.bf16.msra.mxu0 0
        %1505 = vmatprep.subr.bf16.mxu0 0
        %1506 = vmatpush2.bf16.msra.mxu0 0
        %1507 = vmatprep.subr.bf16.mxu0 0
        %1508 = vmatpush2.bf16.msra.mxu0 0
        %1509 = vmatprep.mubr.bf16.mxu0 0
        %1510 = vmatmul.mubr.bf16.gmra.mxu0 %v1472
        %v1511 = vpop.f32.mrf.mxu0
        %v1512 = vadd.f32 %v355, %v1511
        %v1513 = vpop.f32.mrf.mxu0
        %v1514 = vpop.f32.mrf.mxu0
        %v1515 = vadd.f32 %v355, %v1514
        %v1516 = vpop.f32.mrf.mxu0
        %1517 = vmatprep.mubr.bf16.mxu0 0
        %1518 = vmatmul.mubr.bf16.gmra.mxu0 %v1475
        %v1519 = vpop.f32.mrf.mxu0
        %v1520 = vadd.f32 %v355, %v1519
        %v1521 = vpop.f32.mrf.mxu0
        %v1522 = vpop.f32.mrf.mxu0
        %v1523 = vadd.f32 %v355, %v1522
        %v1524 = vpop.f32.mrf.mxu0
        %1525 = vdwg.mxu0
        %v1526 = vmax.f32 %v1512, 0.0
        %v1527 = vmax.f32 %v1515, 0.0
        %v1528 = vmax.f32 %v1520, 0.0
        %v1529 = vmax.f32 %v1523, 0.0
        %v1530 = vpack.c.bf16 %v1527, %v1526
        %v1531 = vpack.c.bf16 %v1529, %v1528
        %v1533 = vsel %vm455, %v1530, 0
        %v1536 = vsel %vm455, %v1531, 0
        %1538 = vmatprep.subr.bf16.mxu0 0
        %1539 = vmatpush1.bf16.msra.mxu0 0
        %1540 = vmatprep.subr.bf16.mxu0 0
        %1541 = vmatpush1.bf16.msra.mxu0 0
        %1542 = vmatprep.subr.bf16.mxu0 0
        %1543 = vmatpush1.bf16.msra.mxu0 0
        %1544 = vmatprep.subr.bf16.mxu0 0
        %1545 = vmatpush1.bf16.msra.mxu0 0
        %1546 = vmatprep.subr.bf16.mxu0 0
        %1547 = vmatpush1.bf16.msra.mxu0 0
        %1548 = vmatprep.subr.bf16.mxu0 0
        %1549 = vmatpush1.bf16.msra.mxu0 0
        %1550 = vmatprep.subr.bf16.mxu0 0
        %1551 = vmatpush1.bf16.msra.mxu0 0
        %1552 = vmatprep.subr.bf16.mxu0 0
        %1553 = vmatpush1.bf16.msra.mxu0 %v453
        %1554 = vmatprep.subr.bf16.mxu0 0
        %1555 = vmatpush2.bf16.msra.mxu0 0
        %1556 = vmatprep.subr.bf16.mxu0 0
        %1557 = vmatpush2.bf16.msra.mxu0 0
        %1558 = vmatprep.subr.bf16.mxu0 0
        %1559 = vmatpush2.bf16.msra.mxu0 0
        %1560 = vmatprep.subr.bf16.mxu0 0
        %1561 = vmatpush2.bf16.msra.mxu0 0
        %1562 = vmatprep.subr.bf16.mxu0 0
        %1563 = vmatpush2.bf16.msra.mxu0 0
        %1564 = vmatprep.subr.bf16.mxu0 0
        %1565 = vmatpush2.bf16.msra.mxu0 0
        %1566 = vmatprep.subr.bf16.mxu0 0
        %1567 = vmatpush2.bf16.msra.mxu0 0
        %1568 = vmatprep.subr.bf16.mxu0 0
        %1569 = vmatpush2.bf16.msra.mxu0 0
        %1570 = vmatprep.mubr.bf16.mxu0 0
        %1571 = vmatmul.mubr.bf16.gmra.mxu0 %v1533
        %v1572 = vpop.f32.mrf.mxu0
        %v1573 = vadd.f32 0.0, %v1572
        %v1574 = vpop.f32.mrf.mxu0
        %v1575 = vpop.f32.mrf.mxu0
        %v1576 = vadd.f32 0.0, %v1575
        %v1577 = vpop.f32.mrf.mxu0
        %1578 = vmatprep.mubr.bf16.mxu0 0
        %1579 = vmatmul.mubr.bf16.gmra.mxu0 %v1536
        %v1580 = vpop.f32.mrf.mxu0
        %v1581 = vadd.f32 0.0, %v1580
        %v1582 = vpop.f32.mrf.mxu0
        %v1583 = vpop.f32.mrf.mxu0
        %v1584 = vadd.f32 0.0, %v1583
        %v1585 = vpop.f32.mrf.mxu0
        %1586 = vdwg.mxu0
        %v1587 = vmax.f32 %v1452, %v1573
        %v1588 = vmax.f32 %v1453, %v1576
        %v1589 = vmax.f32 %v1454, %v1581
        %v1590 = vmax.f32 %v1455, %v1584
        %s1591 = scalar_lea.vmem %s331, 144
        %v1592 = vld [vmem:[%s1591] sm:$0xf]
        %v1593 = vld [vmem:[%s1591 + $0x4] sm:$0xf]
        %v1594 = vld [vmem:[%s1591 + $0x8] sm:$0xf]
        %v1595 = vld [vmem:[%s1591 + $0xc] sm:$0xf]
        %v1600 = vunpack.c.l.b16 %v1592
        %v1601 = vunpack.c.l.b16 %v1593
        %v1602 = vunpack.c.l.b16 %v1594
        %v1603 = vunpack.c.l.b16 %v1595
        %v1604 = vpack.c.b16 %v1601, %v1600
        %v1605 = vpack.c.b16 %v1603, %v1602
        %v1607 = vsel %vm380, %v1604, 0
        %v1610 = vsel %vm380, %v1605, 0
        %1612 = vmatprep.subr.bf16.mxu0 0
        %1613 = vmatpush1.bf16.msra.mxu0 0
        %1614 = vmatprep.subr.bf16.mxu0 0
        %1615 = vmatpush1.bf16.msra.mxu0 0
        %1616 = vmatprep.subr.bf16.mxu0 0
        %1617 = vmatpush1.bf16.msra.mxu0 0
        %1618 = vmatprep.subr.bf16.mxu0 0
        %1619 = vmatpush1.bf16.msra.mxu0 0
        %1620 = vmatprep.subr.bf16.mxu0 0
        %1621 = vmatpush1.bf16.msra.mxu0 0
        %1622 = vmatprep.subr.bf16.mxu0 0
        %1623 = vmatpush1.bf16.msra.mxu0 0
        %1624 = vmatprep.subr.bf16.mxu0 0
        %1625 = vmatpush1.bf16.msra.mxu0 %v392
        %1626 = vmatprep.subr.bf16.mxu0 0
        %1627 = vmatpush1.bf16.msra.mxu0 %v377
        %1628 = vmatprep.subr.bf16.mxu0 0
        %1629 = vmatpush2.bf16.msra.mxu0 0
        %1630 = vmatprep.subr.bf16.mxu0 0
        %1631 = vmatpush2.bf16.msra.mxu0 0
        %1632 = vmatprep.subr.bf16.mxu0 0
        %1633 = vmatpush2.bf16.msra.mxu0 0
        %1634 = vmatprep.subr.bf16.mxu0 0
        %1635 = vmatpush2.bf16.msra.mxu0 0
        %1636 = vmatprep.subr.bf16.mxu0 0
        %1637 = vmatpush2.bf16.msra.mxu0 0
        %1638 = vmatprep.subr.bf16.mxu0 0
        %1639 = vmatpush2.bf16.msra.mxu0 0
        %1640 = vmatprep.subr.bf16.mxu0 0
        %1641 = vmatpush2.bf16.msra.mxu0 0
        %1642 = vmatprep.subr.bf16.mxu0 0
        %1643 = vmatpush2.bf16.msra.mxu0 0
        %1644 = vmatprep.mubr.bf16.mxu0 0
        %1645 = vmatmul.mubr.bf16.gmra.mxu0 %v1607
        %v1646 = vpop.f32.mrf.mxu0
        %v1647 = vadd.f32 %v355, %v1646
        %v1648 = vpop.f32.mrf.mxu0
        %v1649 = vpop.f32.mrf.mxu0
        %v1650 = vadd.f32 %v355, %v1649
        %v1651 = vpop.f32.mrf.mxu0
        %1652 = vmatprep.mubr.bf16.mxu0 0
        %1653 = vmatmul.mubr.bf16.gmra.mxu0 %v1610
        %v1654 = vpop.f32.mrf.mxu0
        %v1655 = vadd.f32 %v355, %v1654
        %v1656 = vpop.f32.mrf.mxu0
        %v1657 = vpop.f32.mrf.mxu0
        %v1658 = vadd.f32 %v355, %v1657
        %v1659 = vpop.f32.mrf.mxu0
        %1660 = vdwg.mxu0
        %v1661 = vmax.f32 %v1647, 0.0
        %v1662 = vmax.f32 %v1650, 0.0
        %v1663 = vmax.f32 %v1655, 0.0
        %v1664 = vmax.f32 %v1658, 0.0
        %v1665 = vpack.c.bf16 %v1662, %v1661
        %v1666 = vpack.c.bf16 %v1664, %v1663
        %v1668 = vsel %vm455, %v1665, 0
        %v1671 = vsel %vm455, %v1666, 0
        %1673 = vmatprep.subr.bf16.mxu0 0
        %1674 = vmatpush1.bf16.msra.mxu0 0
        %1675 = vmatprep.subr.bf16.mxu0 0
        %1676 = vmatpush1.bf16.msra.mxu0 0
        %1677 = vmatprep.subr.bf16.mxu0 0
        %1678 = vmatpush1.bf16.msra.mxu0 0
        %1679 = vmatprep.subr.bf16.mxu0 0
        %1680 = vmatpush1.bf16.msra.mxu0 0
        %1681 = vmatprep.subr.bf16.mxu0 0
        %1682 = vmatpush1.bf16.msra.mxu0 0
        %1683 = vmatprep.subr.bf16.mxu0 0
        %1684 = vmatpush1.bf16.msra.mxu0 0
        %1685 = vmatprep.subr.bf16.mxu0 0
        %1686 = vmatpush1.bf16.msra.mxu0 0
        %1687 = vmatprep.subr.bf16.mxu0 0
        %1688 = vmatpush1.bf16.msra.mxu0 %v453
        %1689 = vmatprep.subr.bf16.mxu0 0
        %1690 = vmatpush2.bf16.msra.mxu0 0
        %1691 = vmatprep.subr.bf16.mxu0 0
        %1692 = vmatpush2.bf16.msra.mxu0 0
        %1693 = vmatprep.subr.bf16.mxu0 0
        %1694 = vmatpush2.bf16.msra.mxu0 0
        %1695 = vmatprep.subr.bf16.mxu0 0
        %1696 = vmatpush2.bf16.msra.mxu0 0
        %1697 = vmatprep.subr.bf16.mxu0 0
        %1698 = vmatpush2.bf16.msra.mxu0 0
        %1699 = vmatprep.subr.bf16.mxu0 0
        %1700 = vmatpush2.bf16.msra.mxu0 0
        %1701 = vmatprep.subr.bf16.mxu0 0
        %1702 = vmatpush2.bf16.msra.mxu0 0
        %1703 = vmatprep.subr.bf16.mxu0 0
        %1704 = vmatpush2.bf16.msra.mxu0 0
        %1705 = vmatprep.mubr.bf16.mxu0 0
        %1706 = vmatmul.mubr.bf16.gmra.mxu0 %v1668
        %v1707 = vpop.f32.mrf.mxu0
        %v1708 = vadd.f32 0.0, %v1707
        %v1709 = vpop.f32.mrf.mxu0
        %v1710 = vpop.f32.mrf.mxu0
        %v1711 = vadd.f32 0.0, %v1710
        %v1712 = vpop.f32.mrf.mxu0
        %1713 = vmatprep.mubr.bf16.mxu0 0
        %1714 = vmatmul.mubr.bf16.gmra.mxu0 %v1671
        %v1715 = vpop.f32.mrf.mxu0
        %v1716 = vadd.f32 0.0, %v1715
        %v1717 = vpop.f32.mrf.mxu0
        %v1718 = vpop.f32.mrf.mxu0
        %v1719 = vadd.f32 0.0, %v1718
        %v1720 = vpop.f32.mrf.mxu0
        %1721 = vdwg.mxu0
        %v1722 = vmax.f32 %v1587, %v1708
        %v1723 = vmax.f32 %v1588, %v1711
        %v1724 = vmax.f32 %v1589, %v1716
        %v1725 = vmax.f32 %v1590, %v1719
        %s1726 = scalar_lea.vmem %s331, 160
        %v1727 = vld [vmem:[%s1726] sm:$0xf]
        %v1728 = vld [vmem:[%s1726 + $0x4] sm:$0xf]
        %v1729 = vld [vmem:[%s1726 + $0x8] sm:$0xf]
        %v1730 = vld [vmem:[%s1726 + $0xc] sm:$0xf]
        %v1735 = vunpack.c.l.b16 %v1727
        %v1736 = vunpack.c.l.b16 %v1728
        %v1737 = vunpack.c.l.b16 %v1729
        %v1738 = vunpack.c.l.b16 %v1730
        %v1739 = vpack.c.b16 %v1736, %v1735
        %v1740 = vpack.c.b16 %v1738, %v1737
        %v1742 = vsel %vm380, %v1739, 0
        %v1745 = vsel %vm380, %v1740, 0
        %1747 = vmatprep.subr.bf16.mxu0 0
        %1748 = vmatpush1.bf16.msra.mxu0 0
        %1749 = vmatprep.subr.bf16.mxu0 0
        %1750 = vmatpush1.bf16.msra.mxu0 0
        %1751 = vmatprep.subr.bf16.mxu0 0
        %1752 = vmatpush1.bf16.msra.mxu0 0
        %1753 = vmatprep.subr.bf16.mxu0 0
        %1754 = vmatpush1.bf16.msra.mxu0 0
        %1755 = vmatprep.subr.bf16.mxu0 0
        %1756 = vmatpush1.bf16.msra.mxu0 0
        %1757 = vmatprep.subr.bf16.mxu0 0
        %1758 = vmatpush1.bf16.msra.mxu0 0
        %1759 = vmatprep.subr.bf16.mxu0 0
        %1760 = vmatpush1.bf16.msra.mxu0 %v392
        %1761 = vmatprep.subr.bf16.mxu0 0
        %1762 = vmatpush1.bf16.msra.mxu0 %v377
        %1763 = vmatprep.subr.bf16.mxu0 0
        %1764 = vmatpush2.bf16.msra.mxu0 0
        %1765 = vmatprep.subr.bf16.mxu0 0
        %1766 = vmatpush2.bf16.msra.mxu0 0
        %1767 = vmatprep.subr.bf16.mxu0 0
        %1768 = vmatpush2.bf16.msra.mxu0 0
        %1769 = vmatprep.subr.bf16.mxu0 0
        %1770 = vmatpush2.bf16.msra.mxu0 0
        %1771 = vmatprep.subr.bf16.mxu0 0
        %1772 = vmatpush2.bf16.msra.mxu0 0
        %1773 = vmatprep.subr.bf16.mxu0 0
        %1774 = vmatpush2.bf16.msra.mxu0 0
        %1775 = vmatprep.subr.bf16.mxu0 0
        %1776 = vmatpush2.bf16.msra.mxu0 0
        %1777 = vmatprep.subr.bf16.mxu0 0
        %1778 = vmatpush2.bf16.msra.mxu0 0
        %1779 = vmatprep.mubr.bf16.mxu0 0
        %1780 = vmatmul.mubr.bf16.gmra.mxu0 %v1742
        %v1781 = vpop.f32.mrf.mxu0
        %v1782 = vadd.f32 %v355, %v1781
        %v1783 = vpop.f32.mrf.mxu0
        %v1784 = vpop.f32.mrf.mxu0
        %v1785 = vadd.f32 %v355, %v1784
        %v1786 = vpop.f32.mrf.mxu0
        %1787 = vmatprep.mubr.bf16.mxu0 0
        %1788 = vmatmul.mubr.bf16.gmra.mxu0 %v1745
        %v1789 = vpop.f32.mrf.mxu0
        %v1790 = vadd.f32 %v355, %v1789
        %v1791 = vpop.f32.mrf.mxu0
        %v1792 = vpop.f32.mrf.mxu0
        %v1793 = vadd.f32 %v355, %v1792
        %v1794 = vpop.f32.mrf.mxu0
        %1795 = vdwg.mxu0
        %v1796 = vmax.f32 %v1782, 0.0
        %v1797 = vmax.f32 %v1785, 0.0
        %v1798 = vmax.f32 %v1790, 0.0
        %v1799 = vmax.f32 %v1793, 0.0
        %v1800 = vpack.c.bf16 %v1797, %v1796
        %v1801 = vpack.c.bf16 %v1799, %v1798
        %v1803 = vsel %vm455, %v1800, 0
        %v1806 = vsel %vm455, %v1801, 0
        %1808 = vmatprep.subr.bf16.mxu0 0
        %1809 = vmatpush1.bf16.msra.mxu0 0
        %1810 = vmatprep.subr.bf16.mxu0 0
        %1811 = vmatpush1.bf16.msra.mxu0 0
        %1812 = vmatprep.subr.bf16.mxu0 0
        %1813 = vmatpush1.bf16.msra.mxu0 0
        %1814 = vmatprep.subr.bf16.mxu0 0
        %1815 = vmatpush1.bf16.msra.mxu0 0
        %1816 = vmatprep.subr.bf16.mxu0 0
        %1817 = vmatpush1.bf16.msra.mxu0 0
        %1818 = vmatprep.subr.bf16.mxu0 0
        %1819 = vmatpush1.bf16.msra.mxu0 0
        %1820 = vmatprep.subr.bf16.mxu0 0
        %1821 = vmatpush1.bf16.msra.mxu0 0
        %1822 = vmatprep.subr.bf16.mxu0 0
        %1823 = vmatpush1.bf16.msra.mxu0 %v453
        %1824 = vmatprep.subr.bf16.mxu0 0
        %1825 = vmatpush2.bf16.msra.mxu0 0
        %1826 = vmatprep.subr.bf16.mxu0 0
        %1827 = vmatpush2.bf16.msra.mxu0 0
        %1828 = vmatprep.subr.bf16.mxu0 0
        %1829 = vmatpush2.bf16.msra.mxu0 0
        %1830 = vmatprep.subr.bf16.mxu0 0
        %1831 = vmatpush2.bf16.msra.mxu0 0
        %1832 = vmatprep.subr.bf16.mxu0 0
        %1833 = vmatpush2.bf16.msra.mxu0 0
        %1834 = vmatprep.subr.bf16.mxu0 0
        %1835 = vmatpush2.bf16.msra.mxu0 0
        %1836 = vmatprep.subr.bf16.mxu0 0
        %1837 = vmatpush2.bf16.msra.mxu0 0
        %1838 = vmatprep.subr.bf16.mxu0 0
        %1839 = vmatpush2.bf16.msra.mxu0 0
        %1840 = vmatprep.mubr.bf16.mxu0 0
        %1841 = vmatmul.mubr.bf16.gmra.mxu0 %v1803
        %v1842 = vpop.f32.mrf.mxu0
        %v1843 = vadd.f32 0.0, %v1842
        %v1844 = vpop.f32.mrf.mxu0
        %v1845 = vpop.f32.mrf.mxu0
        %v1846 = vadd.f32 0.0, %v1845
        %v1847 = vpop.f32.mrf.mxu0
        %1848 = vmatprep.mubr.bf16.mxu0 0
        %1849 = vmatmul.mubr.bf16.gmra.mxu0 %v1806
        %v1850 = vpop.f32.mrf.mxu0
        %v1851 = vadd.f32 0.0, %v1850
        %v1852 = vpop.f32.mrf.mxu0
        %v1853 = vpop.f32.mrf.mxu0
        %v1854 = vadd.f32 0.0, %v1853
        %v1855 = vpop.f32.mrf.mxu0
        %1856 = vdwg.mxu0
        %v1857 = vmax.f32 %v1722, %v1843
        %v1858 = vmax.f32 %v1723, %v1846
        %v1859 = vmax.f32 %v1724, %v1851
        %v1860 = vmax.f32 %v1725, %v1854
        %s1861 = scalar_lea.vmem %s331, 176
        %v1862 = vld [vmem:[%s1861] sm:$0xf]
        %v1863 = vld [vmem:[%s1861 + $0x4] sm:$0xf]
        %v1864 = vld [vmem:[%s1861 + $0x8] sm:$0xf]
        %v1865 = vld [vmem:[%s1861 + $0xc] sm:$0xf]
        %v1870 = vunpack.c.l.b16 %v1862
        %v1871 = vunpack.c.l.b16 %v1863
        %v1872 = vunpack.c.l.b16 %v1864
        %v1873 = vunpack.c.l.b16 %v1865
        %v1874 = vpack.c.b16 %v1871, %v1870
        %v1875 = vpack.c.b16 %v1873, %v1872
        %v1877 = vsel %vm380, %v1874, 0
        %v1880 = vsel %vm380, %v1875, 0
        %1882 = vmatprep.subr.bf16.mxu0 0
        %1883 = vmatpush1.bf16.msra.mxu0 0
        %1884 = vmatprep.subr.bf16.mxu0 0
        %1885 = vmatpush1.bf16.msra.mxu0 0
        %1886 = vmatprep.subr.bf16.mxu0 0
        %1887 = vmatpush1.bf16.msra.mxu0 0
        %1888 = vmatprep.subr.bf16.mxu0 0
        %1889 = vmatpush1.bf16.msra.mxu0 0
        %1890 = vmatprep.subr.bf16.mxu0 0
        %1891 = vmatpush1.bf16.msra.mxu0 0
        %1892 = vmatprep.subr.bf16.mxu0 0
        %1893 = vmatpush1.bf16.msra.mxu0 0
        %1894 = vmatprep.subr.bf16.mxu0 0
        %1895 = vmatpush1.bf16.msra.mxu0 %v392
        %1896 = vmatprep.subr.bf16.mxu0 0
        %1897 = vmatpush1.bf16.msra.mxu0 %v377
        %1898 = vmatprep.subr.bf16.mxu0 0
        %1899 = vmatpush2.bf16.msra.mxu0 0
        %1900 = vmatprep.subr.bf16.mxu0 0
        %1901 = vmatpush2.bf16.msra.mxu0 0
        %1902 = vmatprep.subr.bf16.mxu0 0
        %1903 = vmatpush2.bf16.msra.mxu0 0
        %1904 = vmatprep.subr.bf16.mxu0 0
        %1905 = vmatpush2.bf16.msra.mxu0 0
        %1906 = vmatprep.subr.bf16.mxu0 0
        %1907 = vmatpush2.bf16.msra.mxu0 0
        %1908 = vmatprep.subr.bf16.mxu0 0
        %1909 = vmatpush2.bf16.msra.mxu0 0
        %1910 = vmatprep.subr.bf16.mxu0 0
        %1911 = vmatpush2.bf16.msra.mxu0 0
        %1912 = vmatprep.subr.bf16.mxu0 0
        %1913 = vmatpush2.bf16.msra.mxu0 0
        %1914 = vmatprep.mubr.bf16.mxu0 0
        %1915 = vmatmul.mubr.bf16.gmra.mxu0 %v1877
        %v1916 = vpop.f32.mrf.mxu0
        %v1917 = vadd.f32 %v355, %v1916
        %v1918 = vpop.f32.mrf.mxu0
        %v1919 = vpop.f32.mrf.mxu0
        %v1920 = vadd.f32 %v355, %v1919
        %v1921 = vpop.f32.mrf.mxu0
        %1922 = vmatprep.mubr.bf16.mxu0 0
        %1923 = vmatmul.mubr.bf16.gmra.mxu0 %v1880
        %v1924 = vpop.f32.mrf.mxu0
        %v1925 = vadd.f32 %v355, %v1924
        %v1926 = vpop.f32.mrf.mxu0
        %v1927 = vpop.f32.mrf.mxu0
        %v1928 = vadd.f32 %v355, %v1927
        %v1929 = vpop.f32.mrf.mxu0
        %1930 = vdwg.mxu0
        %v1931 = vmax.f32 %v1917, 0.0
        %v1932 = vmax.f32 %v1920, 0.0
        %v1933 = vmax.f32 %v1925, 0.0
        %v1934 = vmax.f32 %v1928, 0.0
        %v1935 = vpack.c.bf16 %v1932, %v1931
        %v1936 = vpack.c.bf16 %v1934, %v1933
        %v1938 = vsel %vm455, %v1935, 0
        %v1941 = vsel %vm455, %v1936, 0
        %1943 = vmatprep.subr.bf16.mxu0 0
        %1944 = vmatpush1.bf16.msra.mxu0 0
        %1945 = vmatprep.subr.bf16.mxu0 0
        %1946 = vmatpush1.bf16.msra.mxu0 0
        %1947 = vmatprep.subr.bf16.mxu0 0
        %1948 = vmatpush1.bf16.msra.mxu0 0
        %1949 = vmatprep.subr.bf16.mxu0 0
        %1950 = vmatpush1.bf16.msra.mxu0 0
        %1951 = vmatprep.subr.bf16.mxu0 0
        %1952 = vmatpush1.bf16.msra.mxu0 0
        %1953 = vmatprep.subr.bf16.mxu0 0
        %1954 = vmatpush1.bf16.msra.mxu0 0
        %1955 = vmatprep.subr.bf16.mxu0 0
        %1956 = vmatpush1.bf16.msra.mxu0 0
        %1957 = vmatprep.subr.bf16.mxu0 0
        %1958 = vmatpush1.bf16.msra.mxu0 %v453
        %1959 = vmatprep.subr.bf16.mxu0 0
        %1960 = vmatpush2.bf16.msra.mxu0 0
        %1961 = vmatprep.subr.bf16.mxu0 0
        %1962 = vmatpush2.bf16.msra.mxu0 0
        %1963 = vmatprep.subr.bf16.mxu0 0
        %1964 = vmatpush2.bf16.msra.mxu0 0
        %1965 = vmatprep.subr.bf16.mxu0 0
        %1966 = vmatpush2.bf16.msra.mxu0 0
        %1967 = vmatprep.subr.bf16.mxu0 0
        %1968 = vmatpush2.bf16.msra.mxu0 0
        %1969 = vmatprep.subr.bf16.mxu0 0
        %1970 = vmatpush2.bf16.msra.mxu0 0
        %1971 = vmatprep.subr.bf16.mxu0 0
        %1972 = vmatpush2.bf16.msra.mxu0 0
        %1973 = vmatprep.subr.bf16.mxu0 0
        %1974 = vmatpush2.bf16.msra.mxu0 0
        %1975 = vmatprep.mubr.bf16.mxu0 0
        %1976 = vmatmul.mubr.bf16.gmra.mxu0 %v1938
        %v1977 = vpop.f32.mrf.mxu0
        %v1978 = vadd.f32 0.0, %v1977
        %v1979 = vpop.f32.mrf.mxu0
        %v1980 = vpop.f32.mrf.mxu0
        %v1981 = vadd.f32 0.0, %v1980
        %v1982 = vpop.f32.mrf.mxu0
        %1983 = vmatprep.mubr.bf16.mxu0 0
        %1984 = vmatmul.mubr.bf16.gmra.mxu0 %v1941
        %v1985 = vpop.f32.mrf.mxu0
        %v1986 = vadd.f32 0.0, %v1985
        %v1987 = vpop.f32.mrf.mxu0
        %v1988 = vpop.f32.mrf.mxu0
        %v1989 = vadd.f32 0.0, %v1988
        %v1990 = vpop.f32.mrf.mxu0
        %1991 = vdwg.mxu0
        %v1992 = vmax.f32 %v1857, %v1978
        %v1993 = vmax.f32 %v1858, %v1981
        %v1994 = vmax.f32 %v1859, %v1986
        %v1995 = vmax.f32 %v1860, %v1989
        %s1996 = scalar_lea.vmem %s331, 192
        %v1997 = vld [vmem:[%s1996] sm:$0xf]
        %v1998 = vld [vmem:[%s1996 + $0x4] sm:$0xf]
        %v1999 = vld [vmem:[%s1996 + $0x8] sm:$0xf]
        %v2000 = vld [vmem:[%s1996 + $0xc] sm:$0xf]
        %v2005 = vunpack.c.l.b16 %v1997
        %v2006 = vunpack.c.l.b16 %v1998
        %v2007 = vunpack.c.l.b16 %v1999
        %v2008 = vunpack.c.l.b16 %v2000
        %v2009 = vpack.c.b16 %v2006, %v2005
        %v2010 = vpack.c.b16 %v2008, %v2007
        %v2012 = vsel %vm380, %v2009, 0
        %v2015 = vsel %vm380, %v2010, 0
        %2017 = vmatprep.subr.bf16.mxu0 0
        %2018 = vmatpush1.bf16.msra.mxu0 0
        %2019 = vmatprep.subr.bf16.mxu0 0
        %2020 = vmatpush1.bf16.msra.mxu0 0
        %2021 = vmatprep.subr.bf16.mxu0 0
        %2022 = vmatpush1.bf16.msra.mxu0 0
        %2023 = vmatprep.subr.bf16.mxu0 0
        %2024 = vmatpush1.bf16.msra.mxu0 0
        %2025 = vmatprep.subr.bf16.mxu0 0
        %2026 = vmatpush1.bf16.msra.mxu0 0
        %2027 = vmatprep.subr.bf16.mxu0 0
        %2028 = vmatpush1.bf16.msra.mxu0 0
        %2029 = vmatprep.subr.bf16.mxu0 0
        %2030 = vmatpush1.bf16.msra.mxu0 %v392
        %2031 = vmatprep.subr.bf16.mxu0 0
        %2032 = vmatpush1.bf16.msra.mxu0 %v377
        %2033 = vmatprep.subr.bf16.mxu0 0
        %2034 = vmatpush2.bf16.msra.mxu0 0
        %2035 = vmatprep.subr.bf16.mxu0 0
        %2036 = vmatpush2.bf16.msra.mxu0 0
        %2037 = vmatprep.subr.bf16.mxu0 0
        %2038 = vmatpush2.bf16.msra.mxu0 0
        %2039 = vmatprep.subr.bf16.mxu0 0
        %2040 = vmatpush2.bf16.msra.mxu0 0
        %2041 = vmatprep.subr.bf16.mxu0 0
        %2042 = vmatpush2.bf16.msra.mxu0 0
        %2043 = vmatprep.subr.bf16.mxu0 0
        %2044 = vmatpush2.bf16.msra.mxu0 0
        %2045 = vmatprep.subr.bf16.mxu0 0
        %2046 = vmatpush2.bf16.msra.mxu0 0
        %2047 = vmatprep.subr.bf16.mxu0 0
        %2048 = vmatpush2.bf16.msra.mxu0 0
        %2049 = vmatprep.mubr.bf16.mxu0 0
        %2050 = vmatmul.mubr.bf16.gmra.mxu0 %v2012
        %v2051 = vpop.f32.mrf.mxu0
        %v2052 = vadd.f32 %v355, %v2051
        %v2053 = vpop.f32.mrf.mxu0
        %v2054 = vpop.f32.mrf.mxu0
        %v2055 = vadd.f32 %v355, %v2054
        %v2056 = vpop.f32.mrf.mxu0
        %2057 = vmatprep.mubr.bf16.mxu0 0
        %2058 = vmatmul.mubr.bf16.gmra.mxu0 %v2015
        %v2059 = vpop.f32.mrf.mxu0
        %v2060 = vadd.f32 %v355, %v2059
        %v2061 = vpop.f32.mrf.mxu0
        %v2062 = vpop.f32.mrf.mxu0
        %v2063 = vadd.f32 %v355, %v2062
        %v2064 = vpop.f32.mrf.mxu0
        %2065 = vdwg.mxu0
        %v2066 = vmax.f32 %v2052, 0.0
        %v2067 = vmax.f32 %v2055, 0.0
        %v2068 = vmax.f32 %v2060, 0.0
        %v2069 = vmax.f32 %v2063, 0.0
        %v2070 = vpack.c.bf16 %v2067, %v2066
        %v2071 = vpack.c.bf16 %v2069, %v2068
        %v2073 = vsel %vm455, %v2070, 0
        %v2076 = vsel %vm455, %v2071, 0
        %2078 = vmatprep.subr.bf16.mxu0 0
        %2079 = vmatpush1.bf16.msra.mxu0 0
        %2080 = vmatprep.subr.bf16.mxu0 0
        %2081 = vmatpush1.bf16.msra.mxu0 0
        %2082 = vmatprep.subr.bf16.mxu0 0
        %2083 = vmatpush1.bf16.msra.mxu0 0
        %2084 = vmatprep.subr.bf16.mxu0 0
        %2085 = vmatpush1.bf16.msra.mxu0 0
        %2086 = vmatprep.subr.bf16.mxu0 0
        %2087 = vmatpush1.bf16.msra.mxu0 0
        %2088 = vmatprep.subr.bf16.mxu0 0
        %2089 = vmatpush1.bf16.msra.mxu0 0
        %2090 = vmatprep.subr.bf16.mxu0 0
        %2091 = vmatpush1.bf16.msra.mxu0 0
        %2092 = vmatprep.subr.bf16.mxu0 0
        %2093 = vmatpush1.bf16.msra.mxu0 %v453
        %2094 = vmatprep.subr.bf16.mxu0 0
        %2095 = vmatpush2.bf16.msra.mxu0 0
        %2096 = vmatprep.subr.bf16.mxu0 0
        %2097 = vmatpush2.bf16.msra.mxu0 0
        %2098 = vmatprep.subr.bf16.mxu0 0
        %2099 = vmatpush2.bf16.msra.mxu0 0
        %2100 = vmatprep.subr.bf16.mxu0 0
        %2101 = vmatpush2.bf16.msra.mxu0 0
        %2102 = vmatprep.subr.bf16.mxu0 0
        %2103 = vmatpush2.bf16.msra.mxu0 0
        %2104 = vmatprep.subr.bf16.mxu0 0
        %2105 = vmatpush2.bf16.msra.mxu0 0
        %2106 = vmatprep.subr.bf16.mxu0 0
        %2107 = vmatpush2.bf16.msra.mxu0 0
        %2108 = vmatprep.subr.bf16.mxu0 0
        %2109 = vmatpush2.bf16.msra.mxu0 0
        %2110 = vmatprep.mubr.bf16.mxu0 0
        %2111 = vmatmul.mubr.bf16.gmra.mxu0 %v2073
        %v2112 = vpop.f32.mrf.mxu0
        %v2113 = vadd.f32 0.0, %v2112
        %v2114 = vpop.f32.mrf.mxu0
        %v2115 = vpop.f32.mrf.mxu0
        %v2116 = vadd.f32 0.0, %v2115
        %v2117 = vpop.f32.mrf.mxu0
        %2118 = vmatprep.mubr.bf16.mxu0 0
        %2119 = vmatmul.mubr.bf16.gmra.mxu0 %v2076
        %v2120 = vpop.f32.mrf.mxu0
        %v2121 = vadd.f32 0.0, %v2120
        %v2122 = vpop.f32.mrf.mxu0
        %v2123 = vpop.f32.mrf.mxu0
        %v2124 = vadd.f32 0.0, %v2123
        %v2125 = vpop.f32.mrf.mxu0
        %2126 = vdwg.mxu0
        %v2127 = vmax.f32 %v1992, %v2113
        %v2128 = vmax.f32 %v1993, %v2116
        %v2129 = vmax.f32 %v1994, %v2121
        %v2130 = vmax.f32 %v1995, %v2124
        %s2131 = scalar_lea.vmem %s331, 208
        %v2132 = vld [vmem:[%s2131] sm:$0xf]
        %v2133 = vld [vmem:[%s2131 + $0x4] sm:$0xf]
        %v2134 = vld [vmem:[%s2131 + $0x8] sm:$0xf]
        %v2135 = vld [vmem:[%s2131 + $0xc] sm:$0xf]
        %v2140 = vunpack.c.l.b16 %v2132
        %v2141 = vunpack.c.l.b16 %v2133
        %v2142 = vunpack.c.l.b16 %v2134
        %v2143 = vunpack.c.l.b16 %v2135
        %v2144 = vpack.c.b16 %v2141, %v2140
        %v2145 = vpack.c.b16 %v2143, %v2142
        %v2147 = vsel %vm380, %v2144, 0
        %v2150 = vsel %vm380, %v2145, 0
        %2152 = vmatprep.subr.bf16.mxu0 0
        %2153 = vmatpush1.bf16.msra.mxu0 0
        %2154 = vmatprep.subr.bf16.mxu0 0
        %2155 = vmatpush1.bf16.msra.mxu0 0
        %2156 = vmatprep.subr.bf16.mxu0 0
        %2157 = vmatpush1.bf16.msra.mxu0 0
        %2158 = vmatprep.subr.bf16.mxu0 0
        %2159 = vmatpush1.bf16.msra.mxu0 0
        %2160 = vmatprep.subr.bf16.mxu0 0
        %2161 = vmatpush1.bf16.msra.mxu0 0
        %2162 = vmatprep.subr.bf16.mxu0 0
        %2163 = vmatpush1.bf16.msra.mxu0 0
        %2164 = vmatprep.subr.bf16.mxu0 0
        %2165 = vmatpush1.bf16.msra.mxu0 %v392
        %2166 = vmatprep.subr.bf16.mxu0 0
        %2167 = vmatpush1.bf16.msra.mxu0 %v377
        %2168 = vmatprep.subr.bf16.mxu0 0
        %2169 = vmatpush2.bf16.msra.mxu0 0
        %2170 = vmatprep.subr.bf16.mxu0 0
        %2171 = vmatpush2.bf16.msra.mxu0 0
        %2172 = vmatprep.subr.bf16.mxu0 0
        %2173 = vmatpush2.bf16.msra.mxu0 0
        %2174 = vmatprep.subr.bf16.mxu0 0
        %2175 = vmatpush2.bf16.msra.mxu0 0
        %2176 = vmatprep.subr.bf16.mxu0 0
        %2177 = vmatpush2.bf16.msra.mxu0 0
        %2178 = vmatprep.subr.bf16.mxu0 0
        %2179 = vmatpush2.bf16.msra.mxu0 0
        %2180 = vmatprep.subr.bf16.mxu0 0
        %2181 = vmatpush2.bf16.msra.mxu0 0
        %2182 = vmatprep.subr.bf16.mxu0 0
        %2183 = vmatpush2.bf16.msra.mxu0 0
        %2184 = vmatprep.mubr.bf16.mxu0 0
        %2185 = vmatmul.mubr.bf16.gmra.mxu0 %v2147
        %v2186 = vpop.f32.mrf.mxu0
        %v2187 = vadd.f32 %v355, %v2186
        %v2188 = vpop.f32.mrf.mxu0
        %v2189 = vpop.f32.mrf.mxu0
        %v2190 = vadd.f32 %v355, %v2189
        %v2191 = vpop.f32.mrf.mxu0
        %2192 = vmatprep.mubr.bf16.mxu0 0
        %2193 = vmatmul.mubr.bf16.gmra.mxu0 %v2150
        %v2194 = vpop.f32.mrf.mxu0
        %v2195 = vadd.f32 %v355, %v2194
        %v2196 = vpop.f32.mrf.mxu0
        %v2197 = vpop.f32.mrf.mxu0
        %v2198 = vadd.f32 %v355, %v2197
        %v2199 = vpop.f32.mrf.mxu0
        %2200 = vdwg.mxu0
        %v2201 = vmax.f32 %v2187, 0.0
        %v2202 = vmax.f32 %v2190, 0.0
        %v2203 = vmax.f32 %v2195, 0.0
        %v2204 = vmax.f32 %v2198, 0.0
        %v2205 = vpack.c.bf16 %v2202, %v2201
        %v2206 = vpack.c.bf16 %v2204, %v2203
        %v2208 = vsel %vm455, %v2205, 0
        %v2211 = vsel %vm455, %v2206, 0
        %2213 = vmatprep.subr.bf16.mxu0 0
        %2214 = vmatpush1.bf16.msra.mxu0 0
        %2215 = vmatprep.subr.bf16.mxu0 0
        %2216 = vmatpush1.bf16.msra.mxu0 0
        %2217 = vmatprep.subr.bf16.mxu0 0
        %2218 = vmatpush1.bf16.msra.mxu0 0
        %2219 = vmatprep.subr.bf16.mxu0 0
        %2220 = vmatpush1.bf16.msra.mxu0 0
        %2221 = vmatprep.subr.bf16.mxu0 0
        %2222 = vmatpush1.bf16.msra.mxu0 0
        %2223 = vmatprep.subr.bf16.mxu0 0
        %2224 = vmatpush1.bf16.msra.mxu0 0
        %2225 = vmatprep.subr.bf16.mxu0 0
        %2226 = vmatpush1.bf16.msra.mxu0 0
        %2227 = vmatprep.subr.bf16.mxu0 0
        %2228 = vmatpush1.bf16.msra.mxu0 %v453
        %2229 = vmatprep.subr.bf16.mxu0 0
        %2230 = vmatpush2.bf16.msra.mxu0 0
        %2231 = vmatprep.subr.bf16.mxu0 0
        %2232 = vmatpush2.bf16.msra.mxu0 0
        %2233 = vmatprep.subr.bf16.mxu0 0
        %2234 = vmatpush2.bf16.msra.mxu0 0
        %2235 = vmatprep.subr.bf16.mxu0 0
        %2236 = vmatpush2.bf16.msra.mxu0 0
        %2237 = vmatprep.subr.bf16.mxu0 0
        %2238 = vmatpush2.bf16.msra.mxu0 0
        %2239 = vmatprep.subr.bf16.mxu0 0
        %2240 = vmatpush2.bf16.msra.mxu0 0
        %2241 = vmatprep.subr.bf16.mxu0 0
        %2242 = vmatpush2.bf16.msra.mxu0 0
        %2243 = vmatprep.subr.bf16.mxu0 0
        %2244 = vmatpush2.bf16.msra.mxu0 0
        %2245 = vmatprep.mubr.bf16.mxu0 0
        %2246 = vmatmul.mubr.bf16.gmra.mxu0 %v2208
        %v2247 = vpop.f32.mrf.mxu0
        %v2248 = vadd.f32 0.0, %v2247
        %v2249 = vpop.f32.mrf.mxu0
        %v2250 = vpop.f32.mrf.mxu0
        %v2251 = vadd.f32 0.0, %v2250
        %v2252 = vpop.f32.mrf.mxu0
        %2253 = vmatprep.mubr.bf16.mxu0 0
        %2254 = vmatmul.mubr.bf16.gmra.mxu0 %v2211
        %v2255 = vpop.f32.mrf.mxu0
        %v2256 = vadd.f32 0.0, %v2255
        %v2257 = vpop.f32.mrf.mxu0
        %v2258 = vpop.f32.mrf.mxu0
        %v2259 = vadd.f32 0.0, %v2258
        %v2260 = vpop.f32.mrf.mxu0
        %2261 = vdwg.mxu0
        %v2262 = vmax.f32 %v2127, %v2248
        %v2263 = vmax.f32 %v2128, %v2251
        %v2264 = vmax.f32 %v2129, %v2256
        %v2265 = vmax.f32 %v2130, %v2259
        %s2266 = scalar_lea.vmem %s331, 224
        %v2267 = vld [vmem:[%s2266] sm:$0xf]
        %v2268 = vld [vmem:[%s2266 + $0x4] sm:$0xf]
        %v2269 = vld [vmem:[%s2266 + $0x8] sm:$0xf]
        %v2270 = vld [vmem:[%s2266 + $0xc] sm:$0xf]
        %v2275 = vunpack.c.l.b16 %v2267
        %v2276 = vunpack.c.l.b16 %v2268
        %v2277 = vunpack.c.l.b16 %v2269
        %v2278 = vunpack.c.l.b16 %v2270
        %v2279 = vpack.c.b16 %v2276, %v2275
        %v2280 = vpack.c.b16 %v2278, %v2277
        %v2282 = vsel %vm380, %v2279, 0
        %v2285 = vsel %vm380, %v2280, 0
        %2287 = vmatprep.subr.bf16.mxu0 0
        %2288 = vmatpush1.bf16.msra.mxu0 0
        %2289 = vmatprep.subr.bf16.mxu0 0
        %2290 = vmatpush1.bf16.msra.mxu0 0
        %2291 = vmatprep.subr.bf16.mxu0 0
        %2292 = vmatpush1.bf16.msra.mxu0 0
        %2293 = vmatprep.subr.bf16.mxu0 0
        %2294 = vmatpush1.bf16.msra.mxu0 0
        %2295 = vmatprep.subr.bf16.mxu0 0
        %2296 = vmatpush1.bf16.msra.mxu0 0
        %2297 = vmatprep.subr.bf16.mxu0 0
        %2298 = vmatpush1.bf16.msra.mxu0 0
        %2299 = vmatprep.subr.bf16.mxu0 0
        %2300 = vmatpush1.bf16.msra.mxu0 %v392
        %2301 = vmatprep.subr.bf16.mxu0 0
        %2302 = vmatpush1.bf16.msra.mxu0 %v377
        %2303 = vmatprep.subr.bf16.mxu0 0
        %2304 = vmatpush2.bf16.msra.mxu0 0
        %2305 = vmatprep.subr.bf16.mxu0 0
        %2306 = vmatpush2.bf16.msra.mxu0 0
        %2307 = vmatprep.subr.bf16.mxu0 0
        %2308 = vmatpush2.bf16.msra.mxu0 0
        %2309 = vmatprep.subr.bf16.mxu0 0
        %2310 = vmatpush2.bf16.msra.mxu0 0
        %2311 = vmatprep.subr.bf16.mxu0 0
        %2312 = vmatpush2.bf16.msra.mxu0 0
        %2313 = vmatprep.subr.bf16.mxu0 0
        %2314 = vmatpush2.bf16.msra.mxu0 0
        %2315 = vmatprep.subr.bf16.mxu0 0
        %2316 = vmatpush2.bf16.msra.mxu0 0
        %2317 = vmatprep.subr.bf16.mxu0 0
        %2318 = vmatpush2.bf16.msra.mxu0 0
        %2319 = vmatprep.mubr.bf16.mxu0 0
        %2320 = vmatmul.mubr.bf16.gmra.mxu0 %v2282
        %v2321 = vpop.f32.mrf.mxu0
        %v2322 = vadd.f32 %v355, %v2321
        %v2323 = vpop.f32.mrf.mxu0
        %v2324 = vpop.f32.mrf.mxu0
        %v2325 = vadd.f32 %v355, %v2324
        %v2326 = vpop.f32.mrf.mxu0
        %2327 = vmatprep.mubr.bf16.mxu0 0
        %2328 = vmatmul.mubr.bf16.gmra.mxu0 %v2285
        %v2329 = vpop.f32.mrf.mxu0
        %v2330 = vadd.f32 %v355, %v2329
        %v2331 = vpop.f32.mrf.mxu0
        %v2332 = vpop.f32.mrf.mxu0
        %v2333 = vadd.f32 %v355, %v2332
        %v2334 = vpop.f32.mrf.mxu0
        %2335 = vdwg.mxu0
        %v2336 = vmax.f32 %v2322, 0.0
        %v2337 = vmax.f32 %v2325, 0.0
        %v2338 = vmax.f32 %v2330, 0.0
        %v2339 = vmax.f32 %v2333, 0.0
        %v2340 = vpack.c.bf16 %v2337, %v2336
        %v2341 = vpack.c.bf16 %v2339, %v2338
        %v2343 = vsel %vm455, %v2340, 0
        %v2346 = vsel %vm455, %v2341, 0
        %2348 = vmatprep.subr.bf16.mxu0 0
        %2349 = vmatpush1.bf16.msra.mxu0 0
        %2350 = vmatprep.subr.bf16.mxu0 0
        %2351 = vmatpush1.bf16.msra.mxu0 0
        %2352 = vmatprep.subr.bf16.mxu0 0
        %2353 = vmatpush1.bf16.msra.mxu0 0
        %2354 = vmatprep.subr.bf16.mxu0 0
        %2355 = vmatpush1.bf16.msra.mxu0 0
        %2356 = vmatprep.subr.bf16.mxu0 0
        %2357 = vmatpush1.bf16.msra.mxu0 0
        %2358 = vmatprep.subr.bf16.mxu0 0
        %2359 = vmatpush1.bf16.msra.mxu0 0
        %2360 = vmatprep.subr.bf16.mxu0 0
        %2361 = vmatpush1.bf16.msra.mxu0 0
        %2362 = vmatprep.subr.bf16.mxu0 0
        %2363 = vmatpush1.bf16.msra.mxu0 %v453
        %2364 = vmatprep.subr.bf16.mxu0 0
        %2365 = vmatpush2.bf16.msra.mxu0 0
        %2366 = vmatprep.subr.bf16.mxu0 0
        %2367 = vmatpush2.bf16.msra.mxu0 0
        %2368 = vmatprep.subr.bf16.mxu0 0
        %2369 = vmatpush2.bf16.msra.mxu0 0
        %2370 = vmatprep.subr.bf16.mxu0 0
        %2371 = vmatpush2.bf16.msra.mxu0 0
        %2372 = vmatprep.subr.bf16.mxu0 0
        %2373 = vmatpush2.bf16.msra.mxu0 0
        %2374 = vmatprep.subr.bf16.mxu0 0
        %2375 = vmatpush2.bf16.msra.mxu0 0
        %2376 = vmatprep.subr.bf16.mxu0 0
        %2377 = vmatpush2.bf16.msra.mxu0 0
        %2378 = vmatprep.subr.bf16.mxu0 0
        %2379 = vmatpush2.bf16.msra.mxu0 0
        %2380 = vmatprep.mubr.bf16.mxu0 0
        %2381 = vmatmul.mubr.bf16.gmra.mxu0 %v2343
        %v2382 = vpop.f32.mrf.mxu0
        %v2383 = vadd.f32 0.0, %v2382
        %v2384 = vpop.f32.mrf.mxu0
        %v2385 = vpop.f32.mrf.mxu0
        %v2386 = vadd.f32 0.0, %v2385
        %v2387 = vpop.f32.mrf.mxu0
        %2388 = vmatprep.mubr.bf16.mxu0 0
        %2389 = vmatmul.mubr.bf16.gmra.mxu0 %v2346
        %v2390 = vpop.f32.mrf.mxu0
        %v2391 = vadd.f32 0.0, %v2390
        %v2392 = vpop.f32.mrf.mxu0
        %v2393 = vpop.f32.mrf.mxu0
        %v2394 = vadd.f32 0.0, %v2393
        %v2395 = vpop.f32.mrf.mxu0
        %2396 = vdwg.mxu0
        %v2397 = vmax.f32 %v2262, %v2383
        %v2398 = vmax.f32 %v2263, %v2386
        %v2399 = vmax.f32 %v2264, %v2391
        %v2400 = vmax.f32 %v2265, %v2394
        %s2401 = scalar_lea.vmem %s331, 240
        %v2402 = vld [vmem:[%s2401] sm:$0xf]
        %v2403 = vld [vmem:[%s2401 + $0x4] sm:$0xf]
        %v2404 = vld [vmem:[%s2401 + $0x8] sm:$0xf]
        %v2405 = vld [vmem:[%s2401 + $0xc] sm:$0xf]
        %v2410 = vunpack.c.l.b16 %v2402
        %v2411 = vunpack.c.l.b16 %v2403
        %v2412 = vunpack.c.l.b16 %v2404
        %v2413 = vunpack.c.l.b16 %v2405
        %v2414 = vpack.c.b16 %v2411, %v2410
        %v2415 = vpack.c.b16 %v2413, %v2412
        %v2417 = vsel %vm380, %v2414, 0
        %v2420 = vsel %vm380, %v2415, 0
        %2422 = vmatprep.subr.bf16.mxu0 0
        %2423 = vmatpush1.bf16.msra.mxu0 0
        %2424 = vmatprep.subr.bf16.mxu0 0
        %2425 = vmatpush1.bf16.msra.mxu0 0
        %2426 = vmatprep.subr.bf16.mxu0 0
        %2427 = vmatpush1.bf16.msra.mxu0 0
        %2428 = vmatprep.subr.bf16.mxu0 0
        %2429 = vmatpush1.bf16.msra.mxu0 0
        %2430 = vmatprep.subr.bf16.mxu0 0
        %2431 = vmatpush1.bf16.msra.mxu0 0
        %2432 = vmatprep.subr.bf16.mxu0 0
        %2433 = vmatpush1.bf16.msra.mxu0 0
        %2434 = vmatprep.subr.bf16.mxu0 0
        %2435 = vmatpush1.bf16.msra.mxu0 %v392
        %2436 = vmatprep.subr.bf16.mxu0 0
        %2437 = vmatpush1.bf16.msra.mxu0 %v377
        %2438 = vmatprep.subr.bf16.mxu0 0
        %2439 = vmatpush2.bf16.msra.mxu0 0
        %2440 = vmatprep.subr.bf16.mxu0 0
        %2441 = vmatpush2.bf16.msra.mxu0 0
        %2442 = vmatprep.subr.bf16.mxu0 0
        %2443 = vmatpush2.bf16.msra.mxu0 0
        %2444 = vmatprep.subr.bf16.mxu0 0
        %2445 = vmatpush2.bf16.msra.mxu0 0
        %2446 = vmatprep.subr.bf16.mxu0 0
        %2447 = vmatpush2.bf16.msra.mxu0 0
        %2448 = vmatprep.subr.bf16.mxu0 0
        %2449 = vmatpush2.bf16.msra.mxu0 0
        %2450 = vmatprep.subr.bf16.mxu0 0
        %2451 = vmatpush2.bf16.msra.mxu0 0
        %2452 = vmatprep.subr.bf16.mxu0 0
        %2453 = vmatpush2.bf16.msra.mxu0 0
        %2454 = vmatprep.mubr.bf16.mxu0 0
        %2455 = vmatmul.mubr.bf16.gmra.mxu0 %v2417
        %v2456 = vpop.f32.mrf.mxu0
        %v2457 = vadd.f32 %v355, %v2456
        %v2458 = vpop.f32.mrf.mxu0
        %v2459 = vpop.f32.mrf.mxu0
        %v2460 = vadd.f32 %v355, %v2459
        %v2461 = vpop.f32.mrf.mxu0
        %2462 = vmatprep.mubr.bf16.mxu0 0
        %2463 = vmatmul.mubr.bf16.gmra.mxu0 %v2420
        %v2464 = vpop.f32.mrf.mxu0
        %v2465 = vadd.f32 %v355, %v2464
        %v2466 = vpop.f32.mrf.mxu0
        %v2467 = vpop.f32.mrf.mxu0
        %v2468 = vadd.f32 %v355, %v2467
        %v2469 = vpop.f32.mrf.mxu0
        %2470 = vdwg.mxu0
        %v2471 = vmax.f32 %v2457, 0.0
        %v2472 = vmax.f32 %v2460, 0.0
        %v2473 = vmax.f32 %v2465, 0.0
        %v2474 = vmax.f32 %v2468, 0.0
        %v2475 = vpack.c.bf16 %v2472, %v2471
        %v2476 = vpack.c.bf16 %v2474, %v2473
        %v2478 = vsel %vm455, %v2475, 0
        %v2481 = vsel %vm455, %v2476, 0
        %2483 = vmatprep.subr.bf16.mxu0 0
        %2484 = vmatpush1.bf16.msra.mxu0 0
        %2485 = vmatprep.subr.bf16.mxu0 0
        %2486 = vmatpush1.bf16.msra.mxu0 0
        %2487 = vmatprep.subr.bf16.mxu0 0
        %2488 = vmatpush1.bf16.msra.mxu0 0
        %2489 = vmatprep.subr.bf16.mxu0 0
        %2490 = vmatpush1.bf16.msra.mxu0 0
        %2491 = vmatprep.subr.bf16.mxu0 0
        %2492 = vmatpush1.bf16.msra.mxu0 0
        %2493 = vmatprep.subr.bf16.mxu0 0
        %2494 = vmatpush1.bf16.msra.mxu0 0
        %2495 = vmatprep.subr.bf16.mxu0 0
        %2496 = vmatpush1.bf16.msra.mxu0 0
        %2497 = vmatprep.subr.bf16.mxu0 0
        %2498 = vmatpush1.bf16.msra.mxu0 %v453
        %2499 = vmatprep.subr.bf16.mxu0 0
        %2500 = vmatpush2.bf16.msra.mxu0 0
        %2501 = vmatprep.subr.bf16.mxu0 0
        %2502 = vmatpush2.bf16.msra.mxu0 0
        %2503 = vmatprep.subr.bf16.mxu0 0
        %2504 = vmatpush2.bf16.msra.mxu0 0
        %2505 = vmatprep.subr.bf16.mxu0 0
        %2506 = vmatpush2.bf16.msra.mxu0 0
        %2507 = vmatprep.subr.bf16.mxu0 0
        %2508 = vmatpush2.bf16.msra.mxu0 0
        %2509 = vmatprep.subr.bf16.mxu0 0
        %2510 = vmatpush2.bf16.msra.mxu0 0
        %2511 = vmatprep.subr.bf16.mxu0 0
        %2512 = vmatpush2.bf16.msra.mxu0 0
        %2513 = vmatprep.subr.bf16.mxu0 0
        %2514 = vmatpush2.bf16.msra.mxu0 0
        %2515 = vmatprep.mubr.bf16.mxu0 0
        %2516 = vmatmul.mubr.bf16.gmra.mxu0 %v2478
        %v2517 = vpop.f32.mrf.mxu0
        %v2518 = vadd.f32 0.0, %v2517
        %v2519 = vpop.f32.mrf.mxu0
        %v2520 = vpop.f32.mrf.mxu0
        %v2521 = vadd.f32 0.0, %v2520
        %v2522 = vpop.f32.mrf.mxu0
        %2523 = vmatprep.mubr.bf16.mxu0 0
        %2524 = vmatmul.mubr.bf16.gmra.mxu0 %v2481
        %v2525 = vpop.f32.mrf.mxu0
        %v2526 = vadd.f32 0.0, %v2525
        %v2527 = vpop.f32.mrf.mxu0
        %v2528 = vpop.f32.mrf.mxu0
        %v2529 = vadd.f32 0.0, %v2528
        %v2530 = vpop.f32.mrf.mxu0
        %2531 = vdwg.mxu0
        %v2532 = vmax.f32 %v2397, %v2518
        %v2533 = vmax.f32 %v2398, %v2521
        %v2534 = vmax.f32 %v2399, %v2526
        %v2535 = vmax.f32 %v2400, %v2529
        %v2536 = vld [vmem:[%s341] sm:$0xf]
        %v2537 = vld [vmem:[%s341 + $0x4] sm:$0xf]
        %v2538 = vld [vmem:[%s341 + $0x8] sm:$0xf]
        %v2539 = vld [vmem:[%s341 + $0xc] sm:$0xf]
        %v2540 = vld [vmem:[%s5] sm:$0xf]
        %v2541 = vld [vmem:[%s5 + $0x4] sm:$0xf]
        %v2546 = vunpack.c.l.b16 %v2536
        %v2547 = vunpack.c.l.b16 %v2537
        %v2548 = vunpack.c.l.b16 %v2538
        %v2549 = vunpack.c.l.b16 %v2539
        %v2550 = vpack.c.b16 %v2547, %v2546
        %v2551 = vpack.c.b16 %v2549, %v2548
        %v2554 = vunpack.c.l.b16 %v2540
        %v2555 = vunpack.c.l.b16 %v2541
        %v2556 = vpack.c.b16 %v2555, %v2554
        %v2559 = vsel %vm455, %v2550, 0
        %v2562 = vsel %vm455, %v2551, 0
        %2564 = vmatprep.subr.bf16.mxu0 0
        %2565 = vmatpush1.bf16.msra.mxu0 0
        %2566 = vmatprep.subr.bf16.mxu0 0
        %2567 = vmatpush1.bf16.msra.mxu0 0
        %2568 = vmatprep.subr.bf16.mxu0 0
        %2569 = vmatpush1.bf16.msra.mxu0 0
        %2570 = vmatprep.subr.bf16.mxu0 0
        %2571 = vmatpush1.bf16.msra.mxu0 0
        %2572 = vmatprep.subr.bf16.mxu0 0
        %2573 = vmatpush1.bf16.msra.mxu0 0
        %2574 = vmatprep.subr.bf16.mxu0 0
        %2575 = vmatpush1.bf16.msra.mxu0 0
        %2576 = vmatprep.subr.bf16.mxu0 0
        %2577 = vmatpush1.bf16.msra.mxu0 0
        %2578 = vmatprep.subr.bf16.mxu0 0
        %2579 = vmatpush1.bf16.msra.mxu0 %v2556
        %2580 = vmatprep.subr.bf16.mxu0 0
        %2581 = vmatpush2.bf16.msra.mxu0 0
        %2582 = vmatprep.subr.bf16.mxu0 0
        %2583 = vmatpush2.bf16.msra.mxu0 0
        %2584 = vmatprep.subr.bf16.mxu0 0
        %2585 = vmatpush2.bf16.msra.mxu0 0
        %2586 = vmatprep.subr.bf16.mxu0 0
        %2587 = vmatpush2.bf16.msra.mxu0 0
        %2588 = vmatprep.subr.bf16.mxu0 0
        %2589 = vmatpush2.bf16.msra.mxu0 0
        %2590 = vmatprep.subr.bf16.mxu0 0
        %2591 = vmatpush2.bf16.msra.mxu0 0
        %2592 = vmatprep.subr.bf16.mxu0 0
        %2593 = vmatpush2.bf16.msra.mxu0 0
        %2594 = vmatprep.subr.bf16.mxu0 0
        %2595 = vmatpush2.bf16.msra.mxu0 0
        %2596 = vmatprep.mubr.bf16.mxu0 0
        %2597 = vmatmul.mubr.bf16.gmra.mxu0 %v2559
        %v2598 = vpop.f32.mrf.mxu0
        %v2599 = vadd.f32 0.0, %v2598
        %v2600 = vpop.f32.mrf.mxu0
        %v2601 = vpop.f32.mrf.mxu0
        %v2602 = vadd.f32 0.0, %v2601
        %v2603 = vpop.f32.mrf.mxu0
        %2604 = vmatprep.mubr.bf16.mxu0 0
        %2605 = vmatmul.mubr.bf16.gmra.mxu0 %v2562
        %v2606 = vpop.f32.mrf.mxu0
        %v2607 = vadd.f32 0.0, %v2606
        %v2608 = vpop.f32.mrf.mxu0
        %v2609 = vpop.f32.mrf.mxu0
        %v2610 = vadd.f32 0.0, %v2609
        %v2611 = vpop.f32.mrf.mxu0
        %2612 = vdwg.mxu0
        %v2613 = vadd.f32 %v2532, %v2599
        %v2614 = vadd.f32 %v2533, %v2602
        %v2615 = vadd.f32 %v2534, %v2607
        %v2616 = vadd.f32 %v2535, %v2610
        %v2617 = vld [vmem:[%s6] sm:$0x1]
        %v2619 = vlaneseq
        %v2620 = vshrl.u32 %v2619, 7
        %v2621 = vsub.s32 0, %v2620
        %v2622 = vrot.slane %v2617, %v2621
        %v2624 = vadd.f32 %v2613, %v2622
        %v2625 = vadd.f32 %v2614, %v2622
        %v2626 = vadd.f32 %v2615, %v2622
        %v2627 = vadd.f32 %v2616, %v2622
        %v2628 = vmax.f32 %v2624, 0.0
        %v2629 = vmax.f32 %v2625, 0.0
        %v2630 = vmax.f32 %v2626, 0.0
        %v2631 = vmax.f32 %v2627, 0.0
        %v2632 = vpack.c.bf16 %v2629, %v2628
        %v2633 = vpack.c.bf16 %v2631, %v2630
        %v2636 = vunpack.c.l.b16 %v2632
        %v2637 = vunpack.c.h.b16 %v2632
        %v2638 = vunpack.c.l.b16 %v2633
        %v2639 = vunpack.c.h.b16 %v2633
        %v2640 = vpack.c.b16 %v2636, %v2636
        %v2641 = vpack.c.b16 %v2637, %v2637
        %v2642 = vpack.c.b16 %v2638, %v2638
        %v2643 = vpack.c.b16 %v2639, %v2639
        %2648 = vst [vmem:[%s322] sm:$0xf] %v2640
        %2649 = vst [vmem:[%s322 + $0x4] sm:$0xf] %v2641
        %2650 = vst [vmem:[%s322 + $0x8] sm:$0xf] %v2642
        %2651 = vst [vmem:[%s322 + $0xc] sm:$0xf] %v2643
        %s2652 = sand.u32 %s204, 1
        %s2653 = scalar_lea.sflag [#allocation3], %s2652
        %s2654 = sand.u32 %s204, 1
        %s2655 = smul.addr %s2654, 16
        %s2656 = scalar_lea.vmem [#allocation2], %s2655
        // Predicated region
        $region49: #{tpu_custom_call.1} parent=47 // pred_check
          %p2657 = pneg %p214
        $region50: #{tpu_custom_call.1} parent=47 // pred_check_branch
          %2659 = sbr.rel (%p2657) target = $region52
        $region51: #{tpu_custom_call.1} parent=47 // pred_region
          %s2660 = smul.u32 4, %s26
          %s2662 = ssub.s32 256, 256
          %2663 = vsyncadd %s2653, %s2662
          %s2664 = smul.addr %s25, 4
          %s2665 = sadd.s32 %s2660, %s2664
          %s2666 = smul.addr %s2665, 64
          %s2667 = scalar_lea.hbm %s7, %s2666
          %s2668 = sshll.u32 %s2656, 4
          %s2669 = int_to_ptr.vmem [resolvable:$true] %s2668
          %2674 = dma.vmem_to_hbm [thread:$0]  %s2669, 256, %s2667, %s2653, 64, 64, 4
        $region52: #{tpu_custom_call.1} parent=47 // pred_fallthru
          _
      $region48: #{tpu_custom_call.1} parent=5 // pred_fallthru
        _
      %p2675 = scmp.le.s32.totalorder 2, %s16
      // Predicated region
      $region53: #{tpu_custom_call.1} parent=5 // pred_check
        %p2676 = pneg %p2675
      $region54: #{tpu_custom_call.1} parent=5 // pred_check_branch
        %2678 = sbr.rel (%p2676) target = $region56
      $region55: #{tpu_custom_call.1} parent=5 // pred_region
        %s2679 = ssub.s32 %s16, 2
        // Predicated region
        $region57: #{tpu_custom_call.1} parent=55 // pred_check
          %p2680 = pneg %p220
        $region58: #{tpu_custom_call.1} parent=55 // pred_check_branch
          %2682 = sbr.rel (%p2680) target = $region60
        $region59: #{tpu_custom_call.1} parent=55 // pred_region
          %s2683 = sand.u32 %s205, 1
          %s2684 = scalar_lea.sflag [#allocation3], %s2683
          %s2685 = sand.u32 %s205, 1
          %s2686 = smul.addr %s2685, 16
          %s2687 = scalar_lea.vmem [#allocation2], %s2686
          %2688 = dma.done %s2684, 256
        $region60: #{tpu_custom_call.1} parent=55 // pred_fallthru
          _
      $region56: #{tpu_custom_call.1} parent=5 // pred_fallthru
        _
    $region6: #{tpu_custom_call.1} parent=1 // loop_footer
      %s20 = sadd.s32 1, %s16
    $region7: #{tpu_custom_call.1} parent=1 // loop_footer_branch
      %15 = sbr.rel target = $region3
    $region8: #{tpu_custom_call.1} parent=1 // loop_exit
      _
    %2689 = vsyncpa [#allocation3], 1
    %s2690 = scalar_lea.sflag [#allocation3], 1
    %2691 = vsyncpa %s2690, 1

</llo_original>
